<compile_context>
chip_gen: v5e
topology: v5e:2x2
jax: 0.10.0
libtpu: 0.0.40
codegen_flags: <defaults>
</compile_context>

<pallas_src>
import functools

import jax
import jax.numpy as jnp
from jax import lax
from jax.experimental import pallas as pl
from jax.experimental.pallas import tpu as pltpu


VOCAB_TILE = 512  # lane tile for the vocab projection; V is padded to a multiple


def _round_up(x, m):
    return (x + m - 1) // m * m


# ----------------------------------------------------------------------------
# LSTM gate nonlinearities (PyTorch gate order i, f, g, o).  `gates` already
# holds x@W_ih + h@W_hh + b.  Gate slices are lane-aligned because H is a
# multiple of 128 in this script (at the real H=75, pad to 128 and zero it).
# ----------------------------------------------------------------------------
def _lstm_gates(gates, c, H):
    i = jax.nn.sigmoid(gates[:, 0 * H:1 * H])
    f = jax.nn.sigmoid(gates[:, 1 * H:2 * H])
    g = jnp.tanh(gates[:, 2 * H:3 * H])
    o = jax.nn.sigmoid(gates[:, 3 * H:4 * H])
    c_new = f * c + i * g
    h_new = o * jnp.tanh(c_new)
    return h_new, c_new


# ----------------------------------------------------------------------------
# Fused encoder+decoder recurrent kernel (single pallas_call, no grid).
#   Prologue: gates_x = X @ W_ih + b for every timestep of both sequences
#             (well-shaped M=T*B matmuls) -> VMEM scratch.
#   Loops:    per step only h @ W_hh sits on the serial dependence chain;
#             h carried bf16, c carried f32, in vregs.
# ----------------------------------------------------------------------------
def _seq2seq_kernel(x_ref, y_ref,
                    enc_wih_ref, enc_whh_ref, enc_b_ref,
                    dec_wih_ref, dec_whh_ref, dec_b_ref,
                    hseq_ref, h_out_ref, c_out_ref,
                    enc_gx_ref, dec_gx_ref,
                    *, Ts, Tt, B, H):
    # --- input projections, hoisted off the recurrent chain ------------------
    enc_gx = (jnp.dot(x_ref[...], enc_wih_ref[...],
                      preferred_element_type=jnp.float32) + enc_b_ref[...])
    enc_gx_ref[...] = enc_gx.reshape(Ts, B, 4 * H)
    dec_gx = (jnp.dot(y_ref[...], dec_wih_ref[...],
                      preferred_element_type=jnp.float32) + dec_b_ref[...])
    dec_gx_ref[...] = dec_gx.reshape(Tt, B, 4 * H)

    # --- encoder time loop ----------------------------------------------------
    # TODO(synk): on v5e, stage W_hh in MXU registers once via
    # pltpu.matmul_push_rhs / matmul_acc_lhs instead of re-pushing it per step.
    def enc_step(t, carry):
        h, c = carry
        gates = enc_gx_ref[t] + jnp.dot(h, enc_whh_ref[...],
                                        preferred_element_type=jnp.float32)
        h_new, c_new = _lstm_gates(gates, c, H)
        return h_new.astype(jnp.bfloat16), c_new

    h0 = jnp.zeros((B, H), jnp.bfloat16)
    c0 = jnp.zeros((B, H), jnp.float32)
    h_e, c_e = lax.fori_loop(0, Ts, enc_step, (h0, c0),
                             unroll=True if Ts <= 8 else 4)

    # torch.sum(encoder_hidden, axis=0, keepdim=True) is the identity for a
    # single-layer encoder, so (h_e, c_e) seed the decoder directly (in vregs).

    # --- decoder time loop (teacher forcing) ----------------------------------
    def dec_step(t, carry):
        h, c = carry
        gates = dec_gx_ref[t] + jnp.dot(h, dec_whh_ref[...],
                                        preferred_element_type=jnp.float32)
        h_new, c_new = _lstm_gates(gates, c, H)
        hseq_ref[t] = h_new            # f32 (8,128): one unmasked vreg store
        return h_new.astype(jnp.bfloat16), c_new

    _, c_d = lax.fori_loop(0, Tt, dec_step, (h_e, c_e),
                           unroll=True if Tt <= 8 else 4)

    h_out_ref[...] = hseq_ref[Tt - 1]  # final decoder h at full f32 precision
    c_out_ref[...] = c_d


def seq2seq_recurrent(x_rows, y_rows, enc_wih, enc_whh, enc_b,
                      dec_wih, dec_whh, dec_b, *, Ts, Tt, B, H):
    kernel = functools.partial(_seq2seq_kernel, Ts=Ts, Tt=Tt, B=B, H=H)
    return pl.pallas_call(
        kernel,
        out_shape=(jax.ShapeDtypeStruct((Tt, B, H), jnp.float32),  # hidden seq
                   jax.ShapeDtypeStruct((B, H), jnp.float32),      # final h
                   jax.ShapeDtypeStruct((B, H), jnp.float32)),     # final c
        scratch_shapes=[pltpu.VMEM((Ts, B, 4 * H), jnp.float32),
                        pltpu.VMEM((Tt, B, 4 * H), jnp.float32)],
    )(x_rows, y_rows, enc_wih, enc_whh, enc_b, dec_wih, dec_whh, dec_b)


# ----------------------------------------------------------------------------
# Hoisted vocab projection: (M, H) @ (H, V_pad) + b, tiled over (V_pad, M),
# fully parallel.  V_pad is guaranteed (by init_params) to be a multiple of
# VOCAB_TILE, so tiles are always lane-dense and small.
# ----------------------------------------------------------------------------
def _proj_kernel(h_ref, w_ref, b_ref, o_ref):
    o_ref[...] = (jnp.dot(h_ref[...], w_ref[...],
                          preferred_element_type=jnp.float32)
                  + b_ref[...]).astype(o_ref.dtype)


def _pick_tile(dim, candidates):
    for c in candidates:
        if c <= dim and dim % c == 0:
            return c
    raise ValueError(f"no tile in {candidates} divides {dim}; pad the dim")


def vocab_projection(h_rows, wout, bout):
    M, H = h_rows.shape
    Vp = wout.shape[1]
    tm = _pick_tile(M, (512, 256, 128, 64, 32, 16, 8))
    tn = _pick_tile(Vp, (VOCAB_TILE, 256, 128))
    grid = (Vp // tn, M // tm)  # V leading: the only multi-step parallel axis
    return pl.pallas_call(
        _proj_kernel,
        out_shape=jax.ShapeDtypeStruct((M, Vp), jnp.float32),
        grid_spec=pltpu.PrefetchScalarGridSpec(
            num_scalar_prefetch=0,
            grid=grid,
            in_specs=[
                pl.BlockSpec((tm, H), lambda v, m: (m, 0)),
                # TODO(synk): on v7x, consider pipeline_mode=pl.Buffered(3) and
                # fp8(e4m3) weights here if the wout DMA shows up as exposed.
                pl.BlockSpec((H, tn), lambda v, m: (0, v)),
                pl.BlockSpec((1, tn), lambda v, m: (0, v)),
            ],
            out_specs=pl.BlockSpec((tm, tn), lambda v, m: (m, v)),
        ),
        compiler_params=pltpu.CompilerParams(
            dimension_semantics=("parallel", "parallel")),
    )(h_rows, wout, bout)


# ----------------------------------------------------------------------------
# Full model forward (mirrors lstm_model.forward, teacher-forcing path).
# ----------------------------------------------------------------------------
def lstm_model_forward(params, source, target, tf_prob, *, vocab_size):
    # TODO(synk): scheduled sampling (tf_prob < 1) needs in-kernel argmax
    # feedback + data-dependent embedding gather; only teacher forcing is done.
    del tf_prob

    B, Ts = source.shape
    Tt = target.shape[1]
    E = params["enc_embedding"].shape[1]
    H = params["enc_whh"].shape[0]

    # Embedding gathers produce the time-major layout directly; rows are
    # flattened to (T*B, E) for the in-kernel input projection.
    x_rows = params["enc_embedding"][source.T].reshape(Ts * B, E)
    y_rows = params["dec_embedding"][target.T].reshape(Tt * B, E)

    hseq, h_dec, c_dec = seq2seq_recurrent(
        x_rows, y_rows,
        params["enc_wih"], params["enc_whh"], params["enc_b"],
        params["dec_wih"], params["dec_whh"], params["dec_b"],
        Ts=Ts, Tt=Tt, B=B, H=H)

    # Transpose only the SMALL hidden sequence so the big logits tensor comes
    # out batch-first without any (B, T, V) post-transpose.
    h_rows = (jnp.transpose(hseq, (1, 0, 2))
              .reshape(B * Tt, H).astype(jnp.bfloat16))

    # TODO(synk): DecoderRNN source not provided; raw linear logits are emitted
    # (no log_softmax) — adjust if the reference applies one.
    logits = vocab_projection(h_rows, params["w_out"], params["b_out"])
    if logits.shape[1] != vocab_size:
        logits = logits[:, :vocab_size]        # drop zero-padded vocab columns
    decoder_outputs = logits.reshape(B, Tt, vocab_size)
    decoder_hidden = (h_dec[None], c_dec[None])  # ((1,B,H), (1,B,H))
    return decoder_outputs, decoder_hidden


# ----------------------------------------------------------------------------
# Deterministic parameter init.  Gate weights are split (input vs recurrent)
# and pre-transposed to (E,4H)/(H,4H); the two PyTorch biases (b_ih, b_hh) are
# represented by their sum.  Matmul operands are bf16; the vocab dimension of
# w_out/b_out is zero-padded to a multiple of VOCAB_TILE.
# ----------------------------------------------------------------------------
def init_params(key, vocab, E, H):
    ks = jax.random.split(key, 10)
    s = 1.0 / float(H) ** 0.5
    v_pad = _round_up(vocab, VOCAB_TILE)

    def u(k, shape, scale, dtype):
        return jax.random.uniform(k, shape, jnp.float32, -scale, scale).astype(dtype)

    w_out = u(ks[8], (H, vocab), s, jnp.bfloat16)
    b_out = u(ks[9], (1, vocab), s, jnp.float32)
    return {
        "enc_embedding": u(ks[0], (vocab, E), 0.1, jnp.bfloat16),
        "dec_embedding": u(ks[1], (vocab, E), 0.1, jnp.bfloat16),
        "enc_wih": u(ks[2], (E, 4 * H), s, jnp.bfloat16),
        "enc_whh": u(ks[3], (H, 4 * H), s, jnp.bfloat16),
        "enc_b": u(ks[4], (1, 4 * H), s, jnp.float32),
        "dec_wih": u(ks[5], (E, 4 * H), s, jnp.bfloat16),
        "dec_whh": u(ks[6], (H, 4 * H), s, jnp.bfloat16),
        "dec_b": u(ks[7], (1, 4 * H), s, jnp.float32),
        "w_out": jnp.pad(w_out, ((0, 0), (0, v_pad - vocab))),
        "b_out": jnp.pad(b_out, ((0, 0), (0, v_pad - vocab))),
    }


if __name__ == "__main__":
    # Small, TPU-aligned stand-ins for (embedding_dim=100, hidden_dim=75,
    # vocab_size=26952): E/H padded to 128 so gate slices are lane-aligned;
    # V deliberately NOT a multiple of VOCAB_TILE to exercise the pad+slice path.
    B, Ts, Tt = 8, 8, 8
    E, H, V = 128, 128, 1900

    key = jax.random.PRNGKey(0)
    k_params, k_src, k_tgt = jax.random.split(key, 3)
    params = init_params(k_params, V, E, H)

    source = jax.random.randint(k_src, (B, Ts), 0, V, dtype=jnp.int32)
    target = jax.random.randint(k_tgt, (B, Tt), 0, V, dtype=jnp.int32)
    tf_prob = 1.0

    fwd = jax.jit(functools.partial(lstm_model_forward, vocab_size=V))
    decoder_outputs, (h, c) = fwd(params, source, target, tf_prob)
    jax.block_until_ready((decoder_outputs, h, c))

    assert decoder_outputs.shape == (B, Tt, V)
    assert decoder_outputs.dtype == jnp.float32
    assert h.shape == (1, B, H) and c.shape == (1, B, H)
    print("KERNEL_OK")
</pallas_src>

<mosaic_0001>
module attributes {stable_mosaic.version = 11 : i64} {
  func.func @_seq2seq_kernel(%arg0: memref<64x128xbf16, #tpu.memory_space<vmem>>, %arg1: memref<64x128xbf16, #tpu.memory_space<vmem>>, %arg2: memref<128x512xbf16, #tpu.memory_space<vmem>>, %arg3: memref<128x512xbf16, #tpu.memory_space<vmem>>, %arg4: memref<1x512xf32, #tpu.memory_space<vmem>>, %arg5: memref<128x512xbf16, #tpu.memory_space<vmem>>, %arg6: memref<128x512xbf16, #tpu.memory_space<vmem>>, %arg7: memref<1x512xf32, #tpu.memory_space<vmem>>, %arg8: memref<8x8x128xf32, #tpu.memory_space<vmem>>, %arg9: memref<8x128xf32, #tpu.memory_space<vmem>>, %arg10: memref<8x128xf32, #tpu.memory_space<vmem>>, %arg11: memref<8x8x512xf32, #tpu.memory_space<vmem>>, %arg12: memref<8x8x512xf32, #tpu.memory_space<vmem>>) attributes {dimension_semantics = [], scalar_prefetch = 0 : i64, scratch_operands = 2 : i64, tpu.core_type = #tpu.core_type<tc>} {
    %c0 = arith.constant 0 : index
    %c0_0 = arith.constant 0 : index
    %0 = vector.load %arg0[%c0, %c0_0] : memref<64x128xbf16, #tpu.memory_space<vmem>>, vector<64x128xbf16>
    %c0_1 = arith.constant 0 : index
    %c0_2 = arith.constant 0 : index
    %1 = vector.load %arg2[%c0_1, %c0_2] : memref<128x512xbf16, #tpu.memory_space<vmem>>, vector<128x512xbf16>
    %cst = arith.constant dense<0.000000e+00> : vector<64x512xf32>
    %2 = tpu.matmul %0, %1, %cst {dimension_numbers = #tpu.dot_dimension_numbers<[1], [0], [0], [1], [0, 0, 1, 1], [], []>} : vector<64x128xbf16>, vector<128x512xbf16>, vector<64x512xf32> -> vector<64x512xf32>
    %c0_3 = arith.constant 0 : index
    %c0_4 = arith.constant 0 : index
    %3 = vector.load %arg4[%c0_3, %c0_4] : memref<1x512xf32, #tpu.memory_space<vmem>>, vector<1x512xf32>
    %4 = vector.broadcast %3 : vector<1x512xf32> to vector<64x512xf32>
    %5 = arith.addf %2, %4 : vector<64x512xf32>
    %6 = vector.shape_cast %5 : vector<64x512xf32> to vector<8x8x512xf32>
    %c0_5 = arith.constant 0 : index
    %c0_6 = arith.constant 0 : index
    %c0_7 = arith.constant 0 : index
    %7 = vector.load %arg11[%c0_5, %c0_6, %c0_7] : memref<8x8x512xf32, #tpu.memory_space<vmem>>, vector<8x8x512xf32>
    tpu.vector_store %arg11[%c0_5, %c0_6, %c0_7], %6 {strides = array<i32>} : memref<8x8x512xf32, #tpu.memory_space<vmem>>, vector<8x8x512xf32>,
    %c0_8 = arith.constant 0 : index
    %c0_9 = arith.constant 0 : index
    %8 = vector.load %arg1[%c0_8, %c0_9] : memref<64x128xbf16, #tpu.memory_space<vmem>>, vector<64x128xbf16>
    %c0_10 = arith.constant 0 : index
    %c0_11 = arith.constant 0 : index
    %9 = vector.load %arg5[%c0_10, %c0_11] : memref<128x512xbf16, #tpu.memory_space<vmem>>, vector<128x512xbf16>
    %cst_12 = arith.constant dense<0.000000e+00> : vector<64x512xf32>
    %10 = tpu.matmul %8, %9, %cst_12 {dimension_numbers = #tpu.dot_dimension_numbers<[1], [0], [0], [1], [0, 0, 1, 1], [], []>} : vector<64x128xbf16>, vector<128x512xbf16>, vector<64x512xf32> -> vector<64x512xf32>
    %c0_13 = arith.constant 0 : index
    %c0_14 = arith.constant 0 : index
    %11 = vector.load %arg7[%c0_13, %c0_14] : memref<1x512xf32, #tpu.memory_space<vmem>>, vector<1x512xf32>
    %12 = vector.broadcast %11 : vector<1x512xf32> to vector<64x512xf32>
    %13 = arith.addf %10, %12 : vector<64x512xf32>
    %14 = vector.shape_cast %13 : vector<64x512xf32> to vector<8x8x512xf32>
    %c0_15 = arith.constant 0 : index
    %c0_16 = arith.constant 0 : index
    %c0_17 = arith.constant 0 : index
    %15 = vector.load %arg12[%c0_15, %c0_16, %c0_17] : memref<8x8x512xf32, #tpu.memory_space<vmem>>, vector<8x8x512xf32>
    tpu.vector_store %arg12[%c0_15, %c0_16, %c0_17], %14 {strides = array<i32>} : memref<8x8x512xf32, #tpu.memory_space<vmem>>, vector<8x8x512xf32>,
    %cst_18 = arith.constant 0.000000e+00 : bf16
    %16 = vector.broadcast %cst_18 : bf16 to vector<8x128xbf16>
    %cst_19 = arith.constant 0.000000e+00 : f32
    %17 = vector.broadcast %cst_19 : f32 to vector<8x128xf32>
    %c0_i32 = arith.constant 0 : i32
    %18 = arith.index_cast %c0_i32 : i32 to index
    %c0_20 = arith.constant 0 : index
    %c0_21 = arith.constant 0 : index
    %19 = vector.load %arg11[%18, %c0_20, %c0_21] : memref<8x8x512xf32, #tpu.memory_space<vmem>>, vector<1x8x512xf32>
    %20 = vector.shape_cast %19 : vector<1x8x512xf32> to vector<8x512xf32>
    %c0_22 = arith.constant 0 : index
    %c0_23 = arith.constant 0 : index
    %21 = vector.load %arg3[%c0_22, %c0_23] : memref<128x512xbf16, #tpu.memory_space<vmem>>, vector<128x512xbf16>
    %cst_24 = arith.constant dense<0.000000e+00> : vector<8x512xf32>
    %22 = tpu.matmul %16, %21, %cst_24 {dimension_numbers = #tpu.dot_dimension_numbers<[1], [0], [0], [1], [0, 0, 1, 1], [], []>} : vector<8x128xbf16>, vector<128x512xbf16>, vector<8x512xf32> -> vector<8x512xf32>
    %23 = arith.addf %20, %22 : vector<8x512xf32>
    %24 = vector.extract_strided_slice %23 {offsets = [0, 0], sizes = [8, 128], strides = [1, 1]} : vector<8x512xf32> to vector<8x128xf32>
    %25 = arith.negf %24 : vector<8x128xf32>
    %26 = math.exp %25 : vector<8x128xf32>
    %cst_25 = arith.constant 1.000000e+00 : f32
    %27 = vector.broadcast %cst_25 : f32 to vector<8x128xf32>
    %28 = arith.addf %27, %26 : vector<8x128xf32>
    %29 = arith.divf %27, %28 : vector<8x128xf32>
    %30 = vector.extract_strided_slice %23 {offsets = [0, 128], sizes = [8, 128], strides = [1, 1]} : vector<8x512xf32> to vector<8x128xf32>
    %31 = arith.negf %30 : vector<8x128xf32>
    %32 = math.exp %31 : vector<8x128xf32>
    %cst_26 = arith.constant 1.000000e+00 : f32
    %33 = vector.broadcast %cst_26 : f32 to vector<8x128xf32>
    %34 = arith.addf %33, %32 : vector<8x128xf32>
    %35 = arith.divf %33, %34 : vector<8x128xf32>
    %36 = vector.extract_strided_slice %23 {offsets = [0, 256], sizes = [8, 128], strides = [1, 1]} : vector<8x512xf32> to vector<8x128xf32>
    %37 = math.tanh %36 : vector<8x128xf32>
    %38 = vector.extract_strided_slice %23 {offsets = [0, 384], sizes = [8, 128], strides = [1, 1]} : vector<8x512xf32> to vector<8x128xf32>
    %39 = arith.negf %38 : vector<8x128xf32>
    %40 = math.exp %39 : vector<8x128xf32>
    %cst_27 = arith.constant 1.000000e+00 : f32
    %41 = vector.broadcast %cst_27 : f32 to vector<8x128xf32>
    %42 = arith.addf %41, %40 : vector<8x128xf32>
    %43 = arith.divf %41, %42 : vector<8x128xf32>
    %44 = arith.mulf %35, %17 : vector<8x128xf32>
    %45 = arith.mulf %29, %37 : vector<8x128xf32>
    %46 = arith.addf %44, %45 : vector<8x128xf32>
    %47 = math.tanh %46 : vector<8x128xf32>
    %48 = arith.mulf %43, %47 : vector<8x128xf32>
    %49 = arith.truncf %48 : vector<8x128xf32> to vector<8x128xbf16>
    %c1_i32 = arith.constant 1 : i32
    %50 = arith.index_cast %c1_i32 : i32 to index
    %c0_28 = arith.constant 0 : index
    %c0_29 = arith.constant 0 : index
    %51 = vector.load %arg11[%50, %c0_28, %c0_29] : memref<8x8x512xf32, #tpu.memory_space<vmem>>, vector<1x8x512xf32>
    %52 = vector.shape_cast %51 : vector<1x8x512xf32> to vector<8x512xf32>
    %c0_30 = arith.constant 0 : index
    %c0_31 = arith.constant 0 : index
    %53 = vector.load %arg3[%c0_30, %c0_31] : memref<128x512xbf16, #tpu.memory_space<vmem>>, vector<128x512xbf16>
    %cst_32 = arith.constant dense<0.000000e+00> : vector<8x512xf32>
    %54 = tpu.matmul %49, %53, %cst_32 {dimension_numbers = #tpu.dot_dimension_numbers<[1], [0], [0], [1], [0, 0, 1, 1], [], []>} : vector<8x128xbf16>, vector<128x512xbf16>, vector<8x512xf32> -> vector<8x512xf32>
    %55 = arith.addf %52, %54 : vector<8x512xf32>
    %56 = vector.extract_strided_slice %55 {offsets = [0, 0], sizes = [8, 128], strides = [1, 1]} : vector<8x512xf32> to vector<8x128xf32>
    %57 = arith.negf %56 : vector<8x128xf32>
    %58 = math.exp %57 : vector<8x128xf32>
    %cst_33 = arith.constant 1.000000e+00 : f32
    %59 = vector.broadcast %cst_33 : f32 to vector<8x128xf32>
    %60 = arith.addf %59, %58 : vector<8x128xf32>
    %61 = arith.divf %59, %60 : vector<8x128xf32>
    %62 = vector.extract_strided_slice %55 {offsets = [0, 128], sizes = [8, 128], strides = [1, 1]} : vector<8x512xf32> to vector<8x128xf32>
    %63 = arith.negf %62 : vector<8x128xf32>
    %64 = math.exp %63 : vector<8x128xf32>
    %cst_34 = arith.constant 1.000000e+00 : f32
    %65 = vector.broadcast %cst_34 : f32 to vector<8x128xf32>
    %66 = arith.addf %65, %64 : vector<8x128xf32>
    %67 = arith.divf %65, %66 : vector<8x128xf32>
    %68 = vector.extract_strided_slice %55 {offsets = [0, 256], sizes = [8, 128], strides = [1, 1]} : vector<8x512xf32> to vector<8x128xf32>
    %69 = math.tanh %68 : vector<8x128xf32>
    %70 = vector.extract_strided_slice %55 {offsets = [0, 384], sizes = [8, 128], strides = [1, 1]} : vector<8x512xf32> to vector<8x128xf32>
    %71 = arith.negf %70 : vector<8x128xf32>
    %72 = math.exp %71 : vector<8x128xf32>
    %cst_35 = arith.constant 1.000000e+00 : f32
    %73 = vector.broadcast %cst_35 : f32 to vector<8x128xf32>
    %74 = arith.addf %73, %72 : vector<8x128xf32>
    %75 = arith.divf %73, %74 : vector<8x128xf32>
    %76 = arith.mulf %67, %46 : vector<8x128xf32>
    %77 = arith.mulf %61, %69 : vector<8x128xf32>
    %78 = arith.addf %76, %77 : vector<8x128xf32>
    %79 = math.tanh %78 : vector<8x128xf32>
    %80 = arith.mulf %75, %79 : vector<8x128xf32>
    %81 = arith.truncf %80 : vector<8x128xf32> to vector<8x128xbf16>
    %c2_i32 = arith.constant 2 : i32
    %82 = arith.index_cast %c2_i32 : i32 to index
    %c0_36 = arith.constant 0 : index
    %c0_37 = arith.constant 0 : index
    %83 = vector.load %arg11[%82, %c0_36, %c0_37] : memref<8x8x512xf32, #tpu.memory_space<vmem>>, vector<1x8x512xf32>
    %84 = vector.shape_cast %83 : vector<1x8x512xf32> to vector<8x512xf32>
    %c0_38 = arith.constant 0 : index
    %c0_39 = arith.constant 0 : index
    %85 = vector.load %arg3[%c0_38, %c0_39] : memref<128x512xbf16, #tpu.memory_space<vmem>>, vector<128x512xbf16>
    %cst_40 = arith.constant dense<0.000000e+00> : vector<8x512xf32>
    %86 = tpu.matmul %81, %85, %cst_40 {dimension_numbers = #tpu.dot_dimension_numbers<[1], [0], [0], [1], [0, 0, 1, 1], [], []>} : vector<8x128xbf16>, vector<128x512xbf16>, vector<8x512xf32> -> vector<8x512xf32>
    %87 = arith.addf %84, %86 : vector<8x512xf32>
    %88 = vector.extract_strided_slice %87 {offsets = [0, 0], sizes = [8, 128], strides = [1, 1]} : vector<8x512xf32> to vector<8x128xf32>
    %89 = arith.negf %88 : vector<8x128xf32>
    %90 = math.exp %89 : vector<8x128xf32>
    %cst_41 = arith.constant 1.000000e+00 : f32
    %91 = vector.broadcast %cst_41 : f32 to vector<8x128xf32>
    %92 = arith.addf %91, %90 : vector<8x128xf32>
    %93 = arith.divf %91, %92 : vector<8x128xf32>
    %94 = vector.extract_strided_slice %87 {offsets = [0, 128], sizes = [8, 128], strides = [1, 1]} : vector<8x512xf32> to vector<8x128xf32>
    %95 = arith.negf %94 : vector<8x128xf32>
    %96 = math.exp %95 : vector<8x128xf32>
    %cst_42 = arith.constant 1.000000e+00 : f32
    %97 = vector.broadcast %cst_42 : f32 to vector<8x128xf32>
    %98 = arith.addf %97, %96 : vector<8x128xf32>
    %99 = arith.divf %97, %98 : vector<8x128xf32>
    %100 = vector.extract_strided_slice %87 {offsets = [0, 256], sizes = [8, 128], strides = [1, 1]} : vector<8x512xf32> to vector<8x128xf32>
    %101 = math.tanh %100 : vector<8x128xf32>
    %102 = vector.extract_strided_slice %87 {offsets = [0, 384], sizes = [8, 128], strides = [1, 1]} : vector<8x512xf32> to vector<8x128xf32>
    %103 = arith.negf %102 : vector<8x128xf32>
    %104 = math.exp %103 : vector<8x128xf32>
    %cst_43 = arith.constant 1.000000e+00 : f32
    %105 = vector.broadcast %cst_43 : f32 to vector<8x128xf32>
    %106 = arith.addf %105, %104 : vector<8x128xf32>
    %107 = arith.divf %105, %106 : vector<8x128xf32>
    %108 = arith.mulf %99, %78 : vector<8x128xf32>
    %109 = arith.mulf %93, %101 : vector<8x128xf32>
    %110 = arith.addf %108, %109 : vector<8x128xf32>
    %111 = math.tanh %110 : vector<8x128xf32>
    %112 = arith.mulf %107, %111 : vector<8x128xf32>
    %113 = arith.truncf %112 : vector<8x128xf32> to vector<8x128xbf16>
    %c3_i32 = arith.constant 3 : i32
    %114 = arith.index_cast %c3_i32 : i32 to index
    %c0_44 = arith.constant 0 : index
    %c0_45 = arith.constant 0 : index
    %115 = vector.load %arg11[%114, %c0_44, %c0_45] : memref<8x8x512xf32, #tpu.memory_space<vmem>>, vector<1x8x512xf32>
    %116 = vector.shape_cast %115 : vector<1x8x512xf32> to vector<8x512xf32>
    %c0_46 = arith.constant 0 : index
    %c0_47 = arith.constant 0 : index
    %117 = vector.load %arg3[%c0_46, %c0_47] : memref<128x512xbf16, #tpu.memory_space<vmem>>, vector<128x512xbf16>
    %cst_48 = arith.constant dense<0.000000e+00> : vector<8x512xf32>
    %118 = tpu.matmul %113, %117, %cst_48 {dimension_numbers = #tpu.dot_dimension_numbers<[1], [0], [0], [1], [0, 0, 1, 1], [], []>} : vector<8x128xbf16>, vector<128x512xbf16>, vector<8x512xf32> -> vector<8x512xf32>
    %119 = arith.addf %116, %118 : vector<8x512xf32>
    %120 = vector.extract_strided_slice %119 {offsets = [0, 0], sizes = [8, 128], strides = [1, 1]} : vector<8x512xf32> to vector<8x128xf32>
    %121 = arith.negf %120 : vector<8x128xf32>
    %122 = math.exp %121 : vector<8x128xf32>
    %cst_49 = arith.constant 1.000000e+00 : f32
    %123 = vector.broadcast %cst_49 : f32 to vector<8x128xf32>
    %124 = arith.addf %123, %122 : vector<8x128xf32>
    %125 = arith.divf %123, %124 : vector<8x128xf32>
    %126 = vector.extract_strided_slice %119 {offsets = [0, 128], sizes = [8, 128], strides = [1, 1]} : vector<8x512xf32> to vector<8x128xf32>
    %127 = arith.negf %126 : vector<8x128xf32>
    %128 = math.exp %127 : vector<8x128xf32>
    %cst_50 = arith.constant 1.000000e+00 : f32
    %129 = vector.broadcast %cst_50 : f32 to vector<8x128xf32>
    %130 = arith.addf %129, %128 : vector<8x128xf32>
    %131 = arith.divf %129, %130 : vector<8x128xf32>
    %132 = vector.extract_strided_slice %119 {offsets = [0, 256], sizes = [8, 128], strides = [1, 1]} : vector<8x512xf32> to vector<8x128xf32>
    %133 = math.tanh %132 : vector<8x128xf32>
    %134 = vector.extract_strided_slice %119 {offsets = [0, 384], sizes = [8, 128], strides = [1, 1]} : vector<8x512xf32> to vector<8x128xf32>
    %135 = arith.negf %134 : vector<8x128xf32>
    %136 = math.exp %135 : vector<8x128xf32>
    %cst_51 = arith.constant 1.000000e+00 : f32
    %137 = vector.broadcast %cst_51 : f32 to vector<8x128xf32>
    %138 = arith.addf %137, %136 : vector<8x128xf32>
    %139 = arith.divf %137, %138 : vector<8x128xf32>
    %140 = arith.mulf %131, %110 : vector<8x128xf32>
    %141 = arith.mulf %125, %133 : vector<8x128xf32>
    %142 = arith.addf %140, %141 : vector<8x128xf32>
    %143 = math.tanh %142 : vector<8x128xf32>
    %144 = arith.mulf %139, %143 : vector<8x128xf32>
    %145 = arith.truncf %144 : vector<8x128xf32> to vector<8x128xbf16>
    %c4_i32 = arith.constant 4 : i32
    %146 = arith.index_cast %c4_i32 : i32 to index
    %c0_52 = arith.constant 0 : index
    %c0_53 = arith.constant 0 : index
    %147 = vector.load %arg11[%146, %c0_52, %c0_53] : memref<8x8x512xf32, #tpu.memory_space<vmem>>, vector<1x8x512xf32>
    %148 = vector.shape_cast %147 : vector<1x8x512xf32> to vector<8x512xf32>
    %c0_54 = arith.constant 0 : index
    %c0_55 = arith.constant 0 : index
    %149 = vector.load %arg3[%c0_54, %c0_55] : memref<128x512xbf16, #tpu.memory_space<vmem>>, vector<128x512xbf16>
    %cst_56 = arith.constant dense<0.000000e+00> : vector<8x512xf32>
    %150 = tpu.matmul %145, %149, %cst_56 {dimension_numbers = #tpu.dot_dimension_numbers<[1], [0], [0], [1], [0, 0, 1, 1], [], []>} : vector<8x128xbf16>, vector<128x512xbf16>, vector<8x512xf32> -> vector<8x512xf32>
    %151 = arith.addf %148, %150 : vector<8x512xf32>
    %152 = vector.extract_strided_slice %151 {offsets = [0, 0], sizes = [8, 128], strides = [1, 1]} : vector<8x512xf32> to vector<8x128xf32>
    %153 = arith.negf %152 : vector<8x128xf32>
    %154 = math.exp %153 : vector<8x128xf32>
    %cst_57 = arith.constant 1.000000e+00 : f32
    %155 = vector.broadcast %cst_57 : f32 to vector<8x128xf32>
    %156 = arith.addf %155, %154 : vector<8x128xf32>
    %157 = arith.divf %155, %156 : vector<8x128xf32>
    %158 = vector.extract_strided_slice %151 {offsets = [0, 128], sizes = [8, 128], strides = [1, 1]} : vector<8x512xf32> to vector<8x128xf32>
    %159 = arith.negf %158 : vector<8x128xf32>
    %160 = math.exp %159 : vector<8x128xf32>
    %cst_58 = arith.constant 1.000000e+00 : f32
    %161 = vector.broadcast %cst_58 : f32 to vector<8x128xf32>
    %162 = arith.addf %161, %160 : vector<8x128xf32>
    %163 = arith.divf %161, %162 : vector<8x128xf32>
    %164 = vector.extract_strided_slice %151 {offsets = [0, 256], sizes = [8, 128], strides = [1, 1]} : vector<8x512xf32> to vector<8x128xf32>
    %165 = math.tanh %164 : vector<8x128xf32>
    %166 = vector.extract_strided_slice %151 {offsets = [0, 384], sizes = [8, 128], strides = [1, 1]} : vector<8x512xf32> to vector<8x128xf32>
    %167 = arith.negf %166 : vector<8x128xf32>
    %168 = math.exp %167 : vector<8x128xf32>
    %cst_59 = arith.constant 1.000000e+00 : f32
    %169 = vector.broadcast %cst_59 : f32 to vector<8x128xf32>
    %170 = arith.addf %169, %168 : vector<8x128xf32>
    %171 = arith.divf %169, %170 : vector<8x128xf32>
    %172 = arith.mulf %163, %142 : vector<8x128xf32>
    %173 = arith.mulf %157, %165 : vector<8x128xf32>
    %174 = arith.addf %172, %173 : vector<8x128xf32>
    %175 = math.tanh %174 : vector<8x128xf32>
    %176 = arith.mulf %171, %175 : vector<8x128xf32>
    %177 = arith.truncf %176 : vector<8x128xf32> to vector<8x128xbf16>
    %c5_i32 = arith.constant 5 : i32
    %178 = arith.index_cast %c5_i32 : i32 to index
    %c0_60 = arith.constant 0 : index
    %c0_61 = arith.constant 0 : index
    %179 = vector.load %arg11[%178, %c0_60, %c0_61] : memref<8x8x512xf32, #tpu.memory_space<vmem>>, vector<1x8x512xf32>
    %180 = vector.shape_cast %179 : vector<1x8x512xf32> to vector<8x512xf32>
    %c0_62 = arith.constant 0 : index
    %c0_63 = arith.constant 0 : index
    %181 = vector.load %arg3[%c0_62, %c0_63] : memref<128x512xbf16, #tpu.memory_space<vmem>>, vector<128x512xbf16>
    %cst_64 = arith.constant dense<0.000000e+00> : vector<8x512xf32>
    %182 = tpu.matmul %177, %181, %cst_64 {dimension_numbers = #tpu.dot_dimension_numbers<[1], [0], [0], [1], [0, 0, 1, 1], [], []>} : vector<8x128xbf16>, vector<128x512xbf16>, vector<8x512xf32> -> vector<8x512xf32>
    %183 = arith.addf %180, %182 : vector<8x512xf32>
    %184 = vector.extract_strided_slice %183 {offsets = [0, 0], sizes = [8, 128], strides = [1, 1]} : vector<8x512xf32> to vector<8x128xf32>
    %185 = arith.negf %184 : vector<8x128xf32>
    %186 = math.exp %185 : vector<8x128xf32>
    %cst_65 = arith.constant 1.000000e+00 : f32
    %187 = vector.broadcast %cst_65 : f32 to vector<8x128xf32>
    %188 = arith.addf %187, %186 : vector<8x128xf32>
    %189 = arith.divf %187, %188 : vector<8x128xf32>
    %190 = vector.extract_strided_slice %183 {offsets = [0, 128], sizes = [8, 128], strides = [1, 1]} : vector<8x512xf32> to vector<8x128xf32>
    %191 = arith.negf %190 : vector<8x128xf32>
    %192 = math.exp %191 : vector<8x128xf32>
    %cst_66 = arith.constant 1.000000e+00 : f32
    %193 = vector.broadcast %cst_66 : f32 to vector<8x128xf32>
    %194 = arith.addf %193, %192 : vector<8x128xf32>
    %195 = arith.divf %193, %194 : vector<8x128xf32>
    %196 = vector.extract_strided_slice %183 {offsets = [0, 256], sizes = [8, 128], strides = [1, 1]} : vector<8x512xf32> to vector<8x128xf32>
    %197 = math.tanh %196 : vector<8x128xf32>
    %198 = vector.extract_strided_slice %183 {offsets = [0, 384], sizes = [8, 128], strides = [1, 1]} : vector<8x512xf32> to vector<8x128xf32>
    %199 = arith.negf %198 : vector<8x128xf32>
    %200 = math.exp %199 : vector<8x128xf32>
    %cst_67 = arith.constant 1.000000e+00 : f32
    %201 = vector.broadcast %cst_67 : f32 to vector<8x128xf32>
    %202 = arith.addf %201, %200 : vector<8x128xf32>
    %203 = arith.divf %201, %202 : vector<8x128xf32>
    %204 = arith.mulf %195, %174 : vector<8x128xf32>
    %205 = arith.mulf %189, %197 : vector<8x128xf32>
    %206 = arith.addf %204, %205 : vector<8x128xf32>
    %207 = math.tanh %206 : vector<8x128xf32>
    %208 = arith.mulf %203, %207 : vector<8x128xf32>
    %209 = arith.truncf %208 : vector<8x128xf32> to vector<8x128xbf16>
    %c6_i32 = arith.constant 6 : i32
    %210 = arith.index_cast %c6_i32 : i32 to index
    %c0_68 = arith.constant 0 : index
    %c0_69 = arith.constant 0 : index
    %211 = vector.load %arg11[%210, %c0_68, %c0_69] : memref<8x8x512xf32, #tpu.memory_space<vmem>>, vector<1x8x512xf32>
    %212 = vector.shape_cast %211 : vector<1x8x512xf32> to vector<8x512xf32>
    %c0_70 = arith.constant 0 : index
    %c0_71 = arith.constant 0 : index
    %213 = vector.load %arg3[%c0_70, %c0_71] : memref<128x512xbf16, #tpu.memory_space<vmem>>, vector<128x512xbf16>
    %cst_72 = arith.constant dense<0.000000e+00> : vector<8x512xf32>
    %214 = tpu.matmul %209, %213, %cst_72 {dimension_numbers = #tpu.dot_dimension_numbers<[1], [0], [0], [1], [0, 0, 1, 1], [], []>} : vector<8x128xbf16>, vector<128x512xbf16>, vector<8x512xf32> -> vector<8x512xf32>
    %215 = arith.addf %212, %214 : vector<8x512xf32>
    %216 = vector.extract_strided_slice %215 {offsets = [0, 0], sizes = [8, 128], strides = [1, 1]} : vector<8x512xf32> to vector<8x128xf32>
    %217 = arith.negf %216 : vector<8x128xf32>
    %218 = math.exp %217 : vector<8x128xf32>
    %cst_73 = arith.constant 1.000000e+00 : f32
    %219 = vector.broadcast %cst_73 : f32 to vector<8x128xf32>
    %220 = arith.addf %219, %218 : vector<8x128xf32>
    %221 = arith.divf %219, %220 : vector<8x128xf32>
    %222 = vector.extract_strided_slice %215 {offsets = [0, 128], sizes = [8, 128], strides = [1, 1]} : vector<8x512xf32> to vector<8x128xf32>
    %223 = arith.negf %222 : vector<8x128xf32>
    %224 = math.exp %223 : vector<8x128xf32>
    %cst_74 = arith.constant 1.000000e+00 : f32
    %225 = vector.broadcast %cst_74 : f32 to vector<8x128xf32>
    %226 = arith.addf %225, %224 : vector<8x128xf32>
    %227 = arith.divf %225, %226 : vector<8x128xf32>
    %228 = vector.extract_strided_slice %215 {offsets = [0, 256], sizes = [8, 128], strides = [1, 1]} : vector<8x512xf32> to vector<8x128xf32>
    %229 = math.tanh %228 : vector<8x128xf32>
    %230 = vector.extract_strided_slice %215 {offsets = [0, 384], sizes = [8, 128], strides = [1, 1]} : vector<8x512xf32> to vector<8x128xf32>
    %231 = arith.negf %230 : vector<8x128xf32>
    %232 = math.exp %231 : vector<8x128xf32>
    %cst_75 = arith.constant 1.000000e+00 : f32
    %233 = vector.broadcast %cst_75 : f32 to vector<8x128xf32>
    %234 = arith.addf %233, %232 : vector<8x128xf32>
    %235 = arith.divf %233, %234 : vector<8x128xf32>
    %236 = arith.mulf %227, %206 : vector<8x128xf32>
    %237 = arith.mulf %221, %229 : vector<8x128xf32>
    %238 = arith.addf %236, %237 : vector<8x128xf32>
    %239 = math.tanh %238 : vector<8x128xf32>
    %240 = arith.mulf %235, %239 : vector<8x128xf32>
    %241 = arith.truncf %240 : vector<8x128xf32> to vector<8x128xbf16>
    %c7_i32 = arith.constant 7 : i32
    %242 = arith.index_cast %c7_i32 : i32 to index
    %c0_76 = arith.constant 0 : index
    %c0_77 = arith.constant 0 : index
    %243 = vector.load %arg11[%242, %c0_76, %c0_77] : memref<8x8x512xf32, #tpu.memory_space<vmem>>, vector<1x8x512xf32>
    %244 = vector.shape_cast %243 : vector<1x8x512xf32> to vector<8x512xf32>
    %c0_78 = arith.constant 0 : index
    %c0_79 = arith.constant 0 : index
    %245 = vector.load %arg3[%c0_78, %c0_79] : memref<128x512xbf16, #tpu.memory_space<vmem>>, vector<128x512xbf16>
    %cst_80 = arith.constant dense<0.000000e+00> : vector<8x512xf32>
    %246 = tpu.matmul %241, %245, %cst_80 {dimension_numbers = #tpu.dot_dimension_numbers<[1], [0], [0], [1], [0, 0, 1, 1], [], []>} : vector<8x128xbf16>, vector<128x512xbf16>, vector<8x512xf32> -> vector<8x512xf32>
    %247 = arith.addf %244, %246 : vector<8x512xf32>
    %248 = vector.extract_strided_slice %247 {offsets = [0, 0], sizes = [8, 128], strides = [1, 1]} : vector<8x512xf32> to vector<8x128xf32>
    %249 = arith.negf %248 : vector<8x128xf32>
    %250 = math.exp %249 : vector<8x128xf32>
    %cst_81 = arith.constant 1.000000e+00 : f32
    %251 = vector.broadcast %cst_81 : f32 to vector<8x128xf32>
    %252 = arith.addf %251, %250 : vector<8x128xf32>
    %253 = arith.divf %251, %252 : vector<8x128xf32>
    %254 = vector.extract_strided_slice %247 {offsets = [0, 128], sizes = [8, 128], strides = [1, 1]} : vector<8x512xf32> to vector<8x128xf32>
    %255 = arith.negf %254 : vector<8x128xf32>
    %256 = math.exp %255 : vector<8x128xf32>
    %cst_82 = arith.constant 1.000000e+00 : f32
    %257 = vector.broadcast %cst_82 : f32 to vector<8x128xf32>
    %258 = arith.addf %257, %256 : vector<8x128xf32>
    %259 = arith.divf %257, %258 : vector<8x128xf32>
    %260 = vector.extract_strided_slice %247 {offsets = [0, 256], sizes = [8, 128], strides = [1, 1]} : vector<8x512xf32> to vector<8x128xf32>
    %261 = math.tanh %260 : vector<8x128xf32>
    %262 = vector.extract_strided_slice %247 {offsets = [0, 384], sizes = [8, 128], strides = [1, 1]} : vector<8x512xf32> to vector<8x128xf32>
    %263 = arith.negf %262 : vector<8x128xf32>
    %264 = math.exp %263 : vector<8x128xf32>
    %cst_83 = arith.constant 1.000000e+00 : f32
    %265 = vector.broadcast %cst_83 : f32 to vector<8x128xf32>
    %266 = arith.addf %265, %264 : vector<8x128xf32>
    %267 = arith.divf %265, %266 : vector<8x128xf32>
    %268 = arith.mulf %259, %238 : vector<8x128xf32>
    %269 = arith.mulf %253, %261 : vector<8x128xf32>
    %270 = arith.addf %268, %269 : vector<8x128xf32>
    %271 = math.tanh %270 : vector<8x128xf32>
    %272 = arith.mulf %267, %271 : vector<8x128xf32>
    %273 = arith.truncf %272 : vector<8x128xf32> to vector<8x128xbf16>
    %c8_i32 = arith.constant 8 : i32
    %c0_i32_84 = arith.constant 0 : i32
    %274 = arith.index_cast %c0_i32_84 : i32 to index
    %c0_85 = arith.constant 0 : index
    %c0_86 = arith.constant 0 : index
    %275 = vector.load %arg12[%274, %c0_85, %c0_86] : memref<8x8x512xf32, #tpu.memory_space<vmem>>, vector<1x8x512xf32>
    %276 = vector.shape_cast %275 : vector<1x8x512xf32> to vector<8x512xf32>
    %c0_87 = arith.constant 0 : index
    %c0_88 = arith.constant 0 : index
    %277 = vector.load %arg6[%c0_87, %c0_88] : memref<128x512xbf16, #tpu.memory_space<vmem>>, vector<128x512xbf16>
    %cst_89 = arith.constant dense<0.000000e+00> : vector<8x512xf32>
    %278 = tpu.matmul %273, %277, %cst_89 {dimension_numbers = #tpu.dot_dimension_numbers<[1], [0], [0], [1], [0, 0, 1, 1], [], []>} : vector<8x128xbf16>, vector<128x512xbf16>, vector<8x512xf32> -> vector<8x512xf32>
    %279 = arith.addf %276, %278 : vector<8x512xf32>
    %280 = vector.extract_strided_slice %279 {offsets = [0, 0], sizes = [8, 128], strides = [1, 1]} : vector<8x512xf32> to vector<8x128xf32>
    %281 = arith.negf %280 : vector<8x128xf32>
    %282 = math.exp %281 : vector<8x128xf32>
    %cst_90 = arith.constant 1.000000e+00 : f32
    %283 = vector.broadcast %cst_90 : f32 to vector<8x128xf32>
    %284 = arith.addf %283, %282 : vector<8x128xf32>
    %285 = arith.divf %283, %284 : vector<8x128xf32>
    %286 = vector.extract_strided_slice %279 {offsets = [0, 128], sizes = [8, 128], strides = [1, 1]} : vector<8x512xf32> to vector<8x128xf32>
    %287 = arith.negf %286 : vector<8x128xf32>
    %288 = math.exp %287 : vector<8x128xf32>
    %cst_91 = arith.constant 1.000000e+00 : f32
    %289 = vector.broadcast %cst_91 : f32 to vector<8x128xf32>
    %290 = arith.addf %289, %288 : vector<8x128xf32>
    %291 = arith.divf %289, %290 : vector<8x128xf32>
    %292 = vector.extract_strided_slice %279 {offsets = [0, 256], sizes = [8, 128], strides = [1, 1]} : vector<8x512xf32> to vector<8x128xf32>
    %293 = math.tanh %292 : vector<8x128xf32>
    %294 = vector.extract_strided_slice %279 {offsets = [0, 384], sizes = [8, 128], strides = [1, 1]} : vector<8x512xf32> to vector<8x128xf32>
    %295 = arith.negf %294 : vector<8x128xf32>
    %296 = math.exp %295 : vector<8x128xf32>
    %cst_92 = arith.constant 1.000000e+00 : f32
    %297 = vector.broadcast %cst_92 : f32 to vector<8x128xf32>
    %298 = arith.addf %297, %296 : vector<8x128xf32>
    %299 = arith.divf %297, %298 : vector<8x128xf32>
    %300 = arith.mulf %291, %270 : vector<8x128xf32>
    %301 = arith.mulf %285, %293 : vector<8x128xf32>
    %302 = arith.addf %300, %301 : vector<8x128xf32>
    %303 = math.tanh %302 : vector<8x128xf32>
    %304 = arith.mulf %299, %303 : vector<8x128xf32>
    %305 = arith.index_cast %c0_i32_84 : i32 to index
    %c0_93 = arith.constant 0 : index
    %c0_94 = arith.constant 0 : index
    %306 = vector.load %arg8[%305, %c0_93, %c0_94] : memref<8x8x128xf32, #tpu.memory_space<vmem>>, vector<1x8x128xf32>
    %307 = vector.shape_cast %306 : vector<1x8x128xf32> to vector<8x128xf32>
    %308 = vector.shape_cast %304 : vector<8x128xf32> to vector<1x8x128xf32>
    tpu.vector_store %arg8[%305, %c0_93, %c0_94], %308 {strides = array<i32>} : memref<8x8x128xf32, #tpu.memory_space<vmem>>, vector<1x8x128xf32>,
    %309 = arith.truncf %304 : vector<8x128xf32> to vector<8x128xbf16>
    %c1_i32_95 = arith.constant 1 : i32
    %310 = arith.index_cast %c1_i32_95 : i32 to index
    %c0_96 = arith.constant 0 : index
    %c0_97 = arith.constant 0 : index
    %311 = vector.load %arg12[%310, %c0_96, %c0_97] : memref<8x8x512xf32, #tpu.memory_space<vmem>>, vector<1x8x512xf32>
    %312 = vector.shape_cast %311 : vector<1x8x512xf32> to vector<8x512xf32>
    %c0_98 = arith.constant 0 : index
    %c0_99 = arith.constant 0 : index
    %313 = vector.load %arg6[%c0_98, %c0_99] : memref<128x512xbf16, #tpu.memory_space<vmem>>, vector<128x512xbf16>
    %cst_100 = arith.constant dense<0.000000e+00> : vector<8x512xf32>
    %314 = tpu.matmul %309, %313, %cst_100 {dimension_numbers = #tpu.dot_dimension_numbers<[1], [0], [0], [1], [0, 0, 1, 1], [], []>} : vector<8x128xbf16>, vector<128x512xbf16>, vector<8x512xf32> -> vector<8x512xf32>
    %315 = arith.addf %312, %314 : vector<8x512xf32>
    %316 = vector.extract_strided_slice %315 {offsets = [0, 0], sizes = [8, 128], strides = [1, 1]} : vector<8x512xf32> to vector<8x128xf32>
    %317 = arith.negf %316 : vector<8x128xf32>
    %318 = math.exp %317 : vector<8x128xf32>
    %cst_101 = arith.constant 1.000000e+00 : f32
    %319 = vector.broadcast %cst_101 : f32 to vector<8x128xf32>
    %320 = arith.addf %319, %318 : vector<8x128xf32>
    %321 = arith.divf %319, %320 : vector<8x128xf32>
    %322 = vector.extract_strided_slice %315 {offsets = [0, 128], sizes = [8, 128], strides = [1, 1]} : vector<8x512xf32> to vector<8x128xf32>
    %323 = arith.negf %322 : vector<8x128xf32>
    %324 = math.exp %323 : vector<8x128xf32>
    %cst_102 = arith.constant 1.000000e+00 : f32
    %325 = vector.broadcast %cst_102 : f32 to vector<8x128xf32>
    %326 = arith.addf %325, %324 : vector<8x128xf32>
    %327 = arith.divf %325, %326 : vector<8x128xf32>
    %328 = vector.extract_strided_slice %315 {offsets = [0, 256], sizes = [8, 128], strides = [1, 1]} : vector<8x512xf32> to vector<8x128xf32>
    %329 = math.tanh %328 : vector<8x128xf32>
    %330 = vector.extract_strided_slice %315 {offsets = [0, 384], sizes = [8, 128], strides = [1, 1]} : vector<8x512xf32> to vector<8x128xf32>
    %331 = arith.negf %330 : vector<8x128xf32>
    %332 = math.exp %331 : vector<8x128xf32>
    %cst_103 = arith.constant 1.000000e+00 : f32
    %333 = vector.broadcast %cst_103 : f32 to vector<8x128xf32>
    %334 = arith.addf %333, %332 : vector<8x128xf32>
    %335 = arith.divf %333, %334 : vector<8x128xf32>
    %336 = arith.mulf %327, %302 : vector<8x128xf32>
    %337 = arith.mulf %321, %329 : vector<8x128xf32>
    %338 = arith.addf %336, %337 : vector<8x128xf32>
    %339 = math.tanh %338 : vector<8x128xf32>
    %340 = arith.mulf %335, %339 : vector<8x128xf32>
    %341 = arith.index_cast %c1_i32_95 : i32 to index
    %c0_104 = arith.constant 0 : index
    %c0_105 = arith.constant 0 : index
    %342 = vector.load %arg8[%341, %c0_104, %c0_105] : memref<8x8x128xf32, #tpu.memory_space<vmem>>, vector<1x8x128xf32>
    %343 = vector.shape_cast %342 : vector<1x8x128xf32> to vector<8x128xf32>
    %344 = vector.shape_cast %340 : vector<8x128xf32> to vector<1x8x128xf32>
    tpu.vector_store %arg8[%341, %c0_104, %c0_105], %344 {strides = array<i32>} : memref<8x8x128xf32, #tpu.memory_space<vmem>>, vector<1x8x128xf32>,
    %345 = arith.truncf %340 : vector<8x128xf32> to vector<8x128xbf16>
    %c2_i32_106 = arith.constant 2 : i32
    %346 = arith.index_cast %c2_i32_106 : i32 to index
    %c0_107 = arith.constant 0 : index
    %c0_108 = arith.constant 0 : index
    %347 = vector.load %arg12[%346, %c0_107, %c0_108] : memref<8x8x512xf32, #tpu.memory_space<vmem>>, vector<1x8x512xf32>
    %348 = vector.shape_cast %347 : vector<1x8x512xf32> to vector<8x512xf32>
    %c0_109 = arith.constant 0 : index
    %c0_110 = arith.constant 0 : index
    %349 = vector.load %arg6[%c0_109, %c0_110] : memref<128x512xbf16, #tpu.memory_space<vmem>>, vector<128x512xbf16>
    %cst_111 = arith.constant dense<0.000000e+00> : vector<8x512xf32>
    %350 = tpu.matmul %345, %349, %cst_111 {dimension_numbers = #tpu.dot_dimension_numbers<[1], [0], [0], [1], [0, 0, 1, 1], [], []>} : vector<8x128xbf16>, vector<128x512xbf16>, vector<8x512xf32> -> vector<8x512xf32>
    %351 = arith.addf %348, %350 : vector<8x512xf32>
    %352 = vector.extract_strided_slice %351 {offsets = [0, 0], sizes = [8, 128], strides = [1, 1]} : vector<8x512xf32> to vector<8x128xf32>
    %353 = arith.negf %352 : vector<8x128xf32>
    %354 = math.exp %353 : vector<8x128xf32>
    %cst_112 = arith.constant 1.000000e+00 : f32
    %355 = vector.broadcast %cst_112 : f32 to vector<8x128xf32>
    %356 = arith.addf %355, %354 : vector<8x128xf32>
    %357 = arith.divf %355, %356 : vector<8x128xf32>
    %358 = vector.extract_strided_slice %351 {offsets = [0, 128], sizes = [8, 128], strides = [1, 1]} : vector<8x512xf32> to vector<8x128xf32>
    %359 = arith.negf %358 : vector<8x128xf32>
    %360 = math.exp %359 : vector<8x128xf32>
    %cst_113 = arith.constant 1.000000e+00 : f32
    %361 = vector.broadcast %cst_113 : f32 to vector<8x128xf32>
    %362 = arith.addf %361, %360 : vector<8x128xf32>
    %363 = arith.divf %361, %362 : vector<8x128xf32>
    %364 = vector.extract_strided_slice %351 {offsets = [0, 256], sizes = [8, 128], strides = [1, 1]} : vector<8x512xf32> to vector<8x128xf32>
    %365 = math.tanh %364 : vector<8x128xf32>
    %366 = vector.extract_strided_slice %351 {offsets = [0, 384], sizes = [8, 128], strides = [1, 1]} : vector<8x512xf32> to vector<8x128xf32>
    %367 = arith.negf %366 : vector<8x128xf32>
    %368 = math.exp %367 : vector<8x128xf32>
    %cst_114 = arith.constant 1.000000e+00 : f32
    %369 = vector.broadcast %cst_114 : f32 to vector<8x128xf32>
    %370 = arith.addf %369, %368 : vector<8x128xf32>
    %371 = arith.divf %369, %370 : vector<8x128xf32>
    %372 = arith.mulf %363, %338 : vector<8x128xf32>
    %373 = arith.mulf %357, %365 : vector<8x128xf32>
    %374 = arith.addf %372, %373 : vector<8x128xf32>
    %375 = math.tanh %374 : vector<8x128xf32>
    %376 = arith.mulf %371, %375 : vector<8x128xf32>
    %377 = arith.index_cast %c2_i32_106 : i32 to index
    %c0_115 = arith.constant 0 : index
    %c0_116 = arith.constant 0 : index
    %378 = vector.load %arg8[%377, %c0_115, %c0_116] : memref<8x8x128xf32, #tpu.memory_space<vmem>>, vector<1x8x128xf32>
    %379 = vector.shape_cast %378 : vector<1x8x128xf32> to vector<8x128xf32>
    %380 = vector.shape_cast %376 : vector<8x128xf32> to vector<1x8x128xf32>
    tpu.vector_store %arg8[%377, %c0_115, %c0_116], %380 {strides = array<i32>} : memref<8x8x128xf32, #tpu.memory_space<vmem>>, vector<1x8x128xf32>,
    %381 = arith.truncf %376 : vector<8x128xf32> to vector<8x128xbf16>
    %c3_i32_117 = arith.constant 3 : i32
    %382 = arith.index_cast %c3_i32_117 : i32 to index
    %c0_118 = arith.constant 0 : index
    %c0_119 = arith.constant 0 : index
    %383 = vector.load %arg12[%382, %c0_118, %c0_119] : memref<8x8x512xf32, #tpu.memory_space<vmem>>, vector<1x8x512xf32>
    %384 = vector.shape_cast %383 : vector<1x8x512xf32> to vector<8x512xf32>
    %c0_120 = arith.constant 0 : index
    %c0_121 = arith.constant 0 : index
    %385 = vector.load %arg6[%c0_120, %c0_121] : memref<128x512xbf16, #tpu.memory_space<vmem>>, vector<128x512xbf16>
    %cst_122 = arith.constant dense<0.000000e+00> : vector<8x512xf32>
    %386 = tpu.matmul %381, %385, %cst_122 {dimension_numbers = #tpu.dot_dimension_numbers<[1], [0], [0], [1], [0, 0, 1, 1], [], []>} : vector<8x128xbf16>, vector<128x512xbf16>, vector<8x512xf32> -> vector<8x512xf32>
    %387 = arith.addf %384, %386 : vector<8x512xf32>
    %388 = vector.extract_strided_slice %387 {offsets = [0, 0], sizes = [8, 128], strides = [1, 1]} : vector<8x512xf32> to vector<8x128xf32>
    %389 = arith.negf %388 : vector<8x128xf32>
    %390 = math.exp %389 : vector<8x128xf32>
    %cst_123 = arith.constant 1.000000e+00 : f32
    %391 = vector.broadcast %cst_123 : f32 to vector<8x128xf32>
    %392 = arith.addf %391, %390 : vector<8x128xf32>
    %393 = arith.divf %391, %392 : vector<8x128xf32>
    %394 = vector.extract_strided_slice %387 {offsets = [0, 128], sizes = [8, 128], strides = [1, 1]} : vector<8x512xf32> to vector<8x128xf32>
    %395 = arith.negf %394 : vector<8x128xf32>
    %396 = math.exp %395 : vector<8x128xf32>
    %cst_124 = arith.constant 1.000000e+00 : f32
    %397 = vector.broadcast %cst_124 : f32 to vector<8x128xf32>
    %398 = arith.addf %397, %396 : vector<8x128xf32>
    %399 = arith.divf %397, %398 : vector<8x128xf32>
    %400 = vector.extract_strided_slice %387 {offsets = [0, 256], sizes = [8, 128], strides = [1, 1]} : vector<8x512xf32> to vector<8x128xf32>
    %401 = math.tanh %400 : vector<8x128xf32>
    %402 = vector.extract_strided_slice %387 {offsets = [0, 384], sizes = [8, 128], strides = [1, 1]} : vector<8x512xf32> to vector<8x128xf32>
    %403 = arith.negf %402 : vector<8x128xf32>
    %404 = math.exp %403 : vector<8x128xf32>
    %cst_125 = arith.constant 1.000000e+00 : f32
    %405 = vector.broadcast %cst_125 : f32 to vector<8x128xf32>
    %406 = arith.addf %405, %404 : vector<8x128xf32>
    %407 = arith.divf %405, %406 : vector<8x128xf32>
    %408 = arith.mulf %399, %374 : vector<8x128xf32>
    %409 = arith.mulf %393, %401 : vector<8x128xf32>
    %410 = arith.addf %408, %409 : vector<8x128xf32>
    %411 = math.tanh %410 : vector<8x128xf32>
    %412 = arith.mulf %407, %411 : vector<8x128xf32>
    %413 = arith.index_cast %c3_i32_117 : i32 to index
    %c0_126 = arith.constant 0 : index
    %c0_127 = arith.constant 0 : index
    %414 = vector.load %arg8[%413, %c0_126, %c0_127] : memref<8x8x128xf32, #tpu.memory_space<vmem>>, vector<1x8x128xf32>
    %415 = vector.shape_cast %414 : vector<1x8x128xf32> to vector<8x128xf32>
    %416 = vector.shape_cast %412 : vector<8x128xf32> to vector<1x8x128xf32>
    tpu.vector_store %arg8[%413, %c0_126, %c0_127], %416 {strides = array<i32>} : memref<8x8x128xf32, #tpu.memory_space<vmem>>, vector<1x8x128xf32>,
    %417 = arith.truncf %412 : vector<8x128xf32> to vector<8x128xbf16>
    %c4_i32_128 = arith.constant 4 : i32
    %418 = arith.index_cast %c4_i32_128 : i32 to index
    %c0_129 = arith.constant 0 : index
    %c0_130 = arith.constant 0 : index
    %419 = vector.load %arg12[%418, %c0_129, %c0_130] : memref<8x8x512xf32, #tpu.memory_space<vmem>>, vector<1x8x512xf32>
    %420 = vector.shape_cast %419 : vector<1x8x512xf32> to vector<8x512xf32>
    %c0_131 = arith.constant 0 : index
    %c0_132 = arith.constant 0 : index
    %421 = vector.load %arg6[%c0_131, %c0_132] : memref<128x512xbf16, #tpu.memory_space<vmem>>, vector<128x512xbf16>
    %cst_133 = arith.constant dense<0.000000e+00> : vector<8x512xf32>
    %422 = tpu.matmul %417, %421, %cst_133 {dimension_numbers = #tpu.dot_dimension_numbers<[1], [0], [0], [1], [0, 0, 1, 1], [], []>} : vector<8x128xbf16>, vector<128x512xbf16>, vector<8x512xf32> -> vector<8x512xf32>
    %423 = arith.addf %420, %422 : vector<8x512xf32>
    %424 = vector.extract_strided_slice %423 {offsets = [0, 0], sizes = [8, 128], strides = [1, 1]} : vector<8x512xf32> to vector<8x128xf32>
    %425 = arith.negf %424 : vector<8x128xf32>
    %426 = math.exp %425 : vector<8x128xf32>
    %cst_134 = arith.constant 1.000000e+00 : f32
    %427 = vector.broadcast %cst_134 : f32 to vector<8x128xf32>
    %428 = arith.addf %427, %426 : vector<8x128xf32>
    %429 = arith.divf %427, %428 : vector<8x128xf32>
    %430 = vector.extract_strided_slice %423 {offsets = [0, 128], sizes = [8, 128], strides = [1, 1]} : vector<8x512xf32> to vector<8x128xf32>
    %431 = arith.negf %430 : vector<8x128xf32>
    %432 = math.exp %431 : vector<8x128xf32>
    %cst_135 = arith.constant 1.000000e+00 : f32
    %433 = vector.broadcast %cst_135 : f32 to vector<8x128xf32>
    %434 = arith.addf %433, %432 : vector<8x128xf32>
    %435 = arith.divf %433, %434 : vector<8x128xf32>
    %436 = vector.extract_strided_slice %423 {offsets = [0, 256], sizes = [8, 128], strides = [1, 1]} : vector<8x512xf32> to vector<8x128xf32>
    %437 = math.tanh %436 : vector<8x128xf32>
    %438 = vector.extract_strided_slice %423 {offsets = [0, 384], sizes = [8, 128], strides = [1, 1]} : vector<8x512xf32> to vector<8x128xf32>
    %439 = arith.negf %438 : vector<8x128xf32>
    %440 = math.exp %439 : vector<8x128xf32>
    %cst_136 = arith.constant 1.000000e+00 : f32
    %441 = vector.broadcast %cst_136 : f32 to vector<8x128xf32>
    %442 = arith.addf %441, %440 : vector<8x128xf32>
    %443 = arith.divf %441, %442 : vector<8x128xf32>
    %444 = arith.mulf %435, %410 : vector<8x128xf32>
    %445 = arith.mulf %429, %437 : vector<8x128xf32>
    %446 = arith.addf %444, %445 : vector<8x128xf32>
    %447 = math.tanh %446 : vector<8x128xf32>
    %448 = arith.mulf %443, %447 : vector<8x128xf32>
    %449 = arith.index_cast %c4_i32_128 : i32 to index
    %c0_137 = arith.constant 0 : index
    %c0_138 = arith.constant 0 : index
    %450 = vector.load %arg8[%449, %c0_137, %c0_138] : memref<8x8x128xf32, #tpu.memory_space<vmem>>, vector<1x8x128xf32>
    %451 = vector.shape_cast %450 : vector<1x8x128xf32> to vector<8x128xf32>
    %452 = vector.shape_cast %448 : vector<8x128xf32> to vector<1x8x128xf32>
    tpu.vector_store %arg8[%449, %c0_137, %c0_138], %452 {strides = array<i32>} : memref<8x8x128xf32, #tpu.memory_space<vmem>>, vector<1x8x128xf32>,
    %453 = arith.truncf %448 : vector<8x128xf32> to vector<8x128xbf16>
    %c5_i32_139 = arith.constant 5 : i32
    %454 = arith.index_cast %c5_i32_139 : i32 to index
    %c0_140 = arith.constant 0 : index
    %c0_141 = arith.constant 0 : index
    %455 = vector.load %arg12[%454, %c0_140, %c0_141] : memref<8x8x512xf32, #tpu.memory_space<vmem>>, vector<1x8x512xf32>
    %456 = vector.shape_cast %455 : vector<1x8x512xf32> to vector<8x512xf32>
    %c0_142 = arith.constant 0 : index
    %c0_143 = arith.constant 0 : index
    %457 = vector.load %arg6[%c0_142, %c0_143] : memref<128x512xbf16, #tpu.memory_space<vmem>>, vector<128x512xbf16>
    %cst_144 = arith.constant dense<0.000000e+00> : vector<8x512xf32>
    %458 = tpu.matmul %453, %457, %cst_144 {dimension_numbers = #tpu.dot_dimension_numbers<[1], [0], [0], [1], [0, 0, 1, 1], [], []>} : vector<8x128xbf16>, vector<128x512xbf16>, vector<8x512xf32> -> vector<8x512xf32>
    %459 = arith.addf %456, %458 : vector<8x512xf32>
    %460 = vector.extract_strided_slice %459 {offsets = [0, 0], sizes = [8, 128], strides = [1, 1]} : vector<8x512xf32> to vector<8x128xf32>
    %461 = arith.negf %460 : vector<8x128xf32>
    %462 = math.exp %461 : vector<8x128xf32>
    %cst_145 = arith.constant 1.000000e+00 : f32
    %463 = vector.broadcast %cst_145 : f32 to vector<8x128xf32>
    %464 = arith.addf %463, %462 : vector<8x128xf32>
    %465 = arith.divf %463, %464 : vector<8x128xf32>
    %466 = vector.extract_strided_slice %459 {offsets = [0, 128], sizes = [8, 128], strides = [1, 1]} : vector<8x512xf32> to vector<8x128xf32>
    %467 = arith.negf %466 : vector<8x128xf32>
    %468 = math.exp %467 : vector<8x128xf32>
    %cst_146 = arith.constant 1.000000e+00 : f32
    %469 = vector.broadcast %cst_146 : f32 to vector<8x128xf32>
    %470 = arith.addf %469, %468 : vector<8x128xf32>
    %471 = arith.divf %469, %470 : vector<8x128xf32>
    %472 = vector.extract_strided_slice %459 {offsets = [0, 256], sizes = [8, 128], strides = [1, 1]} : vector<8x512xf32> to vector<8x128xf32>
    %473 = math.tanh %472 : vector<8x128xf32>
    %474 = vector.extract_strided_slice %459 {offsets = [0, 384], sizes = [8, 128], strides = [1, 1]} : vector<8x512xf32> to vector<8x128xf32>
    %475 = arith.negf %474 : vector<8x128xf32>
    %476 = math.exp %475 : vector<8x128xf32>
    %cst_147 = arith.constant 1.000000e+00 : f32
    %477 = vector.broadcast %cst_147 : f32 to vector<8x128xf32>
    %478 = arith.addf %477, %476 : vector<8x128xf32>
    %479 = arith.divf %477, %478 : vector<8x128xf32>
    %480 = arith.mulf %471, %446 : vector<8x128xf32>
    %481 = arith.mulf %465, %473 : vector<8x128xf32>
    %482 = arith.addf %480, %481 : vector<8x128xf32>
    %483 = math.tanh %482 : vector<8x128xf32>
    %484 = arith.mulf %479, %483 : vector<8x128xf32>
    %485 = arith.index_cast %c5_i32_139 : i32 to index
    %c0_148 = arith.constant 0 : index
    %c0_149 = arith.constant 0 : index
    %486 = vector.load %arg8[%485, %c0_148, %c0_149] : memref<8x8x128xf32, #tpu.memory_space<vmem>>, vector<1x8x128xf32>
    %487 = vector.shape_cast %486 : vector<1x8x128xf32> to vector<8x128xf32>
    %488 = vector.shape_cast %484 : vector<8x128xf32> to vector<1x8x128xf32>
    tpu.vector_store %arg8[%485, %c0_148, %c0_149], %488 {strides = array<i32>} : memref<8x8x128xf32, #tpu.memory_space<vmem>>, vector<1x8x128xf32>,
    %489 = arith.truncf %484 : vector<8x128xf32> to vector<8x128xbf16>
    %c6_i32_150 = arith.constant 6 : i32
    %490 = arith.index_cast %c6_i32_150 : i32 to index
    %c0_151 = arith.constant 0 : index
    %c0_152 = arith.constant 0 : index
    %491 = vector.load %arg12[%490, %c0_151, %c0_152] : memref<8x8x512xf32, #tpu.memory_space<vmem>>, vector<1x8x512xf32>
    %492 = vector.shape_cast %491 : vector<1x8x512xf32> to vector<8x512xf32>
    %c0_153 = arith.constant 0 : index
    %c0_154 = arith.constant 0 : index
    %493 = vector.load %arg6[%c0_153, %c0_154] : memref<128x512xbf16, #tpu.memory_space<vmem>>, vector<128x512xbf16>
    %cst_155 = arith.constant dense<0.000000e+00> : vector<8x512xf32>
    %494 = tpu.matmul %489, %493, %cst_155 {dimension_numbers = #tpu.dot_dimension_numbers<[1], [0], [0], [1], [0, 0, 1, 1], [], []>} : vector<8x128xbf16>, vector<128x512xbf16>, vector<8x512xf32> -> vector<8x512xf32>
    %495 = arith.addf %492, %494 : vector<8x512xf32>
    %496 = vector.extract_strided_slice %495 {offsets = [0, 0], sizes = [8, 128], strides = [1, 1]} : vector<8x512xf32> to vector<8x128xf32>
    %497 = arith.negf %496 : vector<8x128xf32>
    %498 = math.exp %497 : vector<8x128xf32>
    %cst_156 = arith.constant 1.000000e+00 : f32
    %499 = vector.broadcast %cst_156 : f32 to vector<8x128xf32>
    %500 = arith.addf %499, %498 : vector<8x128xf32>
    %501 = arith.divf %499, %500 : vector<8x128xf32>
    %502 = vector.extract_strided_slice %495 {offsets = [0, 128], sizes = [8, 128], strides = [1, 1]} : vector<8x512xf32> to vector<8x128xf32>
    %503 = arith.negf %502 : vector<8x128xf32>
    %504 = math.exp %503 : vector<8x128xf32>
    %cst_157 = arith.constant 1.000000e+00 : f32
    %505 = vector.broadcast %cst_157 : f32 to vector<8x128xf32>
    %506 = arith.addf %505, %504 : vector<8x128xf32>
    %507 = arith.divf %505, %506 : vector<8x128xf32>
    %508 = vector.extract_strided_slice %495 {offsets = [0, 256], sizes = [8, 128], strides = [1, 1]} : vector<8x512xf32> to vector<8x128xf32>
    %509 = math.tanh %508 : vector<8x128xf32>
    %510 = vector.extract_strided_slice %495 {offsets = [0, 384], sizes = [8, 128], strides = [1, 1]} : vector<8x512xf32> to vector<8x128xf32>
    %511 = arith.negf %510 : vector<8x128xf32>
    %512 = math.exp %511 : vector<8x128xf32>
    %cst_158 = arith.constant 1.000000e+00 : f32
    %513 = vector.broadcast %cst_158 : f32 to vector<8x128xf32>
    %514 = arith.addf %513, %512 : vector<8x128xf32>
    %515 = arith.divf %513, %514 : vector<8x128xf32>
    %516 = arith.mulf %507, %482 : vector<8x128xf32>
    %517 = arith.mulf %501, %509 : vector<8x128xf32>
    %518 = arith.addf %516, %517 : vector<8x128xf32>
    %519 = math.tanh %518 : vector<8x128xf32>
    %520 = arith.mulf %515, %519 : vector<8x128xf32>
    %521 = arith.index_cast %c6_i32_150 : i32 to index
    %c0_159 = arith.constant 0 : index
    %c0_160 = arith.constant 0 : index
    %522 = vector.load %arg8[%521, %c0_159, %c0_160] : memref<8x8x128xf32, #tpu.memory_space<vmem>>, vector<1x8x128xf32>
    %523 = vector.shape_cast %522 : vector<1x8x128xf32> to vector<8x128xf32>
    %524 = vector.shape_cast %520 : vector<8x128xf32> to vector<1x8x128xf32>
    tpu.vector_store %arg8[%521, %c0_159, %c0_160], %524 {strides = array<i32>} : memref<8x8x128xf32, #tpu.memory_space<vmem>>, vector<1x8x128xf32>,
    %525 = arith.truncf %520 : vector<8x128xf32> to vector<8x128xbf16>
    %c7_i32_161 = arith.constant 7 : i32
    %526 = arith.index_cast %c7_i32_161 : i32 to index
    %c0_162 = arith.constant 0 : index
    %c0_163 = arith.constant 0 : index
    %527 = vector.load %arg12[%526, %c0_162, %c0_163] : memref<8x8x512xf32, #tpu.memory_space<vmem>>, vector<1x8x512xf32>
    %528 = vector.shape_cast %527 : vector<1x8x512xf32> to vector<8x512xf32>
    %c0_164 = arith.constant 0 : index
    %c0_165 = arith.constant 0 : index
    %529 = vector.load %arg6[%c0_164, %c0_165] : memref<128x512xbf16, #tpu.memory_space<vmem>>, vector<128x512xbf16>
    %cst_166 = arith.constant dense<0.000000e+00> : vector<8x512xf32>
    %530 = tpu.matmul %525, %529, %cst_166 {dimension_numbers = #tpu.dot_dimension_numbers<[1], [0], [0], [1], [0, 0, 1, 1], [], []>} : vector<8x128xbf16>, vector<128x512xbf16>, vector<8x512xf32> -> vector<8x512xf32>
    %531 = arith.addf %528, %530 : vector<8x512xf32>
    %532 = vector.extract_strided_slice %531 {offsets = [0, 0], sizes = [8, 128], strides = [1, 1]} : vector<8x512xf32> to vector<8x128xf32>
    %533 = arith.negf %532 : vector<8x128xf32>
    %534 = math.exp %533 : vector<8x128xf32>
    %cst_167 = arith.constant 1.000000e+00 : f32
    %535 = vector.broadcast %cst_167 : f32 to vector<8x128xf32>
    %536 = arith.addf %535, %534 : vector<8x128xf32>
    %537 = arith.divf %535, %536 : vector<8x128xf32>
    %538 = vector.extract_strided_slice %531 {offsets = [0, 128], sizes = [8, 128], strides = [1, 1]} : vector<8x512xf32> to vector<8x128xf32>
    %539 = arith.negf %538 : vector<8x128xf32>
    %540 = math.exp %539 : vector<8x128xf32>
    %cst_168 = arith.constant 1.000000e+00 : f32
    %541 = vector.broadcast %cst_168 : f32 to vector<8x128xf32>
    %542 = arith.addf %541, %540 : vector<8x128xf32>
    %543 = arith.divf %541, %542 : vector<8x128xf32>
    %544 = vector.extract_strided_slice %531 {offsets = [0, 256], sizes = [8, 128], strides = [1, 1]} : vector<8x512xf32> to vector<8x128xf32>
    %545 = math.tanh %544 : vector<8x128xf32>
    %546 = vector.extract_strided_slice %531 {offsets = [0, 384], sizes = [8, 128], strides = [1, 1]} : vector<8x512xf32> to vector<8x128xf32>
    %547 = arith.negf %546 : vector<8x128xf32>
    %548 = math.exp %547 : vector<8x128xf32>
    %cst_169 = arith.constant 1.000000e+00 : f32
    %549 = vector.broadcast %cst_169 : f32 to vector<8x128xf32>
    %550 = arith.addf %549, %548 : vector<8x128xf32>
    %551 = arith.divf %549, %550 : vector<8x128xf32>
    %552 = arith.mulf %543, %518 : vector<8x128xf32>
    %553 = arith.mulf %537, %545 : vector<8x128xf32>
    %554 = arith.addf %552, %553 : vector<8x128xf32>
    %555 = math.tanh %554 : vector<8x128xf32>
    %556 = arith.mulf %551, %555 : vector<8x128xf32>
    %557 = arith.index_cast %c7_i32_161 : i32 to index
    %c0_170 = arith.constant 0 : index
    %c0_171 = arith.constant 0 : index
    %558 = vector.load %arg8[%557, %c0_170, %c0_171] : memref<8x8x128xf32, #tpu.memory_space<vmem>>, vector<1x8x128xf32>
    %559 = vector.shape_cast %558 : vector<1x8x128xf32> to vector<8x128xf32>
    %560 = vector.shape_cast %556 : vector<8x128xf32> to vector<1x8x128xf32>
    tpu.vector_store %arg8[%557, %c0_170, %c0_171], %560 {strides = array<i32>} : memref<8x8x128xf32, #tpu.memory_space<vmem>>, vector<1x8x128xf32>,
    %561 = arith.truncf %556 : vector<8x128xf32> to vector<8x128xbf16>
    %c8_i32_172 = arith.constant 8 : i32
    %c7 = arith.constant 7 : index
    %c0_173 = arith.constant 0 : index
    %c0_174 = arith.constant 0 : index
    %562 = vector.load %arg8[%c7, %c0_173, %c0_174] : memref<8x8x128xf32, #tpu.memory_space<vmem>>, vector<1x8x128xf32>
    %563 = vector.shape_cast %562 : vector<1x8x128xf32> to vector<8x128xf32>
    %c0_175 = arith.constant 0 : index
    %c0_176 = arith.constant 0 : index
    %564 = vector.load %arg9[%c0_175, %c0_176] : memref<8x128xf32, #tpu.memory_space<vmem>>, vector<8x128xf32>
    tpu.vector_store %arg9[%c0_175, %c0_176], %563 {strides = array<i32>} : memref<8x128xf32, #tpu.memory_space<vmem>>, vector<8x128xf32>,
    %c0_177 = arith.constant 0 : index
    %c0_178 = arith.constant 0 : index
    %565 = vector.load %arg10[%c0_177, %c0_178] : memref<8x128xf32, #tpu.memory_space<vmem>>, vector<8x128xf32>
    tpu.vector_store %arg10[%c0_177, %c0_178], %554 {strides = array<i32>} : memref<8x128xf32, #tpu.memory_space<vmem>>, vector<8x128xf32>,
    return
  }
}

module attributes {stable_mosaic.version = 11 : i64} {
  func.func @_proj_kernel(%arg0: i32, %arg1: i32, %arg2: memref<64x128xbf16, #tpu.memory_space<vmem>>, %arg3: memref<128x512xbf16, #tpu.memory_space<vmem>>, %arg4: memref<1x512xf32, #tpu.memory_space<vmem>>, %arg5: memref<64x512xf32, #tpu.memory_space<vmem>>) attributes {dimension_semantics = [#tpu.dimension_semantics<parallel>, #tpu.dimension_semantics<parallel>], iteration_bounds = array<i64: 4, 1>, scalar_prefetch = 0 : i64, scratch_operands = 0 : i64, tpu.core_type = #tpu.core_type<tc>, window_params = [{transform_indices = @transform_0, window_bounds = array<i64: 64, 128>}, {transform_indices = @transform_1, window_bounds = array<i64: 128, 512>}, {transform_indices = @transform_2, window_bounds = array<i64: 1, 512>}, {transform_indices = @transform_3, window_bounds = array<i64: 64, 512>}]} {
    %c0 = arith.constant 0 : index
    %c0_0 = arith.constant 0 : index
    %0 = vector.load %arg2[%c0, %c0_0] : memref<64x128xbf16, #tpu.memory_space<vmem>>, vector<64x128xbf16>
    %c0_1 = arith.constant 0 : index
    %c0_2 = arith.constant 0 : index
    %1 = vector.load %arg3[%c0_1, %c0_2] : memref<128x512xbf16, #tpu.memory_space<vmem>>, vector<128x512xbf16>
    %cst = arith.constant dense<0.000000e+00> : vector<64x512xf32>
    %2 = tpu.matmul %0, %1, %cst {dimension_numbers = #tpu.dot_dimension_numbers<[1], [0], [0], [1], [0, 0, 1, 1], [], []>} : vector<64x128xbf16>, vector<128x512xbf16>, vector<64x512xf32> -> vector<64x512xf32>
    %c0_3 = arith.constant 0 : index
    %c0_4 = arith.constant 0 : index
    %3 = vector.load %arg4[%c0_3, %c0_4] : memref<1x512xf32, #tpu.memory_space<vmem>>, vector<1x512xf32>
    %4 = vector.broadcast %3 : vector<1x512xf32> to vector<64x512xf32>
    %5 = arith.addf %2, %4 : vector<64x512xf32>
    %c0_5 = arith.constant 0 : index
    %c0_6 = arith.constant 0 : index
    %6 = vector.load %arg5[%c0_5, %c0_6] : memref<64x512xf32, #tpu.memory_space<vmem>>, vector<64x512xf32>
    tpu.vector_store %arg5[%c0_5, %c0_6], %5 {strides = array<i32>} : memref<64x512xf32, #tpu.memory_space<vmem>>, vector<64x512xf32>,
    return
  }
  func.func @transform_0(%arg0: i32, %arg1: i32) -> (i32, i32) {
    %c0_i32 = arith.constant 0 : i32
    %c0_i32_0 = arith.constant 0 : i32
    return %arg1, %c0_i32 : i32, i32
  }
  func.func @transform_1(%arg0: i32, %arg1: i32) -> (i32, i32) {
    %c0_i32 = arith.constant 0 : i32
    %c0_i32_0 = arith.constant 0 : i32
    return %c0_i32, %arg0 : i32, i32
  }
  func.func @transform_2(%arg0: i32, %arg1: i32) -> (i32, i32) {
    %c0_i32 = arith.constant 0 : i32
    %c0_i32_0 = arith.constant 0 : i32
    return %c0_i32, %arg0 : i32, i32
  }
  func.func @transform_3(%arg0: i32, %arg1: i32) -> (i32, i32) {
    %c0_i32 = arith.constant 0 : i32
    return %arg1, %arg0 : i32, i32
  }
}

</mosaic_0001>

<llo_original>
// kernel: lstm_model_forward.3
$region0: #{lstm_model_forward.3}
  #allocation0 [shape = 'u32[]', space=smem, size = 0x4, offset = 0x4, fixed_abs, tag = 'smem constant byte address 0x4 - core index']
  #allocation1 [shape = 'u32[72,128]{1,0:T(1,128)}', space=vmem, size = 0x9000, scoped, tag = 'internal scratch']
  %s0 = inlined_call_operand.vmem [shape: bf16[64,128], index: 0, kind: input, shape index: {}]
  %s1 = inlined_call_operand.hbm [shape: bf16[128,2048], index: 1, kind: input, shape index: {}]
  %s2 = inlined_call_operand.vmem [shape: f32[1,2048], index: 2, kind: input, shape index: {}]
  %s3 = inlined_call_operand.vmem [shape: f32[64,2048], index: 3, kind: output, shape index: {}]
  %s4 = sld [smem:[#allocation0]]
  $region68: #{lstm_model_forward.3} parent=0
    _
  %s6 = ssub.s32 1, %s4
  %s7 = scalar_select 0, %s6, %s4
  $region1: #{lstm_model_forward.3} parent=0
    #allocation2 [shape = 'u8[262144]{0}', space=vmem, size = 0x40000, scoped, tag = 'input window, operand 1']
    #allocation3 [shape = 's32[2]{0}', space=sflag, size = 0x8, scoped, tag = 'scoped memory for lstm_model_forward.3']
    #allocation4 [shape = 'u8[262144]{0}', space=vmem, size = 0x40000, scoped, tag = 'output window, operand 0']
    %8 = vsyncpa [#allocation3], 0
    %s9 = scalar_lea.sflag [#allocation3], 1
    %10 = vsyncpa %s9, 0
    loop: start=0, step=1, limit=6
    $region2: #{lstm_model_forward.3} parent=1 // loop_pre_header
      _
    $region3: #{lstm_model_forward.3} parent=1 // loop_header
      %s12 = sphi 0, %s16
      %p13 = scmp.ge.s32.totalorder %s12, 6
      %s19 = sphi 0, %s31
      %s20 = sphi 0, %s27
      %s21 = sphi 0, %s19
      %s22 = sphi 0, %s20
      %s23 = sphi 0, %s21
      %s24 = sphi 0, %s22
      %s34 = sphi 0, %s36
      %s37 = sphi 0, %s34
      %s38 = sphi 0, %s37
      %s54 = sphi 0, %s38
      %s60 = sphi 0, %s62
      %s63 = sphi 0, %s60
      %s64 = sphi 0, %s63
      %s80 = sphi 0, %s64
      %s86 = sphi 0, %s88
      %s89 = sphi 0, %s86
      %s90 = sphi 0, %s89
      %s106 = sphi 0, %s90
      %s114 = sphi 0, %s116
      %s117 = sphi 0, %s114
      %s118 = sphi 0, %s117
      %s134 = sphi 0, %s118
    $region4: #{lstm_model_forward.3} parent=1 // loop_header_branch
      %15 = sbr.rel (%p13) target = $region8
    $region5: #{lstm_model_forward.3} parent=1 // loop_body
      %s17 = ssub.s32 %s12, 1
      %s18 = ssub.s32 %s12, 2
      %s25 = sadd.s32 1, %s20
      %p26 = scmp.ge.s32.totalorder %s25, 1
      %s27 = scalar_select %p26, 0, %s25
      %s28 = sadd.s32 1, %s19
      %s29 = scalar_select %p26, %s28, %s19
      %p30 = scmp.ge.s32.totalorder %s29, 4
      %s31 = scalar_select %p30, 0, %s29
      %s32 = ssub.s32 %s20, %s27
      %p33 = scmp.eq.s32.totalorder %s32, 0
      %s35 = sadd.s32 %s34, 1
      %s36 = scalar_select %p33, %s34, %s35
      %p39 = pneg %p33
      %p40 = scmp.eq.s32.totalorder %s12, 3
      %p41 = por %p39, %p40
      %p42 = scmp.ne.s32.totalorder %s34, %s37
      %p43 = scmp.eq.s32.totalorder %s12, 0
      %p44 = por %p42, %p43
      %p45 = scmp.ne.s32.totalorder %s34, %s37
      %p46 = scmp.eq.s32.totalorder %s17, 3
      %p47 = por %p45, %p46
      %p48 = scmp.ne.s32.totalorder %s37, %s38
      %p49 = scmp.eq.s32.totalorder %s17, 0
      %p50 = por %p48, %p49
      %p51 = scmp.ne.s32.totalorder %s37, %s38
      %p52 = scmp.eq.s32.totalorder %s18, 3
      %p53 = por %p51, %p52
      %p55 = scmp.ne.s32.totalorder %s38, %s54
      %p56 = scmp.eq.s32.totalorder %s18, 0
      %p57 = por %p55, %p56
      %s58 = ssub.s32 %s19, %s31
      %p59 = scmp.eq.s32.totalorder %s58, 0
      %s61 = sadd.s32 %s60, 1
      %s62 = scalar_select %p59, %s60, %s61
      %p65 = pneg %p59
      %p66 = scmp.eq.s32.totalorder %s12, 3
      %p67 = por %p65, %p66
      %p68 = scmp.ne.s32.totalorder %s60, %s63
      %p69 = scmp.eq.s32.totalorder %s12, 0
      %p70 = por %p68, %p69
      %p71 = scmp.ne.s32.totalorder %s60, %s63
      %p72 = scmp.eq.s32.totalorder %s17, 3
      %p73 = por %p71, %p72
      %p74 = scmp.ne.s32.totalorder %s63, %s64
      %p75 = scmp.eq.s32.totalorder %s17, 0
      %p76 = por %p74, %p75
      %p77 = scmp.ne.s32.totalorder %s63, %s64
      %p78 = scmp.eq.s32.totalorder %s18, 3
      %p79 = por %p77, %p78
      %p81 = scmp.ne.s32.totalorder %s64, %s80
      %p82 = scmp.eq.s32.totalorder %s18, 0
      %p83 = por %p81, %p82
      %s84 = ssub.s32 %s19, %s31
      %p85 = scmp.eq.s32.totalorder %s84, 0
      %s87 = sadd.s32 %s86, 1
      %s88 = scalar_select %p85, %s86, %s87
      %p91 = pneg %p85
      %p92 = scmp.eq.s32.totalorder %s12, 3
      %p93 = por %p91, %p92
      %p94 = scmp.ne.s32.totalorder %s86, %s89
      %p95 = scmp.eq.s32.totalorder %s12, 0
      %p96 = por %p94, %p95
      %p97 = scmp.ne.s32.totalorder %s86, %s89
      %p98 = scmp.eq.s32.totalorder %s17, 3
      %p99 = por %p97, %p98
      %p100 = scmp.ne.s32.totalorder %s89, %s90
      %p101 = scmp.eq.s32.totalorder %s17, 0
      %p102 = por %p100, %p101
      %p103 = scmp.ne.s32.totalorder %s89, %s90
      %p104 = scmp.eq.s32.totalorder %s18, 3
      %p105 = por %p103, %p104
      %p107 = scmp.ne.s32.totalorder %s90, %s106
      %p108 = scmp.eq.s32.totalorder %s18, 0
      %p109 = por %p107, %p108
      %s110 = ssub.s32 %s20, %s27
      %s111 = ssub.s32 %s19, %s31
      %s112 = sor.u32 %s110, %s111
      %p113 = scmp.eq.s32.totalorder %s112, 0
      %s115 = sadd.s32 %s114, 1
      %s116 = scalar_select %p113, %s114, %s115
      %p119 = pneg %p113
      %p120 = scmp.eq.s32.totalorder %s12, 3
      %p121 = por %p119, %p120
      %p122 = scmp.ne.s32.totalorder %s114, %s117
      %p123 = scmp.eq.s32.totalorder %s12, 0
      %p124 = por %p122, %p123
      %p125 = scmp.ne.s32.totalorder %s114, %s117
      %p126 = scmp.eq.s32.totalorder %s17, 3
      %p127 = por %p125, %p126
      %p128 = scmp.ne.s32.totalorder %s117, %s118
      %p129 = scmp.eq.s32.totalorder %s17, 0
      %p130 = por %p128, %p129
      %p131 = scmp.ne.s32.totalorder %s117, %s118
      %p132 = scmp.eq.s32.totalorder %s18, 3
      %p133 = por %p131, %p132
      %p135 = scmp.ne.s32.totalorder %s118, %s134
      %p136 = scmp.eq.s32.totalorder %s18, 0
      %p137 = por %p135, %p136
      %p138 = scmp.le.s32.totalorder 1, %s12
      %p139 = scmp.lt.s32.totalorder %s12, 5
      %p140 = pnand %p138, %p139
      %p141 = pneg %p140
      // Predicated region
      $region9: #{lstm_model_forward.3} parent=5 // pred_check
        _
      $region10: #{lstm_model_forward.3} parent=5 // pred_check_branch
        %143 = sbr.rel (%p140) target = $region12
      $region11: #{lstm_model_forward.3} parent=5 // pred_region
        %s144 = ssub.s32 %s12, 1
        // Predicated region
        $region13: #{lstm_model_forward.3} parent=11 // pred_check
          %p145 = pneg %p50
        $region14: #{lstm_model_forward.3} parent=11 // pred_check_branch
          %147 = sbr.rel (%p145) target = $region16
        $region15: #{lstm_model_forward.3} parent=11 // pred_region
          %s148 = smul.u32 8, %s22
          %p149 = scmp.lt.s32.totalorder %s148, 7
          %s150 = scalar_select %p149, %s148, 7
          %s151 = smul.addr %s150, 4
          %s152 = scalar_lea.vmem %s0, %s151
          %s153 = smul.u32 8, %s22
        $region16: #{lstm_model_forward.3} parent=11 // pred_fallthru
          _
      $region12: #{lstm_model_forward.3} parent=5 // pred_fallthru
        _
      %p154 = scmp.lt.s32.totalorder %s12, 4
      // Predicated region
      $region17: #{lstm_model_forward.3} parent=5 // pred_check
        %p155 = pneg %p154
      $region18: #{lstm_model_forward.3} parent=5 // pred_check_branch
        %157 = sbr.rel (%p155) target = $region20
      $region19: #{lstm_model_forward.3} parent=5 // pred_region
        // Predicated region
        $region21: #{lstm_model_forward.3} parent=19 // pred_check
          %p158 = pneg %p70
        $region22: #{lstm_model_forward.3} parent=19 // pred_check_branch
          %160 = sbr.rel (%p158) target = $region24
        $region23: #{lstm_model_forward.3} parent=19 // pred_region
          %s161 = sand.u32 %s60, 1
          %s162 = scalar_lea.sflag [#allocation3], %s161
          %s163 = sand.u32 %s60, 1
          %s164 = smul.addr %s163, 256
          %s165 = scalar_lea.vmem [#allocation2], %s164
          %s166 = smul.u32 4, %s19
          %168 = vsyncadd %s162, 0
          %s169 = smul.addr %s166, 4
          %s170 = scalar_lea.hbm %s1, %s169
          %s171 = sshll.u32 %s170, 4
          %s172 = int_to_ptr.hbm [resolvable:$true] %s171
          %s173 = sshll.u32 %s165, 4
          %s174 = int_to_ptr.vmem [resolvable:$true] %s173
          %179 = dma.hbm_to_vmem [thread:$0]  %s172, 4096, %s174, %s162, 1024, 256, 16
        $region24: #{lstm_model_forward.3} parent=19 // pred_fallthru
          _
        // Predicated region
        $region25: #{lstm_model_forward.3} parent=19 // pred_check
          %p180 = pneg %p96
        $region26: #{lstm_model_forward.3} parent=19 // pred_check_branch
          %182 = sbr.rel (%p180) target = $region28
        $region27: #{lstm_model_forward.3} parent=19 // pred_region
          %s183 = smul.u32 4, %s19
          %p184 = scmp.lt.s32.totalorder %s183, 15
          %s185 = scalar_select %p184, %s183, 15
          %s186 = scalar_lea.vmem %s2, %s185
          %s187 = smul.u32 4, %s19
        $region28: #{lstm_model_forward.3} parent=19 // pred_fallthru
          _
      $region20: #{lstm_model_forward.3} parent=5 // pred_fallthru
        _
      %p188 = scmp.le.s32.totalorder 1, %s12
      %p189 = scmp.lt.s32.totalorder %s12, 5
      %p190 = pnand %p188, %p189
      %p191 = pneg %p190
      // Predicated region
      $region29: #{lstm_model_forward.3} parent=5 // pred_check
        _
      $region30: #{lstm_model_forward.3} parent=5 // pred_check_branch
        %193 = sbr.rel (%p190) target = $region32
      $region31: #{lstm_model_forward.3} parent=5 // pred_region
        %s194 = ssub.s32 %s12, 1
        %s195 = sand.u32 %s63, 1
        %s196 = scalar_lea.sflag [#allocation3], %s195
        %s197 = sand.u32 %s63, 1
        %s198 = smul.addr %s197, 256
        %s199 = scalar_lea.vmem [#allocation2], %s198
        // Predicated region
        $region33: #{lstm_model_forward.3} parent=31 // pred_check
          %p200 = pneg %p76
        $region34: #{lstm_model_forward.3} parent=31 // pred_check_branch
          %202 = sbr.rel (%p200) target = $region36
        $region35: #{lstm_model_forward.3} parent=31 // pred_region
          %204 = dma.done %s196, 4096
        $region36: #{lstm_model_forward.3} parent=31 // pred_fallthru
          _
        %s205 = smul.u32 8, %s22
        %p206 = scmp.lt.s32.totalorder %s205, 7
        %s207 = scalar_select %p206, %s205, 7
        %s208 = smul.addr %s207, 4
        %s209 = scalar_lea.vmem %s0, %s208
        %p210 = pneg %p50
        %p211 = pneg %p47
        %s212 = sand.u32 %s63, 1
        %s213 = scalar_lea.sflag [#allocation3], %s212
        %s214 = sand.u32 %s63, 1
        %s215 = smul.addr %s214, 256
        %s216 = scalar_lea.vmem [#allocation2], %s215
        %p217 = pneg %p76
        %p218 = pneg %p73
        %s219 = smul.u32 4, %s21
        %p220 = scmp.lt.s32.totalorder %s219, 15
        %s221 = scalar_select %p220, %s219, 15
        %s222 = scalar_lea.vmem %s2, %s221
        %p223 = pneg %p102
        %p224 = pneg %p99
        %p225 = pneg %p130
        %p226 = pneg %p127
        %s227 = sand.u32 %s117, 1
        %s228 = sand.u32 %s117, 1
        %s229 = smul.addr %s228, 256
        %s230 = scalar_lea.vmem [#allocation4], %s229
        %s231 = smul.u32 8, %s22
        %p232 = scmp.lt.s32.totalorder %s231, 7
        %s233 = scalar_select %p232, %s231, 7
        %s234 = smul.addr %s233, 4
        %s235 = scalar_lea.vmem %s0, %s234
        %s236 = smul.u32 8, %s22
        %s237 = smul.u32 4, %s21
        %s238 = smul.u32 4, %s21
        %p239 = scmp.lt.s32.totalorder %s238, 15
        %s240 = scalar_select %p239, %s238, 15
        %s241 = scalar_lea.vmem %s2, %s240
        %s242 = smul.u32 4, %s21
        %s243 = smul.u32 8, %s22
        %s244 = smul.u32 4, %s21
        %v245 = vld [vmem:[%s235] sm:$0xf]
        %v246 = vld [vmem:[%s235 + $0x4] sm:$0xf]
        %v247 = vld [vmem:[%s235 + $0x8] sm:$0xf]
        %v248 = vld [vmem:[%s235 + $0xc] sm:$0xf]
        %v249 = vld [vmem:[%s235 + $0x10] sm:$0xf]
        %v250 = vld [vmem:[%s235 + $0x14] sm:$0xf]
        %v251 = vld [vmem:[%s235 + $0x18] sm:$0xf]
        %v252 = vld [vmem:[%s235 + $0x1c] sm:$0xf]
        %v253 = vld [vmem:[%s199] sm:$0xff]
        %v254 = vld [vmem:[%s199 + $0x8] sm:$0xff]
        %v255 = vld [vmem:[%s199 + $0x10] sm:$0xff]
        %v256 = vld [vmem:[%s199 + $0x18] sm:$0xff]
        %v257 = vld [vmem:[%s199 + $0x20] sm:$0xff]
        %v258 = vld [vmem:[%s199 + $0x28] sm:$0xff]
        %v259 = vld [vmem:[%s199 + $0x30] sm:$0xff]
        %v260 = vld [vmem:[%s199 + $0x38] sm:$0xff]
        %v261 = vld [vmem:[%s199 + $0x40] sm:$0xff]
        %v262 = vld [vmem:[%s199 + $0x48] sm:$0xff]
        %v263 = vld [vmem:[%s199 + $0x50] sm:$0xff]
        %v264 = vld [vmem:[%s199 + $0x58] sm:$0xff]
        %v265 = vld [vmem:[%s199 + $0x60] sm:$0xff]
        %v266 = vld [vmem:[%s199 + $0x68] sm:$0xff]
        %v267 = vld [vmem:[%s199 + $0x70] sm:$0xff]
        %v268 = vld [vmem:[%s199 + $0x78] sm:$0xff]
        %v269 = vld [vmem:[%s199 + $0x80] sm:$0xff]
        %v270 = vld [vmem:[%s199 + $0x88] sm:$0xff]
        %v271 = vld [vmem:[%s199 + $0x90] sm:$0xff]
        %v272 = vld [vmem:[%s199 + $0x98] sm:$0xff]
        %v273 = vld [vmem:[%s199 + $0xa0] sm:$0xff]
        %v274 = vld [vmem:[%s199 + $0xa8] sm:$0xff]
        %v275 = vld [vmem:[%s199 + $0xb0] sm:$0xff]
        %v276 = vld [vmem:[%s199 + $0xb8] sm:$0xff]
        %v277 = vld [vmem:[%s199 + $0xc0] sm:$0xff]
        %v278 = vld [vmem:[%s199 + $0xc8] sm:$0xff]
        %v279 = vld [vmem:[%s199 + $0xd0] sm:$0xff]
        %v280 = vld [vmem:[%s199 + $0xd8] sm:$0xff]
        %v281 = vld [vmem:[%s199 + $0xe0] sm:$0xff]
        %v282 = vld [vmem:[%s199 + $0xe8] sm:$0xff]
        %v283 = vld [vmem:[%s199 + $0xf0] sm:$0xff]
        %v284 = vld [vmem:[%s199 + $0xf8] sm:$0xff]
        %v285 = vld [vmem:[%s241] sm:$0xf]
        %v287 = vperm.slane %v285, 0
        %v288 = vperm.slane %v285, 1
        %v289 = vperm.slane %v285, 2
        %v290 = vperm.slane %v285, 3
        %v303 = vunpack.c.l.b16 %v245
        %v304 = vunpack.c.l.b16 %v246
        %v305 = vunpack.c.l.b16 %v247
        %v306 = vunpack.c.l.b16 %v248
        %v307 = vunpack.c.l.b16 %v249
        %v308 = vunpack.c.l.b16 %v250
        %v309 = vunpack.c.l.b16 %v251
        %v310 = vunpack.c.l.b16 %v252
        %v311 = vpack.c.b16 %v304, %v303
        %v312 = vpack.c.b16 %v306, %v305
        %v313 = vpack.c.b16 %v308, %v307
        %v314 = vpack.c.b16 %v310, %v309
        %v351 = vunpack.c.l.b16 %v253
        %v352 = vunpack.c.h.b16 %v253
        %v353 = vunpack.c.l.b16 %v254
        %v354 = vunpack.c.h.b16 %v254
        %v355 = vunpack.c.l.b16 %v255
        %v356 = vunpack.c.h.b16 %v255
        %v357 = vunpack.c.l.b16 %v256
        %v358 = vunpack.c.h.b16 %v256
        %v359 = vunpack.c.l.b16 %v257
        %v360 = vunpack.c.h.b16 %v257
        %v361 = vunpack.c.l.b16 %v258
        %v362 = vunpack.c.h.b16 %v258
        %v363 = vunpack.c.l.b16 %v259
        %v364 = vunpack.c.h.b16 %v259
        %v365 = vunpack.c.l.b16 %v260
        %v366 = vunpack.c.h.b16 %v260
        %v367 = vunpack.c.l.b16 %v261
        %v368 = vunpack.c.h.b16 %v261
        %v369 = vunpack.c.l.b16 %v262
        %v370 = vunpack.c.h.b16 %v262
        %v371 = vunpack.c.l.b16 %v263
        %v372 = vunpack.c.h.b16 %v263
        %v373 = vunpack.c.l.b16 %v264
        %v374 = vunpack.c.h.b16 %v264
        %v375 = vunpack.c.l.b16 %v265
        %v376 = vunpack.c.h.b16 %v265
        %v377 = vunpack.c.l.b16 %v266
        %v378 = vunpack.c.h.b16 %v266
        %v379 = vunpack.c.l.b16 %v267
        %v380 = vunpack.c.h.b16 %v267
        %v381 = vunpack.c.l.b16 %v268
        %v382 = vunpack.c.h.b16 %v268
        %v383 = vunpack.c.l.b16 %v269
        %v384 = vunpack.c.h.b16 %v269
        %v385 = vunpack.c.l.b16 %v270
        %v386 = vunpack.c.h.b16 %v270
        %v387 = vunpack.c.l.b16 %v271
        %v388 = vunpack.c.h.b16 %v271
        %v389 = vunpack.c.l.b16 %v272
        %v390 = vunpack.c.h.b16 %v272
        %v391 = vunpack.c.l.b16 %v273
        %v392 = vunpack.c.h.b16 %v273
        %v393 = vunpack.c.l.b16 %v274
        %v394 = vunpack.c.h.b16 %v274
        %v395 = vunpack.c.l.b16 %v275
        %v396 = vunpack.c.h.b16 %v275
        %v397 = vunpack.c.l.b16 %v276
        %v398 = vunpack.c.h.b16 %v276
        %v399 = vunpack.c.l.b16 %v277
        %v400 = vunpack.c.h.b16 %v277
        %v401 = vunpack.c.l.b16 %v278
        %v402 = vunpack.c.h.b16 %v278
        %v403 = vunpack.c.l.b16 %v279
        %v404 = vunpack.c.h.b16 %v279
        %v405 = vunpack.c.l.b16 %v280
        %v406 = vunpack.c.h.b16 %v280
        %v407 = vunpack.c.l.b16 %v281
        %v408 = vunpack.c.h.b16 %v281
        %v409 = vunpack.c.l.b16 %v282
        %v410 = vunpack.c.h.b16 %v282
        %v411 = vunpack.c.l.b16 %v283
        %v412 = vunpack.c.h.b16 %v283
        %v413 = vunpack.c.l.b16 %v284
        %v414 = vunpack.c.h.b16 %v284
        %v415 = vpack.c.b16 %v355, %v351
        %v416 = vpack.c.b16 %v356, %v352
        %v417 = vpack.c.b16 %v357, %v353
        %v418 = vpack.c.b16 %v358, %v354
        %v419 = vpack.c.b16 %v363, %v359
        %v420 = vpack.c.b16 %v364, %v360
        %v421 = vpack.c.b16 %v365, %v361
        %v422 = vpack.c.b16 %v366, %v362
        %v423 = vpack.c.b16 %v371, %v367
        %v424 = vpack.c.b16 %v372, %v368
        %v425 = vpack.c.b16 %v373, %v369
        %v426 = vpack.c.b16 %v374, %v370
        %v427 = vpack.c.b16 %v379, %v375
        %v428 = vpack.c.b16 %v380, %v376
        %v429 = vpack.c.b16 %v381, %v377
        %v430 = vpack.c.b16 %v382, %v378
        %v431 = vpack.c.b16 %v387, %v383
        %v432 = vpack.c.b16 %v388, %v384
        %v433 = vpack.c.b16 %v389, %v385
        %v434 = vpack.c.b16 %v390, %v386
        %v435 = vpack.c.b16 %v395, %v391
        %v436 = vpack.c.b16 %v396, %v392
        %v437 = vpack.c.b16 %v397, %v393
        %v438 = vpack.c.b16 %v398, %v394
        %v439 = vpack.c.b16 %v403, %v399
        %v440 = vpack.c.b16 %v404, %v400
        %v441 = vpack.c.b16 %v405, %v401
        %v442 = vpack.c.b16 %v406, %v402
        %v443 = vpack.c.b16 %v411, %v407
        %v444 = vpack.c.b16 %v412, %v408
        %v445 = vpack.c.b16 %v413, %v409
        %v446 = vpack.c.b16 %v414, %v410
        %479 = vmatpush.bf16.msra.mxu0 %v443
        %480 = vmatpush.bf16.msra.mxu0 %v439
        %481 = vmatpush.bf16.msra.mxu0 %v435
        %482 = vmatpush.bf16.msra.mxu0 %v431
        %483 = vmatpush.bf16.msra.mxu0 %v427
        %484 = vmatpush.bf16.msra.mxu0 %v423
        %485 = vmatpush.bf16.msra.mxu0 %v419
        %486 = vmatpush.bf16.msra.mxu0 %v415
        %487 = vmatmul.bf16.gmra.mxu0 %v311
        %v488 = vpop.f32.mrf.mxu0
        %v489 = vadd.f32 %v287, %v488
        %v490 = vpop.f32.mrf.mxu0
        %v491 = vadd.f32 %v287, %v490
        %492 = vmatmul.bf16.gmra.mxu0 %v312
        %v493 = vpop.f32.mrf.mxu0
        %v494 = vadd.f32 %v287, %v493
        %v495 = vpop.f32.mrf.mxu0
        %v496 = vadd.f32 %v287, %v495
        %497 = vmatmul.bf16.gmra.mxu0 %v313
        %v498 = vpop.f32.mrf.mxu0
        %v499 = vadd.f32 %v287, %v498
        %v500 = vpop.f32.mrf.mxu0
        %v501 = vadd.f32 %v287, %v500
        %502 = vmatmul.bf16.gmra.mxu0 %v314
        %v503 = vpop.f32.mrf.mxu0
        %v504 = vadd.f32 %v287, %v503
        %v505 = vpop.f32.mrf.mxu0
        %v506 = vadd.f32 %v287, %v505
        %507 = vdwg.mxu0
        %508 = vmatpush.bf16.msra.mxu0 %v444
        %509 = vmatpush.bf16.msra.mxu0 %v440
        %510 = vmatpush.bf16.msra.mxu0 %v436
        %511 = vmatpush.bf16.msra.mxu0 %v432
        %512 = vmatpush.bf16.msra.mxu0 %v428
        %513 = vmatpush.bf16.msra.mxu0 %v424
        %514 = vmatpush.bf16.msra.mxu0 %v420
        %515 = vmatpush.bf16.msra.mxu0 %v416
        %516 = vmatmul.bf16.gmra.mxu0 %v311
        %v517 = vpop.f32.mrf.mxu0
        %v518 = vadd.f32 %v288, %v517
        %v519 = vpop.f32.mrf.mxu0
        %v520 = vadd.f32 %v288, %v519
        %521 = vmatmul.bf16.gmra.mxu0 %v312
        %v522 = vpop.f32.mrf.mxu0
        %v523 = vadd.f32 %v288, %v522
        %v524 = vpop.f32.mrf.mxu0
        %v525 = vadd.f32 %v288, %v524
        %526 = vmatmul.bf16.gmra.mxu0 %v313
        %v527 = vpop.f32.mrf.mxu0
        %v528 = vadd.f32 %v288, %v527
        %v529 = vpop.f32.mrf.mxu0
        %v530 = vadd.f32 %v288, %v529
        %531 = vmatmul.bf16.gmra.mxu0 %v314
        %v532 = vpop.f32.mrf.mxu0
        %v533 = vadd.f32 %v288, %v532
        %v534 = vpop.f32.mrf.mxu0
        %v535 = vadd.f32 %v288, %v534
        %536 = vdwg.mxu0
        %537 = vmatpush.bf16.msra.mxu0 %v445
        %538 = vmatpush.bf16.msra.mxu0 %v441
        %539 = vmatpush.bf16.msra.mxu0 %v437
        %540 = vmatpush.bf16.msra.mxu0 %v433
        %541 = vmatpush.bf16.msra.mxu0 %v429
        %542 = vmatpush.bf16.msra.mxu0 %v425
        %543 = vmatpush.bf16.msra.mxu0 %v421
        %544 = vmatpush.bf16.msra.mxu0 %v417
        %545 = vmatmul.bf16.gmra.mxu0 %v311
        %v546 = vpop.f32.mrf.mxu0
        %v547 = vadd.f32 %v289, %v546
        %v548 = vpop.f32.mrf.mxu0
        %v549 = vadd.f32 %v289, %v548
        %550 = vmatmul.bf16.gmra.mxu0 %v312
        %v551 = vpop.f32.mrf.mxu0
        %v552 = vadd.f32 %v289, %v551
        %v553 = vpop.f32.mrf.mxu0
        %v554 = vadd.f32 %v289, %v553
        %555 = vmatmul.bf16.gmra.mxu0 %v313
        %v556 = vpop.f32.mrf.mxu0
        %v557 = vadd.f32 %v289, %v556
        %v558 = vpop.f32.mrf.mxu0
        %v559 = vadd.f32 %v289, %v558
        %560 = vmatmul.bf16.gmra.mxu0 %v314
        %v561 = vpop.f32.mrf.mxu0
        %v562 = vadd.f32 %v289, %v561
        %v563 = vpop.f32.mrf.mxu0
        %v564 = vadd.f32 %v289, %v563
        %565 = vdwg.mxu0
        %566 = vmatpush.bf16.msra.mxu0 %v446
        %567 = vmatpush.bf16.msra.mxu0 %v442
        %568 = vmatpush.bf16.msra.mxu0 %v438
        %569 = vmatpush.bf16.msra.mxu0 %v434
        %570 = vmatpush.bf16.msra.mxu0 %v430
        %571 = vmatpush.bf16.msra.mxu0 %v426
        %572 = vmatpush.bf16.msra.mxu0 %v422
        %573 = vmatpush.bf16.msra.mxu0 %v418
        %574 = vmatmul.bf16.gmra.mxu0 %v311
        %v575 = vpop.f32.mrf.mxu0
        %v576 = vadd.f32 %v290, %v575
        %v577 = vpop.f32.mrf.mxu0
        %v578 = vadd.f32 %v290, %v577
        %579 = vmatmul.bf16.gmra.mxu0 %v312
        %v580 = vpop.f32.mrf.mxu0
        %v581 = vadd.f32 %v290, %v580
        %v582 = vpop.f32.mrf.mxu0
        %v583 = vadd.f32 %v290, %v582
        %584 = vmatmul.bf16.gmra.mxu0 %v313
        %v585 = vpop.f32.mrf.mxu0
        %v586 = vadd.f32 %v290, %v585
        %v587 = vpop.f32.mrf.mxu0
        %v588 = vadd.f32 %v290, %v587
        %589 = vmatmul.bf16.gmra.mxu0 %v314
        %v590 = vpop.f32.mrf.mxu0
        %v591 = vadd.f32 %v290, %v590
        %v592 = vpop.f32.mrf.mxu0
        %v593 = vadd.f32 %v290, %v592
        %594 = vdwg.mxu0
        %595 = vst [vmem:[%s230] sm:$0xff] %v489
        %596 = vst [vmem:[%s230 + $0x8] sm:$0xff] %v518
        %597 = vst [vmem:[%s230 + $0x10] sm:$0xff] %v547
        %598 = vst [vmem:[%s230 + $0x18] sm:$0xff] %v576
        %599 = vst [vmem:[%s230 + $0x20] sm:$0xff] %v491
        %600 = vst [vmem:[%s230 + $0x28] sm:$0xff] %v520
        %601 = vst [vmem:[%s230 + $0x30] sm:$0xff] %v549
        %602 = vst [vmem:[%s230 + $0x38] sm:$0xff] %v578
        %603 = vst [vmem:[%s230 + $0x40] sm:$0xff] %v494
        %604 = vst [vmem:[%s230 + $0x48] sm:$0xff] %v523
        %605 = vst [vmem:[%s230 + $0x50] sm:$0xff] %v552
        %606 = vst [vmem:[%s230 + $0x58] sm:$0xff] %v581
        %607 = vst [vmem:[%s230 + $0x60] sm:$0xff] %v496
        %608 = vst [vmem:[%s230 + $0x68] sm:$0xff] %v525
        %609 = vst [vmem:[%s230 + $0x70] sm:$0xff] %v554
        %610 = vst [vmem:[%s230 + $0x78] sm:$0xff] %v583
        %611 = vst [vmem:[%s230 + $0x80] sm:$0xff] %v499
        %612 = vst [vmem:[%s230 + $0x88] sm:$0xff] %v528
        %613 = vst [vmem:[%s230 + $0x90] sm:$0xff] %v557
        %614 = vst [vmem:[%s230 + $0x98] sm:$0xff] %v586
        %615 = vst [vmem:[%s230 + $0xa0] sm:$0xff] %v501
        %616 = vst [vmem:[%s230 + $0xa8] sm:$0xff] %v530
        %617 = vst [vmem:[%s230 + $0xb0] sm:$0xff] %v559
        %618 = vst [vmem:[%s230 + $0xb8] sm:$0xff] %v588
        %619 = vst [vmem:[%s230 + $0xc0] sm:$0xff] %v504
        %620 = vst [vmem:[%s230 + $0xc8] sm:$0xff] %v533
        %621 = vst [vmem:[%s230 + $0xd0] sm:$0xff] %v562
        %622 = vst [vmem:[%s230 + $0xd8] sm:$0xff] %v591
        %623 = vst [vmem:[%s230 + $0xe0] sm:$0xff] %v506
        %624 = vst [vmem:[%s230 + $0xe8] sm:$0xff] %v535
        %625 = vst [vmem:[%s230 + $0xf0] sm:$0xff] %v564
        %626 = vst [vmem:[%s230 + $0xf8] sm:$0xff] %v593
        %s627 = sand.u32 %s117, 1
        %s628 = sand.u32 %s117, 1
        %s629 = smul.addr %s628, 256
        %s630 = scalar_lea.vmem [#allocation4], %s629
        // Predicated region
        $region37: #{lstm_model_forward.3} parent=31 // pred_check
          %p631 = pneg %p127
        $region38: #{lstm_model_forward.3} parent=31 // pred_check_branch
          %633 = sbr.rel (%p631) target = $region40
        $region39: #{lstm_model_forward.3} parent=31 // pred_region
          %s634 = smul.u32 8, %s22
          %s635 = smul.u32 4, %s21
          %s636 = smul.addr %s634, 16
          %s637 = sadd.s32 %s635, %s636
          %s638 = smul.addr %s637, 8
          %s639 = scalar_lea.vmem %s3, %s638
          // Predicated region
          $region41: #{lstm_model_forward.3} parent=39 // pred_check
            _
          $region42: #{lstm_model_forward.3} parent=39 // pred_check_branch
            %641 = sbr.rel (0) target = $region44
          $region43: #{lstm_model_forward.3} parent=39 // pred_region
            // Predicated region
            $region45: #{lstm_model_forward.3} parent=43 // pred_check
              _
            $region46: #{lstm_model_forward.3} parent=43 // pred_check_branch
              %643 = sbr.rel (0) target = $region48
            $region47: #{lstm_model_forward.3} parent=43 // pred_region
              loop: start=0, step=1, limit=1
              $region49: #{lstm_model_forward.3} parent=47 // loop_pre_header
                _
              $region50: #{lstm_model_forward.3} parent=47 // loop_header
                %s645 = sphi 0, %s649
                %p646 = scmp.ge.s32.totalorder %s645, 1
                %s650 = sphi %s630, %s630
                %s651 = sphi %s639, %s639
              $region51: #{lstm_model_forward.3} parent=47 // loop_header_branch
                %648 = sbr.rel (%p646) target = $region55
              $region52: #{lstm_model_forward.3} parent=47 // loop_body
                %v652 = vld [vmem:[%s650] sm:$0xff]
                %653 = vst [vmem:[%s651] sm:$0xff] %v652
                %v654 = vld [vmem:[%s650 + $0x8] sm:$0xff]
                %655 = vst [vmem:[%s651 + $0x8] sm:$0xff] %v654
                %v656 = vld [vmem:[%s650 + $0x10] sm:$0xff]
                %657 = vst [vmem:[%s651 + $0x10] sm:$0xff] %v656
                %v658 = vld [vmem:[%s650 + $0x18] sm:$0xff]
                %659 = vst [vmem:[%s651 + $0x18] sm:$0xff] %v658
                %v660 = vld [vmem:[%s650 + $0x20] sm:$0xff]
                %661 = vst [vmem:[%s651 + $0x80] sm:$0xff] %v660
                %v662 = vld [vmem:[%s650 + $0x28] sm:$0xff]
                %663 = vst [vmem:[%s651 + $0x88] sm:$0xff] %v662
                %v664 = vld [vmem:[%s650 + $0x30] sm:$0xff]
                %665 = vst [vmem:[%s651 + $0x90] sm:$0xff] %v664
                %v666 = vld [vmem:[%s650 + $0x38] sm:$0xff]
                %667 = vst [vmem:[%s651 + $0x98] sm:$0xff] %v666
                %v668 = vld [vmem:[%s650 + $0x40] sm:$0xff]
                %669 = vst [vmem:[%s651 + $0x100] sm:$0xff] %v668
                %v670 = vld [vmem:[%s650 + $0x48] sm:$0xff]
                %671 = vst [vmem:[%s651 + $0x108] sm:$0xff] %v670
                %v672 = vld [vmem:[%s650 + $0x50] sm:$0xff]
                %673 = vst [vmem:[%s651 + $0x110] sm:$0xff] %v672
                %v674 = vld [vmem:[%s650 + $0x58] sm:$0xff]
                %675 = vst [vmem:[%s651 + $0x118] sm:$0xff] %v674
                %v676 = vld [vmem:[%s650 + $0x60] sm:$0xff]
                %677 = vst [vmem:[%s651 + $0x180] sm:$0xff] %v676
                %v678 = vld [vmem:[%s650 + $0x68] sm:$0xff]
                %679 = vst [vmem:[%s651 + $0x188] sm:$0xff] %v678
                %v680 = vld [vmem:[%s650 + $0x70] sm:$0xff]
                %681 = vst [vmem:[%s651 + $0x190] sm:$0xff] %v680
                %v682 = vld [vmem:[%s650 + $0x78] sm:$0xff]
                %683 = vst [vmem:[%s651 + $0x198] sm:$0xff] %v682
                %v684 = vld [vmem:[%s650 + $0x80] sm:$0xff]
                %685 = vst [vmem:[%s651 + $0x200] sm:$0xff] %v684
                %v686 = vld [vmem:[%s650 + $0x88] sm:$0xff]
                %687 = vst [vmem:[%s651 + $0x208] sm:$0xff] %v686
                %v688 = vld [vmem:[%s650 + $0x90] sm:$0xff]
                %689 = vst [vmem:[%s651 + $0x210] sm:$0xff] %v688
                %v690 = vld [vmem:[%s650 + $0x98] sm:$0xff]
                %691 = vst [vmem:[%s651 + $0x218] sm:$0xff] %v690
                %v692 = vld [vmem:[%s650 + $0xa0] sm:$0xff]
                %693 = vst [vmem:[%s651 + $0x280] sm:$0xff] %v692
                %v694 = vld [vmem:[%s650 + $0xa8] sm:$0xff]
                %695 = vst [vmem:[%s651 + $0x288] sm:$0xff] %v694
                %v696 = vld [vmem:[%s650 + $0xb0] sm:$0xff]
                %697 = vst [vmem:[%s651 + $0x290] sm:$0xff] %v696
                %v698 = vld [vmem:[%s650 + $0xb8] sm:$0xff]
                %699 = vst [vmem:[%s651 + $0x298] sm:$0xff] %v698
                %v700 = vld [vmem:[%s650 + $0xc0] sm:$0xff]
                %701 = vst [vmem:[%s651 + $0x300] sm:$0xff] %v700
                %v702 = vld [vmem:[%s650 + $0xc8] sm:$0xff]
                %703 = vst [vmem:[%s651 + $0x308] sm:$0xff] %v702
                %v704 = vld [vmem:[%s650 + $0xd0] sm:$0xff]
                %705 = vst [vmem:[%s651 + $0x310] sm:$0xff] %v704
                %v706 = vld [vmem:[%s650 + $0xd8] sm:$0xff]
                %707 = vst [vmem:[%s651 + $0x318] sm:$0xff] %v706
                %v708 = vld [vmem:[%s650 + $0xe0] sm:$0xff]
                %709 = vst [vmem:[%s651 + $0x380] sm:$0xff] %v708
                %v710 = vld [vmem:[%s650 + $0xe8] sm:$0xff]
                %711 = vst [vmem:[%s651 + $0x388] sm:$0xff] %v710
                %v712 = vld [vmem:[%s650 + $0xf0] sm:$0xff]
                %713 = vst [vmem:[%s651 + $0x390] sm:$0xff] %v712
                %v714 = vld [vmem:[%s650 + $0xf8] sm:$0xff]
                %715 = vst [vmem:[%s651 + $0x398] sm:$0xff] %v714
              $region53: #{lstm_model_forward.3} parent=47 // loop_footer
                %s649 = sadd.s32 1, %s645
              $region54: #{lstm_model_forward.3} parent=47 // loop_footer_branch
                %644 = sbr.rel target = $region50
              $region55: #{lstm_model_forward.3} parent=47 // loop_exit
                _
            $region48: #{lstm_model_forward.3} parent=43 // pred_fallthru
              _
            // Predicated region
            $region56: #{lstm_model_forward.3} parent=43 // pred_check
              _
            $region57: #{lstm_model_forward.3} parent=43 // pred_check_branch
              %717 = sbr.rel target = $region59
            $region58: #{lstm_model_forward.3} parent=43 // pred_region
              _
            $region59: #{lstm_model_forward.3} parent=43 // pred_fallthru
              _
          $region44: #{lstm_model_forward.3} parent=39 // pred_fallthru
            _
          %718 = vnop
        $region40: #{lstm_model_forward.3} parent=31 // pred_fallthru
          _
      $region32: #{lstm_model_forward.3} parent=5 // pred_fallthru
        _
      %p719 = scmp.le.s32.totalorder 2, %s12
      // Predicated region
      $region60: #{lstm_model_forward.3} parent=5 // pred_check
        %p720 = pneg %p719
      $region61: #{lstm_model_forward.3} parent=5 // pred_check_branch
        %722 = sbr.rel (%p720) target = $region63
      $region62: #{lstm_model_forward.3} parent=5 // pred_region
        %s723 = ssub.s32 %s12, 2
        // Predicated region
        $region64: #{lstm_model_forward.3} parent=62 // pred_check
          %p724 = pneg %p133
        $region65: #{lstm_model_forward.3} parent=62 // pred_check_branch
          %726 = sbr.rel (%p724) target = $region67
        $region66: #{lstm_model_forward.3} parent=62 // pred_region
          %s727 = sand.u32 %s118, 1
          %s728 = sand.u32 %s118, 1
          %s729 = smul.addr %s728, 256
          %s730 = scalar_lea.vmem [#allocation4], %s729
        $region67: #{lstm_model_forward.3} parent=62 // pred_fallthru
          _
      $region63: #{lstm_model_forward.3} parent=5 // pred_fallthru
        _
    $region6: #{lstm_model_forward.3} parent=1 // loop_footer
      %s16 = sadd.s32 1, %s12
    $region7: #{lstm_model_forward.3} parent=1 // loop_footer_branch
      %11 = sbr.rel target = $region3
    $region8: #{lstm_model_forward.3} parent=1 // loop_exit
      _
    %731 = vsyncpa [#allocation3], 1
    %s732 = scalar_lea.sflag [#allocation3], 1
    %733 = vsyncpa %s732, 1

// kernel: lstm_model_forward.2
$region0: #{lstm_model_forward.2}
  #allocation0 [shape = 'u32[]', space=smem, size = 0x4, offset = 0x4, fixed_abs, tag = 'smem constant byte address 0x4 - core index']
  #allocation1 [shape = 'u32[72,128]{1,0:T(1,128)}', space=vmem, size = 0x9000, scoped, tag = 'internal scratch']
  #allocation2 [shape = 'f32[8,8,512]{2,1,0:T(8,128)}', space=vmem, size = 0x20000, scoped, tag = 'scratch operand']
  #allocation3 [shape = 'f32[8,8,512]{2,1,0:T(8,128)}', space=vmem, size = 0x20000, scoped, tag = 'scratch operand']
  %s0 = inlined_call_operand.vmem [shape: bf16[64,128], index: 0, kind: input, shape index: {}]
  %s1 = inlined_call_operand.vmem [shape: bf16[64,128], index: 1, kind: input, shape index: {}]
  %s2 = inlined_call_operand.vmem [shape: bf16[128,512], index: 2, kind: input, shape index: {}]
  %s3 = inlined_call_operand.vmem [shape: bf16[128,512], index: 3, kind: input, shape index: {}]
  %s4 = inlined_call_operand.vmem [shape: f32[1,512], index: 4, kind: input, shape index: {}]
  %s5 = inlined_call_operand.hbm [shape: bf16[128,512], index: 5, kind: input, shape index: {}]
  %s6 = inlined_call_operand.hbm [shape: bf16[128,512], index: 6, kind: input, shape index: {}]
  %s7 = inlined_call_operand.vmem [shape: f32[1,512], index: 7, kind: input, shape index: {}]
  %s8 = inlined_call_operand.vmem [shape: f32[8,8,128], index: 8, kind: output, shape index: {0}]
  %s9 = inlined_call_operand.hbm [shape: f32[8,128], index: 9, kind: output, shape index: {1}]
  %s10 = inlined_call_operand.hbm [shape: f32[8,128], index: 10, kind: output, shape index: {2}]
  %11 = xla_tuple %s8, %s9, %s10
  %s12 = sld [smem:[#allocation0]]
  $region66: #{lstm_model_forward.2} parent=0
    _
  %s14 = ssub.s32 1, %s12
  %s15 = scalar_select 0, %s14, %s12
  $region1: #{lstm_model_forward.2} parent=0
    #allocation4 [shape = 'u8[131072]{0}', space=vmem, size = 0x20000, scoped, tag = 'input window, operand 5, single buffered']
    #allocation5 [shape = 's32[1]{0}', space=sflag, size = 0x4, scoped, tag = 'scoped memory for lstm_model_forward.2']
    #allocation6 [shape = 's32[1]{0}', space=sflag, size = 0x4, scoped, tag = 'scoped memory for lstm_model_forward.2']
    #allocation7 [shape = 'u8[131072]{0}', space=vmem, size = 0x20000, scoped, tag = 'input window, operand 6, single buffered']
    #allocation8 [shape = 's32[1]{0}', space=sflag, size = 0x4, scoped, tag = 'scoped memory for lstm_model_forward.2']
    #allocation9 [shape = 'u8[4096]{0}', space=vmem, size = 0x1000, scoped, tag = 'output window, operand 1, single buffered']
    #allocation10 [shape = 'u8[4096]{0}', space=vmem, size = 0x1000, scoped, tag = 'output window, operand 2, single buffered']
    #allocation11 [shape = 's32[1]{0}', space=sflag, size = 0x4, scoped, tag = 'scoped memory for lstm_model_forward.2']
    %16 = vsyncpa [#allocation5], 0
    %17 = vsyncpa [#allocation8], 0
    %18 = vsyncpa [#allocation6], 0
    %19 = vsyncpa [#allocation11], 0
    // Predicated region
    $region2: #{lstm_model_forward.2} parent=1 // pred_check
      _
    $region3: #{lstm_model_forward.2} parent=1 // pred_check_branch
      %21 = sbr.rel (0) target = $region5
    $region4: #{lstm_model_forward.2} parent=1 // pred_region
      _
    $region5: #{lstm_model_forward.2} parent=1 // pred_fallthru
      _
    // Predicated region
    $region6: #{lstm_model_forward.2} parent=1 // pred_check
      _
    $region7: #{lstm_model_forward.2} parent=1 // pred_check_branch
      %23 = sbr.rel (0) target = $region9
    $region8: #{lstm_model_forward.2} parent=1 // pred_region
      _
    $region9: #{lstm_model_forward.2} parent=1 // pred_fallthru
      _
    // Predicated region
    $region10: #{lstm_model_forward.2} parent=1 // pred_check
      _
    $region11: #{lstm_model_forward.2} parent=1 // pred_check_branch
      %25 = sbr.rel (0) target = $region13
    $region12: #{lstm_model_forward.2} parent=1 // pred_region
      _
    $region13: #{lstm_model_forward.2} parent=1 // pred_fallthru
      _
    // Predicated region
    $region14: #{lstm_model_forward.2} parent=1 // pred_check
      _
    $region15: #{lstm_model_forward.2} parent=1 // pred_check_branch
      %27 = sbr.rel (0) target = $region17
    $region16: #{lstm_model_forward.2} parent=1 // pred_region
      _
    $region17: #{lstm_model_forward.2} parent=1 // pred_fallthru
      _
    // Predicated region
    $region18: #{lstm_model_forward.2} parent=1 // pred_check
      _
    $region19: #{lstm_model_forward.2} parent=1 // pred_check_branch
      %29 = sbr.rel (0) target = $region21
    $region20: #{lstm_model_forward.2} parent=1 // pred_region
      _
    $region21: #{lstm_model_forward.2} parent=1 // pred_fallthru
      _
    // Predicated region
    $region22: #{lstm_model_forward.2} parent=1 // pred_check
      _
    $region23: #{lstm_model_forward.2} parent=1 // pred_check_branch
      %31 = sbr.rel (0) target = $region25
    $region24: #{lstm_model_forward.2} parent=1 // pred_region
      %33 = vsyncadd [#allocation5], 0
      %s34 = sshll.u32 %s5, 4
      %s35 = int_to_ptr.hbm [resolvable:$true] %s34
      %s36 = sshll.u32 [#allocation4], 4
      %s37 = int_to_ptr.vmem [resolvable:$true] %s36
      %42 = dma.hbm_to_vmem [thread:$0]  %s35, 4096, %s37, [#allocation5], 256, 256, 16
    $region25: #{lstm_model_forward.2} parent=1 // pred_fallthru
      _
    // Predicated region
    $region26: #{lstm_model_forward.2} parent=1 // pred_check
      _
    $region27: #{lstm_model_forward.2} parent=1 // pred_check_branch
      %44 = sbr.rel (0) target = $region29
    $region28: #{lstm_model_forward.2} parent=1 // pred_region
      %46 = vsyncadd [#allocation8], 0
      %s47 = sshll.u32 %s6, 4
      %s48 = int_to_ptr.hbm [resolvable:$true] %s47
      %s49 = sshll.u32 [#allocation7], 4
      %s50 = int_to_ptr.vmem [resolvable:$true] %s49
      %55 = dma.hbm_to_vmem [thread:$0]  %s48, 4096, %s50, [#allocation8], 256, 256, 16
    $region29: #{lstm_model_forward.2} parent=1 // pred_fallthru
      _
    // Predicated region
    $region30: #{lstm_model_forward.2} parent=1 // pred_check
      _
    $region31: #{lstm_model_forward.2} parent=1 // pred_check_branch
      %57 = sbr.rel (0) target = $region33
    $region32: #{lstm_model_forward.2} parent=1 // pred_region
      _
    $region33: #{lstm_model_forward.2} parent=1 // pred_fallthru
      _
    // Predicated region
    $region34: #{lstm_model_forward.2} parent=1 // pred_check
      _
    $region35: #{lstm_model_forward.2} parent=1 // pred_check_branch
      %59 = sbr.rel (0) target = $region37
    $region36: #{lstm_model_forward.2} parent=1 // pred_region
      %61 = dma.done [#allocation5], 4096
    $region37: #{lstm_model_forward.2} parent=1 // pred_fallthru
      _
    // Predicated region
    $region38: #{lstm_model_forward.2} parent=1 // pred_check
      _
    $region39: #{lstm_model_forward.2} parent=1 // pred_check_branch
      %63 = sbr.rel (0) target = $region41
    $region40: #{lstm_model_forward.2} parent=1 // pred_region
      %65 = dma.done [#allocation8], 4096
    $region41: #{lstm_model_forward.2} parent=1 // pred_fallthru
      _
    %v67 = vld [vmem:[%s0] sm:$0xf]
    %v68 = vld [vmem:[%s0 + $0x4] sm:$0xf]
    %v69 = vld [vmem:[%s0 + $0x8] sm:$0xf]
    %v70 = vld [vmem:[%s0 + $0xc] sm:$0xf]
    %v71 = vld [vmem:[%s0 + $0x10] sm:$0xf]
    %v72 = vld [vmem:[%s0 + $0x14] sm:$0xf]
    %v73 = vld [vmem:[%s0 + $0x18] sm:$0xf]
    %v74 = vld [vmem:[%s0 + $0x1c] sm:$0xf]
    %v75 = vld [vmem:[%s2] sm:$0xff]
    %v76 = vld [vmem:[%s2 + $0x8] sm:$0xff]
    %v77 = vld [vmem:[%s2 + $0x10] sm:$0xff]
    %v78 = vld [vmem:[%s2 + $0x18] sm:$0xff]
    %v79 = vld [vmem:[%s2 + $0x20] sm:$0xff]
    %v80 = vld [vmem:[%s2 + $0x28] sm:$0xff]
    %v81 = vld [vmem:[%s2 + $0x30] sm:$0xff]
    %v82 = vld [vmem:[%s2 + $0x38] sm:$0xff]
    %v83 = vld [vmem:[%s2 + $0x40] sm:$0xff]
    %v84 = vld [vmem:[%s2 + $0x48] sm:$0xff]
    %v85 = vld [vmem:[%s2 + $0x50] sm:$0xff]
    %v86 = vld [vmem:[%s2 + $0x58] sm:$0xff]
    %v87 = vld [vmem:[%s2 + $0x60] sm:$0xff]
    %v88 = vld [vmem:[%s2 + $0x68] sm:$0xff]
    %v89 = vld [vmem:[%s2 + $0x70] sm:$0xff]
    %v90 = vld [vmem:[%s2 + $0x78] sm:$0xff]
    %v91 = vld [vmem:[%s2 + $0x80] sm:$0xff]
    %v92 = vld [vmem:[%s2 + $0x88] sm:$0xff]
    %v93 = vld [vmem:[%s2 + $0x90] sm:$0xff]
    %v94 = vld [vmem:[%s2 + $0x98] sm:$0xff]
    %v95 = vld [vmem:[%s2 + $0xa0] sm:$0xff]
    %v96 = vld [vmem:[%s2 + $0xa8] sm:$0xff]
    %v97 = vld [vmem:[%s2 + $0xb0] sm:$0xff]
    %v98 = vld [vmem:[%s2 + $0xb8] sm:$0xff]
    %v99 = vld [vmem:[%s2 + $0xc0] sm:$0xff]
    %v100 = vld [vmem:[%s2 + $0xc8] sm:$0xff]
    %v101 = vld [vmem:[%s2 + $0xd0] sm:$0xff]
    %v102 = vld [vmem:[%s2 + $0xd8] sm:$0xff]
    %v103 = vld [vmem:[%s2 + $0xe0] sm:$0xff]
    %v104 = vld [vmem:[%s2 + $0xe8] sm:$0xff]
    %v105 = vld [vmem:[%s2 + $0xf0] sm:$0xff]
    %v106 = vld [vmem:[%s2 + $0xf8] sm:$0xff]
    %v107 = vld [vmem:[%s4] sm:$0xf]
    %v109 = vperm.slane %v107, 0
    %v110 = vperm.slane %v107, 1
    %v111 = vperm.slane %v107, 2
    %v112 = vperm.slane %v107, 3
    %v125 = vunpack.c.l.b16 %v67
    %v126 = vunpack.c.l.b16 %v68
    %v127 = vunpack.c.l.b16 %v69
    %v128 = vunpack.c.l.b16 %v70
    %v129 = vunpack.c.l.b16 %v71
    %v130 = vunpack.c.l.b16 %v72
    %v131 = vunpack.c.l.b16 %v73
    %v132 = vunpack.c.l.b16 %v74
    %v133 = vpack.c.b16 %v126, %v125
    %v134 = vpack.c.b16 %v128, %v127
    %v135 = vpack.c.b16 %v130, %v129
    %v136 = vpack.c.b16 %v132, %v131
    %v173 = vunpack.c.l.b16 %v75
    %v174 = vunpack.c.h.b16 %v75
    %v175 = vunpack.c.l.b16 %v76
    %v176 = vunpack.c.h.b16 %v76
    %v177 = vunpack.c.l.b16 %v77
    %v178 = vunpack.c.h.b16 %v77
    %v179 = vunpack.c.l.b16 %v78
    %v180 = vunpack.c.h.b16 %v78
    %v181 = vunpack.c.l.b16 %v79
    %v182 = vunpack.c.h.b16 %v79
    %v183 = vunpack.c.l.b16 %v80
    %v184 = vunpack.c.h.b16 %v80
    %v185 = vunpack.c.l.b16 %v81
    %v186 = vunpack.c.h.b16 %v81
    %v187 = vunpack.c.l.b16 %v82
    %v188 = vunpack.c.h.b16 %v82
    %v189 = vunpack.c.l.b16 %v83
    %v190 = vunpack.c.h.b16 %v83
    %v191 = vunpack.c.l.b16 %v84
    %v192 = vunpack.c.h.b16 %v84
    %v193 = vunpack.c.l.b16 %v85
    %v194 = vunpack.c.h.b16 %v85
    %v195 = vunpack.c.l.b16 %v86
    %v196 = vunpack.c.h.b16 %v86
    %v197 = vunpack.c.l.b16 %v87
    %v198 = vunpack.c.h.b16 %v87
    %v199 = vunpack.c.l.b16 %v88
    %v200 = vunpack.c.h.b16 %v88
    %v201 = vunpack.c.l.b16 %v89
    %v202 = vunpack.c.h.b16 %v89
    %v203 = vunpack.c.l.b16 %v90
    %v204 = vunpack.c.h.b16 %v90
    %v205 = vunpack.c.l.b16 %v91
    %v206 = vunpack.c.h.b16 %v91
    %v207 = vunpack.c.l.b16 %v92
    %v208 = vunpack.c.h.b16 %v92
    %v209 = vunpack.c.l.b16 %v93
    %v210 = vunpack.c.h.b16 %v93
    %v211 = vunpack.c.l.b16 %v94
    %v212 = vunpack.c.h.b16 %v94
    %v213 = vunpack.c.l.b16 %v95
    %v214 = vunpack.c.h.b16 %v95
    %v215 = vunpack.c.l.b16 %v96
    %v216 = vunpack.c.h.b16 %v96
    %v217 = vunpack.c.l.b16 %v97
    %v218 = vunpack.c.h.b16 %v97
    %v219 = vunpack.c.l.b16 %v98
    %v220 = vunpack.c.h.b16 %v98
    %v221 = vunpack.c.l.b16 %v99
    %v222 = vunpack.c.h.b16 %v99
    %v223 = vunpack.c.l.b16 %v100
    %v224 = vunpack.c.h.b16 %v100
    %v225 = vunpack.c.l.b16 %v101
    %v226 = vunpack.c.h.b16 %v101
    %v227 = vunpack.c.l.b16 %v102
    %v228 = vunpack.c.h.b16 %v102
    %v229 = vunpack.c.l.b16 %v103
    %v230 = vunpack.c.h.b16 %v103
    %v231 = vunpack.c.l.b16 %v104
    %v232 = vunpack.c.h.b16 %v104
    %v233 = vunpack.c.l.b16 %v105
    %v234 = vunpack.c.h.b16 %v105
    %v235 = vunpack.c.l.b16 %v106
    %v236 = vunpack.c.h.b16 %v106
    %v237 = vpack.c.b16 %v177, %v173
    %v238 = vpack.c.b16 %v178, %v174
    %v239 = vpack.c.b16 %v179, %v175
    %v240 = vpack.c.b16 %v180, %v176
    %v241 = vpack.c.b16 %v185, %v181
    %v242 = vpack.c.b16 %v186, %v182
    %v243 = vpack.c.b16 %v187, %v183
    %v244 = vpack.c.b16 %v188, %v184
    %v245 = vpack.c.b16 %v193, %v189
    %v246 = vpack.c.b16 %v194, %v190
    %v247 = vpack.c.b16 %v195, %v191
    %v248 = vpack.c.b16 %v196, %v192
    %v249 = vpack.c.b16 %v201, %v197
    %v250 = vpack.c.b16 %v202, %v198
    %v251 = vpack.c.b16 %v203, %v199
    %v252 = vpack.c.b16 %v204, %v200
    %v253 = vpack.c.b16 %v209, %v205
    %v254 = vpack.c.b16 %v210, %v206
    %v255 = vpack.c.b16 %v211, %v207
    %v256 = vpack.c.b16 %v212, %v208
    %v257 = vpack.c.b16 %v217, %v213
    %v258 = vpack.c.b16 %v218, %v214
    %v259 = vpack.c.b16 %v219, %v215
    %v260 = vpack.c.b16 %v220, %v216
    %v261 = vpack.c.b16 %v225, %v221
    %v262 = vpack.c.b16 %v226, %v222
    %v263 = vpack.c.b16 %v227, %v223
    %v264 = vpack.c.b16 %v228, %v224
    %v265 = vpack.c.b16 %v233, %v229
    %v266 = vpack.c.b16 %v234, %v230
    %v267 = vpack.c.b16 %v235, %v231
    %v268 = vpack.c.b16 %v236, %v232
    %301 = vmatpush.bf16.msra.mxu0 %v265
    %302 = vmatpush.bf16.msra.mxu0 %v261
    %303 = vmatpush.bf16.msra.mxu0 %v257
    %304 = vmatpush.bf16.msra.mxu0 %v253
    %305 = vmatpush.bf16.msra.mxu0 %v249
    %306 = vmatpush.bf16.msra.mxu0 %v245
    %307 = vmatpush.bf16.msra.mxu0 %v241
    %308 = vmatpush.bf16.msra.mxu0 %v237
    %309 = vmatmul.bf16.gmra.mxu0 %v133
    %v310 = vpop.f32.mrf.mxu0
    %v311 = vadd.f32 %v109, %v310
    %v312 = vpop.f32.mrf.mxu0
    %v313 = vadd.f32 %v109, %v312
    %314 = vmatmul.bf16.gmra.mxu0 %v134
    %v315 = vpop.f32.mrf.mxu0
    %v316 = vadd.f32 %v109, %v315
    %v317 = vpop.f32.mrf.mxu0
    %v318 = vadd.f32 %v109, %v317
    %319 = vmatmul.bf16.gmra.mxu0 %v135
    %v320 = vpop.f32.mrf.mxu0
    %v321 = vadd.f32 %v109, %v320
    %v322 = vpop.f32.mrf.mxu0
    %v323 = vadd.f32 %v109, %v322
    %324 = vmatmul.bf16.gmra.mxu0 %v136
    %v325 = vpop.f32.mrf.mxu0
    %v326 = vadd.f32 %v109, %v325
    %v327 = vpop.f32.mrf.mxu0
    %v328 = vadd.f32 %v109, %v327
    %329 = vdwg.mxu0
    %330 = vmatpush.bf16.msra.mxu0 %v266
    %331 = vmatpush.bf16.msra.mxu0 %v262
    %332 = vmatpush.bf16.msra.mxu0 %v258
    %333 = vmatpush.bf16.msra.mxu0 %v254
    %334 = vmatpush.bf16.msra.mxu0 %v250
    %335 = vmatpush.bf16.msra.mxu0 %v246
    %336 = vmatpush.bf16.msra.mxu0 %v242
    %337 = vmatpush.bf16.msra.mxu0 %v238
    %338 = vmatmul.bf16.gmra.mxu0 %v133
    %v339 = vpop.f32.mrf.mxu0
    %v340 = vadd.f32 %v110, %v339
    %v341 = vpop.f32.mrf.mxu0
    %v342 = vadd.f32 %v110, %v341
    %343 = vmatmul.bf16.gmra.mxu0 %v134
    %v344 = vpop.f32.mrf.mxu0
    %v345 = vadd.f32 %v110, %v344
    %v346 = vpop.f32.mrf.mxu0
    %v347 = vadd.f32 %v110, %v346
    %348 = vmatmul.bf16.gmra.mxu0 %v135
    %v349 = vpop.f32.mrf.mxu0
    %v350 = vadd.f32 %v110, %v349
    %v351 = vpop.f32.mrf.mxu0
    %v352 = vadd.f32 %v110, %v351
    %353 = vmatmul.bf16.gmra.mxu0 %v136
    %v354 = vpop.f32.mrf.mxu0
    %v355 = vadd.f32 %v110, %v354
    %v356 = vpop.f32.mrf.mxu0
    %v357 = vadd.f32 %v110, %v356
    %358 = vdwg.mxu0
    %359 = vmatpush.bf16.msra.mxu0 %v267
    %360 = vmatpush.bf16.msra.mxu0 %v263
    %361 = vmatpush.bf16.msra.mxu0 %v259
    %362 = vmatpush.bf16.msra.mxu0 %v255
    %363 = vmatpush.bf16.msra.mxu0 %v251
    %364 = vmatpush.bf16.msra.mxu0 %v247
    %365 = vmatpush.bf16.msra.mxu0 %v243
    %366 = vmatpush.bf16.msra.mxu0 %v239
    %367 = vmatmul.bf16.gmra.mxu0 %v133
    %v368 = vpop.f32.mrf.mxu0
    %v369 = vadd.f32 %v111, %v368
    %v370 = vpop.f32.mrf.mxu0
    %v371 = vadd.f32 %v111, %v370
    %372 = vmatmul.bf16.gmra.mxu0 %v134
    %v373 = vpop.f32.mrf.mxu0
    %v374 = vadd.f32 %v111, %v373
    %v375 = vpop.f32.mrf.mxu0
    %v376 = vadd.f32 %v111, %v375
    %377 = vmatmul.bf16.gmra.mxu0 %v135
    %v378 = vpop.f32.mrf.mxu0
    %v379 = vadd.f32 %v111, %v378
    %v380 = vpop.f32.mrf.mxu0
    %v381 = vadd.f32 %v111, %v380
    %382 = vmatmul.bf16.gmra.mxu0 %v136
    %v383 = vpop.f32.mrf.mxu0
    %v384 = vadd.f32 %v111, %v383
    %v385 = vpop.f32.mrf.mxu0
    %v386 = vadd.f32 %v111, %v385
    %387 = vdwg.mxu0
    %388 = vmatpush.bf16.msra.mxu0 %v268
    %389 = vmatpush.bf16.msra.mxu0 %v264
    %390 = vmatpush.bf16.msra.mxu0 %v260
    %391 = vmatpush.bf16.msra.mxu0 %v256
    %392 = vmatpush.bf16.msra.mxu0 %v252
    %393 = vmatpush.bf16.msra.mxu0 %v248
    %394 = vmatpush.bf16.msra.mxu0 %v244
    %395 = vmatpush.bf16.msra.mxu0 %v240
    %396 = vmatmul.bf16.gmra.mxu0 %v133
    %v397 = vpop.f32.mrf.mxu0
    %v398 = vadd.f32 %v112, %v397
    %v399 = vpop.f32.mrf.mxu0
    %v400 = vadd.f32 %v112, %v399
    %401 = vmatmul.bf16.gmra.mxu0 %v134
    %v402 = vpop.f32.mrf.mxu0
    %v403 = vadd.f32 %v112, %v402
    %v404 = vpop.f32.mrf.mxu0
    %v405 = vadd.f32 %v112, %v404
    %406 = vmatmul.bf16.gmra.mxu0 %v135
    %v407 = vpop.f32.mrf.mxu0
    %v408 = vadd.f32 %v112, %v407
    %v409 = vpop.f32.mrf.mxu0
    %v410 = vadd.f32 %v112, %v409
    %411 = vmatmul.bf16.gmra.mxu0 %v136
    %v412 = vpop.f32.mrf.mxu0
    %v413 = vadd.f32 %v112, %v412
    %v414 = vpop.f32.mrf.mxu0
    %v415 = vadd.f32 %v112, %v414
    %416 = vdwg.mxu0
    %417 = vst [vmem:[#allocation2] sm:$0xff] %v311
    %418 = vst [vmem:[#allocation2 + $0x8] sm:$0xff] %v340
    %419 = vst [vmem:[#allocation2 + $0x10] sm:$0xff] %v369
    %420 = vst [vmem:[#allocation2 + $0x18] sm:$0xff] %v398
    %421 = vst [vmem:[#allocation2 + $0x20] sm:$0xff] %v313
    %422 = vst [vmem:[#allocation2 + $0x28] sm:$0xff] %v342
    %423 = vst [vmem:[#allocation2 + $0x30] sm:$0xff] %v371
    %424 = vst [vmem:[#allocation2 + $0x38] sm:$0xff] %v400
    %425 = vst [vmem:[#allocation2 + $0x40] sm:$0xff] %v316
    %426 = vst [vmem:[#allocation2 + $0x48] sm:$0xff] %v345
    %427 = vst [vmem:[#allocation2 + $0x50] sm:$0xff] %v374
    %428 = vst [vmem:[#allocation2 + $0x58] sm:$0xff] %v403
    %429 = vst [vmem:[#allocation2 + $0x60] sm:$0xff] %v318
    %430 = vst [vmem:[#allocation2 + $0x68] sm:$0xff] %v347
    %431 = vst [vmem:[#allocation2 + $0x70] sm:$0xff] %v376
    %432 = vst [vmem:[#allocation2 + $0x78] sm:$0xff] %v405
    %433 = vst [vmem:[#allocation2 + $0x80] sm:$0xff] %v321
    %434 = vst [vmem:[#allocation2 + $0x88] sm:$0xff] %v350
    %435 = vst [vmem:[#allocation2 + $0x90] sm:$0xff] %v379
    %436 = vst [vmem:[#allocation2 + $0x98] sm:$0xff] %v408
    %437 = vst [vmem:[#allocation2 + $0xa0] sm:$0xff] %v323
    %438 = vst [vmem:[#allocation2 + $0xa8] sm:$0xff] %v352
    %439 = vst [vmem:[#allocation2 + $0xb0] sm:$0xff] %v381
    %440 = vst [vmem:[#allocation2 + $0xb8] sm:$0xff] %v410
    %441 = vst [vmem:[#allocation2 + $0xc0] sm:$0xff] %v326
    %442 = vst [vmem:[#allocation2 + $0xc8] sm:$0xff] %v355
    %443 = vst [vmem:[#allocation2 + $0xd0] sm:$0xff] %v384
    %444 = vst [vmem:[#allocation2 + $0xd8] sm:$0xff] %v413
    %445 = vst [vmem:[#allocation2 + $0xe0] sm:$0xff] %v328
    %446 = vst [vmem:[#allocation2 + $0xe8] sm:$0xff] %v357
    %447 = vst [vmem:[#allocation2 + $0xf0] sm:$0xff] %v386
    %448 = vst [vmem:[#allocation2 + $0xf8] sm:$0xff] %v415
    %v449 = vld [vmem:[%s1] sm:$0xf]
    %v450 = vld [vmem:[%s1 + $0x4] sm:$0xf]
    %v451 = vld [vmem:[%s1 + $0x8] sm:$0xf]
    %v452 = vld [vmem:[%s1 + $0xc] sm:$0xf]
    %v453 = vld [vmem:[%s1 + $0x10] sm:$0xf]
    %v454 = vld [vmem:[%s1 + $0x14] sm:$0xf]
    %v455 = vld [vmem:[%s1 + $0x18] sm:$0xf]
    %v456 = vld [vmem:[%s1 + $0x1c] sm:$0xf]
    %v457 = vld [vmem:[#allocation4] sm:$0xff]
    %v458 = vld [vmem:[#allocation4 + $0x8] sm:$0xff]
    %v459 = vld [vmem:[#allocation4 + $0x10] sm:$0xff]
    %v460 = vld [vmem:[#allocation4 + $0x18] sm:$0xff]
    %v461 = vld [vmem:[#allocation4 + $0x20] sm:$0xff]
    %v462 = vld [vmem:[#allocation4 + $0x28] sm:$0xff]
    %v463 = vld [vmem:[#allocation4 + $0x30] sm:$0xff]
    %v464 = vld [vmem:[#allocation4 + $0x38] sm:$0xff]
    %v465 = vld [vmem:[#allocation4 + $0x40] sm:$0xff]
    %v466 = vld [vmem:[#allocation4 + $0x48] sm:$0xff]
    %v467 = vld [vmem:[#allocation4 + $0x50] sm:$0xff]
    %v468 = vld [vmem:[#allocation4 + $0x58] sm:$0xff]
    %v469 = vld [vmem:[#allocation4 + $0x60] sm:$0xff]
    %v470 = vld [vmem:[#allocation4 + $0x68] sm:$0xff]
    %v471 = vld [vmem:[#allocation4 + $0x70] sm:$0xff]
    %v472 = vld [vmem:[#allocation4 + $0x78] sm:$0xff]
    %v473 = vld [vmem:[#allocation4 + $0x80] sm:$0xff]
    %v474 = vld [vmem:[#allocation4 + $0x88] sm:$0xff]
    %v475 = vld [vmem:[#allocation4 + $0x90] sm:$0xff]
    %v476 = vld [vmem:[#allocation4 + $0x98] sm:$0xff]
    %v477 = vld [vmem:[#allocation4 + $0xa0] sm:$0xff]
    %v478 = vld [vmem:[#allocation4 + $0xa8] sm:$0xff]
    %v479 = vld [vmem:[#allocation4 + $0xb0] sm:$0xff]
    %v480 = vld [vmem:[#allocation4 + $0xb8] sm:$0xff]
    %v481 = vld [vmem:[#allocation4 + $0xc0] sm:$0xff]
    %v482 = vld [vmem:[#allocation4 + $0xc8] sm:$0xff]
    %v483 = vld [vmem:[#allocation4 + $0xd0] sm:$0xff]
    %v484 = vld [vmem:[#allocation4 + $0xd8] sm:$0xff]
    %v485 = vld [vmem:[#allocation4 + $0xe0] sm:$0xff]
    %v486 = vld [vmem:[#allocation4 + $0xe8] sm:$0xff]
    %v487 = vld [vmem:[#allocation4 + $0xf0] sm:$0xff]
    %v488 = vld [vmem:[#allocation4 + $0xf8] sm:$0xff]
    %v489 = vld [vmem:[%s7] sm:$0xf]
    %v491 = vperm.slane %v489, 0
    %v492 = vperm.slane %v489, 1
    %v493 = vperm.slane %v489, 2
    %v494 = vperm.slane %v489, 3
    %v507 = vunpack.c.l.b16 %v449
    %v508 = vunpack.c.l.b16 %v450
    %v509 = vunpack.c.l.b16 %v451
    %v510 = vunpack.c.l.b16 %v452
    %v511 = vunpack.c.l.b16 %v453
    %v512 = vunpack.c.l.b16 %v454
    %v513 = vunpack.c.l.b16 %v455
    %v514 = vunpack.c.l.b16 %v456
    %v515 = vpack.c.b16 %v508, %v507
    %v516 = vpack.c.b16 %v510, %v509
    %v517 = vpack.c.b16 %v512, %v511
    %v518 = vpack.c.b16 %v514, %v513
    %v555 = vunpack.c.l.b16 %v457
    %v556 = vunpack.c.h.b16 %v457
    %v557 = vunpack.c.l.b16 %v458
    %v558 = vunpack.c.h.b16 %v458
    %v559 = vunpack.c.l.b16 %v459
    %v560 = vunpack.c.h.b16 %v459
    %v561 = vunpack.c.l.b16 %v460
    %v562 = vunpack.c.h.b16 %v460
    %v563 = vunpack.c.l.b16 %v461
    %v564 = vunpack.c.h.b16 %v461
    %v565 = vunpack.c.l.b16 %v462
    %v566 = vunpack.c.h.b16 %v462
    %v567 = vunpack.c.l.b16 %v463
    %v568 = vunpack.c.h.b16 %v463
    %v569 = vunpack.c.l.b16 %v464
    %v570 = vunpack.c.h.b16 %v464
    %v571 = vunpack.c.l.b16 %v465
    %v572 = vunpack.c.h.b16 %v465
    %v573 = vunpack.c.l.b16 %v466
    %v574 = vunpack.c.h.b16 %v466
    %v575 = vunpack.c.l.b16 %v467
    %v576 = vunpack.c.h.b16 %v467
    %v577 = vunpack.c.l.b16 %v468
    %v578 = vunpack.c.h.b16 %v468
    %v579 = vunpack.c.l.b16 %v469
    %v580 = vunpack.c.h.b16 %v469
    %v581 = vunpack.c.l.b16 %v470
    %v582 = vunpack.c.h.b16 %v470
    %v583 = vunpack.c.l.b16 %v471
    %v584 = vunpack.c.h.b16 %v471
    %v585 = vunpack.c.l.b16 %v472
    %v586 = vunpack.c.h.b16 %v472
    %v587 = vunpack.c.l.b16 %v473
    %v588 = vunpack.c.h.b16 %v473
    %v589 = vunpack.c.l.b16 %v474
    %v590 = vunpack.c.h.b16 %v474
    %v591 = vunpack.c.l.b16 %v475
    %v592 = vunpack.c.h.b16 %v475
    %v593 = vunpack.c.l.b16 %v476
    %v594 = vunpack.c.h.b16 %v476
    %v595 = vunpack.c.l.b16 %v477
    %v596 = vunpack.c.h.b16 %v477
    %v597 = vunpack.c.l.b16 %v478
    %v598 = vunpack.c.h.b16 %v478
    %v599 = vunpack.c.l.b16 %v479
    %v600 = vunpack.c.h.b16 %v479
    %v601 = vunpack.c.l.b16 %v480
    %v602 = vunpack.c.h.b16 %v480
    %v603 = vunpack.c.l.b16 %v481
    %v604 = vunpack.c.h.b16 %v481
    %v605 = vunpack.c.l.b16 %v482
    %v606 = vunpack.c.h.b16 %v482
    %v607 = vunpack.c.l.b16 %v483
    %v608 = vunpack.c.h.b16 %v483
    %v609 = vunpack.c.l.b16 %v484
    %v610 = vunpack.c.h.b16 %v484
    %v611 = vunpack.c.l.b16 %v485
    %v612 = vunpack.c.h.b16 %v485
    %v613 = vunpack.c.l.b16 %v486
    %v614 = vunpack.c.h.b16 %v486
    %v615 = vunpack.c.l.b16 %v487
    %v616 = vunpack.c.h.b16 %v487
    %v617 = vunpack.c.l.b16 %v488
    %v618 = vunpack.c.h.b16 %v488
    %v619 = vpack.c.b16 %v559, %v555
    %v620 = vpack.c.b16 %v560, %v556
    %v621 = vpack.c.b16 %v561, %v557
    %v622 = vpack.c.b16 %v562, %v558
    %v623 = vpack.c.b16 %v567, %v563
    %v624 = vpack.c.b16 %v568, %v564
    %v625 = vpack.c.b16 %v569, %v565
    %v626 = vpack.c.b16 %v570, %v566
    %v627 = vpack.c.b16 %v575, %v571
    %v628 = vpack.c.b16 %v576, %v572
    %v629 = vpack.c.b16 %v577, %v573
    %v630 = vpack.c.b16 %v578, %v574
    %v631 = vpack.c.b16 %v583, %v579
    %v632 = vpack.c.b16 %v584, %v580
    %v633 = vpack.c.b16 %v585, %v581
    %v634 = vpack.c.b16 %v586, %v582
    %v635 = vpack.c.b16 %v591, %v587
    %v636 = vpack.c.b16 %v592, %v588
    %v637 = vpack.c.b16 %v593, %v589
    %v638 = vpack.c.b16 %v594, %v590
    %v639 = vpack.c.b16 %v599, %v595
    %v640 = vpack.c.b16 %v600, %v596
    %v641 = vpack.c.b16 %v601, %v597
    %v642 = vpack.c.b16 %v602, %v598
    %v643 = vpack.c.b16 %v607, %v603
    %v644 = vpack.c.b16 %v608, %v604
    %v645 = vpack.c.b16 %v609, %v605
    %v646 = vpack.c.b16 %v610, %v606
    %v647 = vpack.c.b16 %v615, %v611
    %v648 = vpack.c.b16 %v616, %v612
    %v649 = vpack.c.b16 %v617, %v613
    %v650 = vpack.c.b16 %v618, %v614
    %683 = vmatpush.bf16.msra.mxu0 %v647
    %684 = vmatpush.bf16.msra.mxu0 %v643
    %685 = vmatpush.bf16.msra.mxu0 %v639
    %686 = vmatpush.bf16.msra.mxu0 %v635
    %687 = vmatpush.bf16.msra.mxu0 %v631
    %688 = vmatpush.bf16.msra.mxu0 %v627
    %689 = vmatpush.bf16.msra.mxu0 %v623
    %690 = vmatpush.bf16.msra.mxu0 %v619
    %691 = vmatmul.bf16.gmra.mxu0 %v515
    %v692 = vpop.f32.mrf.mxu0
    %v693 = vadd.f32 %v491, %v692
    %v694 = vpop.f32.mrf.mxu0
    %v695 = vadd.f32 %v491, %v694
    %696 = vmatmul.bf16.gmra.mxu0 %v516
    %v697 = vpop.f32.mrf.mxu0
    %v698 = vadd.f32 %v491, %v697
    %v699 = vpop.f32.mrf.mxu0
    %v700 = vadd.f32 %v491, %v699
    %701 = vmatmul.bf16.gmra.mxu0 %v517
    %v702 = vpop.f32.mrf.mxu0
    %v703 = vadd.f32 %v491, %v702
    %v704 = vpop.f32.mrf.mxu0
    %v705 = vadd.f32 %v491, %v704
    %706 = vmatmul.bf16.gmra.mxu0 %v518
    %v707 = vpop.f32.mrf.mxu0
    %v708 = vadd.f32 %v491, %v707
    %v709 = vpop.f32.mrf.mxu0
    %v710 = vadd.f32 %v491, %v709
    %711 = vdwg.mxu0
    %712 = vmatpush.bf16.msra.mxu0 %v648
    %713 = vmatpush.bf16.msra.mxu0 %v644
    %714 = vmatpush.bf16.msra.mxu0 %v640
    %715 = vmatpush.bf16.msra.mxu0 %v636
    %716 = vmatpush.bf16.msra.mxu0 %v632
    %717 = vmatpush.bf16.msra.mxu0 %v628
    %718 = vmatpush.bf16.msra.mxu0 %v624
    %719 = vmatpush.bf16.msra.mxu0 %v620
    %720 = vmatmul.bf16.gmra.mxu0 %v515
    %v721 = vpop.f32.mrf.mxu0
    %v722 = vadd.f32 %v492, %v721
    %v723 = vpop.f32.mrf.mxu0
    %v724 = vadd.f32 %v492, %v723
    %725 = vmatmul.bf16.gmra.mxu0 %v516
    %v726 = vpop.f32.mrf.mxu0
    %v727 = vadd.f32 %v492, %v726
    %v728 = vpop.f32.mrf.mxu0
    %v729 = vadd.f32 %v492, %v728
    %730 = vmatmul.bf16.gmra.mxu0 %v517
    %v731 = vpop.f32.mrf.mxu0
    %v732 = vadd.f32 %v492, %v731
    %v733 = vpop.f32.mrf.mxu0
    %v734 = vadd.f32 %v492, %v733
    %735 = vmatmul.bf16.gmra.mxu0 %v518
    %v736 = vpop.f32.mrf.mxu0
    %v737 = vadd.f32 %v492, %v736
    %v738 = vpop.f32.mrf.mxu0
    %v739 = vadd.f32 %v492, %v738
    %740 = vdwg.mxu0
    %741 = vmatpush.bf16.msra.mxu0 %v649
    %742 = vmatpush.bf16.msra.mxu0 %v645
    %743 = vmatpush.bf16.msra.mxu0 %v641
    %744 = vmatpush.bf16.msra.mxu0 %v637
    %745 = vmatpush.bf16.msra.mxu0 %v633
    %746 = vmatpush.bf16.msra.mxu0 %v629
    %747 = vmatpush.bf16.msra.mxu0 %v625
    %748 = vmatpush.bf16.msra.mxu0 %v621
    %749 = vmatmul.bf16.gmra.mxu0 %v515
    %v750 = vpop.f32.mrf.mxu0
    %v751 = vadd.f32 %v493, %v750
    %v752 = vpop.f32.mrf.mxu0
    %v753 = vadd.f32 %v493, %v752
    %754 = vmatmul.bf16.gmra.mxu0 %v516
    %v755 = vpop.f32.mrf.mxu0
    %v756 = vadd.f32 %v493, %v755
    %v757 = vpop.f32.mrf.mxu0
    %v758 = vadd.f32 %v493, %v757
    %759 = vmatmul.bf16.gmra.mxu0 %v517
    %v760 = vpop.f32.mrf.mxu0
    %v761 = vadd.f32 %v493, %v760
    %v762 = vpop.f32.mrf.mxu0
    %v763 = vadd.f32 %v493, %v762
    %764 = vmatmul.bf16.gmra.mxu0 %v518
    %v765 = vpop.f32.mrf.mxu0
    %v766 = vadd.f32 %v493, %v765
    %v767 = vpop.f32.mrf.mxu0
    %v768 = vadd.f32 %v493, %v767
    %769 = vdwg.mxu0
    %770 = vmatpush.bf16.msra.mxu0 %v650
    %771 = vmatpush.bf16.msra.mxu0 %v646
    %772 = vmatpush.bf16.msra.mxu0 %v642
    %773 = vmatpush.bf16.msra.mxu0 %v638
    %774 = vmatpush.bf16.msra.mxu0 %v634
    %775 = vmatpush.bf16.msra.mxu0 %v630
    %776 = vmatpush.bf16.msra.mxu0 %v626
    %777 = vmatpush.bf16.msra.mxu0 %v622
    %778 = vmatmul.bf16.gmra.mxu0 %v515
    %v779 = vpop.f32.mrf.mxu0
    %v780 = vadd.f32 %v494, %v779
    %v781 = vpop.f32.mrf.mxu0
    %v782 = vadd.f32 %v494, %v781
    %783 = vmatmul.bf16.gmra.mxu0 %v516
    %v784 = vpop.f32.mrf.mxu0
    %v785 = vadd.f32 %v494, %v784
    %v786 = vpop.f32.mrf.mxu0
    %v787 = vadd.f32 %v494, %v786
    %788 = vmatmul.bf16.gmra.mxu0 %v517
    %v789 = vpop.f32.mrf.mxu0
    %v790 = vadd.f32 %v494, %v789
    %v791 = vpop.f32.mrf.mxu0
    %v792 = vadd.f32 %v494, %v791
    %793 = vmatmul.bf16.gmra.mxu0 %v518
    %v794 = vpop.f32.mrf.mxu0
    %v795 = vadd.f32 %v494, %v794
    %v796 = vpop.f32.mrf.mxu0
    %v797 = vadd.f32 %v494, %v796
    %798 = vdwg.mxu0
    %799 = vst [vmem:[#allocation3] sm:$0xff] %v693
    %800 = vst [vmem:[#allocation3 + $0x8] sm:$0xff] %v722
    %801 = vst [vmem:[#allocation3 + $0x10] sm:$0xff] %v751
    %802 = vst [vmem:[#allocation3 + $0x18] sm:$0xff] %v780
    %803 = vst [vmem:[#allocation3 + $0x20] sm:$0xff] %v695
    %804 = vst [vmem:[#allocation3 + $0x28] sm:$0xff] %v724
    %805 = vst [vmem:[#allocation3 + $0x30] sm:$0xff] %v753
    %806 = vst [vmem:[#allocation3 + $0x38] sm:$0xff] %v782
    %807 = vst [vmem:[#allocation3 + $0x40] sm:$0xff] %v698
    %808 = vst [vmem:[#allocation3 + $0x48] sm:$0xff] %v727
    %809 = vst [vmem:[#allocation3 + $0x50] sm:$0xff] %v756
    %810 = vst [vmem:[#allocation3 + $0x58] sm:$0xff] %v785
    %811 = vst [vmem:[#allocation3 + $0x60] sm:$0xff] %v700
    %812 = vst [vmem:[#allocation3 + $0x68] sm:$0xff] %v729
    %813 = vst [vmem:[#allocation3 + $0x70] sm:$0xff] %v758
    %814 = vst [vmem:[#allocation3 + $0x78] sm:$0xff] %v787
    %815 = vst [vmem:[#allocation3 + $0x80] sm:$0xff] %v703
    %816 = vst [vmem:[#allocation3 + $0x88] sm:$0xff] %v732
    %817 = vst [vmem:[#allocation3 + $0x90] sm:$0xff] %v761
    %818 = vst [vmem:[#allocation3 + $0x98] sm:$0xff] %v790
    %819 = vst [vmem:[#allocation3 + $0xa0] sm:$0xff] %v705
    %820 = vst [vmem:[#allocation3 + $0xa8] sm:$0xff] %v734
    %821 = vst [vmem:[#allocation3 + $0xb0] sm:$0xff] %v763
    %822 = vst [vmem:[#allocation3 + $0xb8] sm:$0xff] %v792
    %823 = vst [vmem:[#allocation3 + $0xc0] sm:$0xff] %v708
    %824 = vst [vmem:[#allocation3 + $0xc8] sm:$0xff] %v737
    %825 = vst [vmem:[#allocation3 + $0xd0] sm:$0xff] %v766
    %826 = vst [vmem:[#allocation3 + $0xd8] sm:$0xff] %v795
    %827 = vst [vmem:[#allocation3 + $0xe0] sm:$0xff] %v710
    %828 = vst [vmem:[#allocation3 + $0xe8] sm:$0xff] %v739
    %829 = vst [vmem:[#allocation3 + $0xf0] sm:$0xff] %v768
    %830 = vst [vmem:[#allocation3 + $0xf8] sm:$0xff] %v797
    %v831 = vld [vmem:[#allocation2] sm:$0xff]
    %v832 = vld [vmem:[#allocation2 + $0x8] sm:$0xff]
    %v833 = vld [vmem:[#allocation2 + $0x10] sm:$0xff]
    %v834 = vld [vmem:[#allocation2 + $0x18] sm:$0xff]
    %v835 = vld [vmem:[%s3] sm:$0xff]
    %v836 = vld [vmem:[%s3 + $0x8] sm:$0xff]
    %v837 = vld [vmem:[%s3 + $0x10] sm:$0xff]
    %v838 = vld [vmem:[%s3 + $0x18] sm:$0xff]
    %v839 = vld [vmem:[%s3 + $0x20] sm:$0xff]
    %v840 = vld [vmem:[%s3 + $0x28] sm:$0xff]
    %v841 = vld [vmem:[%s3 + $0x30] sm:$0xff]
    %v842 = vld [vmem:[%s3 + $0x38] sm:$0xff]
    %v843 = vld [vmem:[%s3 + $0x40] sm:$0xff]
    %v844 = vld [vmem:[%s3 + $0x48] sm:$0xff]
    %v845 = vld [vmem:[%s3 + $0x50] sm:$0xff]
    %v846 = vld [vmem:[%s3 + $0x58] sm:$0xff]
    %v847 = vld [vmem:[%s3 + $0x60] sm:$0xff]
    %v848 = vld [vmem:[%s3 + $0x68] sm:$0xff]
    %v849 = vld [vmem:[%s3 + $0x70] sm:$0xff]
    %v850 = vld [vmem:[%s3 + $0x78] sm:$0xff]
    %v851 = vld [vmem:[%s3 + $0x80] sm:$0xff]
    %v852 = vld [vmem:[%s3 + $0x88] sm:$0xff]
    %v853 = vld [vmem:[%s3 + $0x90] sm:$0xff]
    %v854 = vld [vmem:[%s3 + $0x98] sm:$0xff]
    %v855 = vld [vmem:[%s3 + $0xa0] sm:$0xff]
    %v856 = vld [vmem:[%s3 + $0xa8] sm:$0xff]
    %v857 = vld [vmem:[%s3 + $0xb0] sm:$0xff]
    %v858 = vld [vmem:[%s3 + $0xb8] sm:$0xff]
    %v859 = vld [vmem:[%s3 + $0xc0] sm:$0xff]
    %v860 = vld [vmem:[%s3 + $0xc8] sm:$0xff]
    %v861 = vld [vmem:[%s3 + $0xd0] sm:$0xff]
    %v862 = vld [vmem:[%s3 + $0xd8] sm:$0xff]
    %v863 = vld [vmem:[%s3 + $0xe0] sm:$0xff]
    %v864 = vld [vmem:[%s3 + $0xe8] sm:$0xff]
    %v865 = vld [vmem:[%s3 + $0xf0] sm:$0xff]
    %v866 = vld [vmem:[%s3 + $0xf8] sm:$0xff]
    %v899 = vunpack.c.l.b16 %v835
    %v900 = vunpack.c.h.b16 %v835
    %v901 = vunpack.c.l.b16 %v836
    %v902 = vunpack.c.h.b16 %v836
    %v903 = vunpack.c.l.b16 %v837
    %v904 = vunpack.c.h.b16 %v837
    %v905 = vunpack.c.l.b16 %v838
    %v906 = vunpack.c.h.b16 %v838
    %v907 = vunpack.c.l.b16 %v839
    %v908 = vunpack.c.h.b16 %v839
    %v909 = vunpack.c.l.b16 %v840
    %v910 = vunpack.c.h.b16 %v840
    %v911 = vunpack.c.l.b16 %v841
    %v912 = vunpack.c.h.b16 %v841
    %v913 = vunpack.c.l.b16 %v842
    %v914 = vunpack.c.h.b16 %v842
    %v915 = vunpack.c.l.b16 %v843
    %v916 = vunpack.c.h.b16 %v843
    %v917 = vunpack.c.l.b16 %v844
    %v918 = vunpack.c.h.b16 %v844
    %v919 = vunpack.c.l.b16 %v845
    %v920 = vunpack.c.h.b16 %v845
    %v921 = vunpack.c.l.b16 %v846
    %v922 = vunpack.c.h.b16 %v846
    %v923 = vunpack.c.l.b16 %v847
    %v924 = vunpack.c.h.b16 %v847
    %v925 = vunpack.c.l.b16 %v848
    %v926 = vunpack.c.h.b16 %v848
    %v927 = vunpack.c.l.b16 %v849
    %v928 = vunpack.c.h.b16 %v849
    %v929 = vunpack.c.l.b16 %v850
    %v930 = vunpack.c.h.b16 %v850
    %v931 = vunpack.c.l.b16 %v851
    %v932 = vunpack.c.h.b16 %v851
    %v933 = vunpack.c.l.b16 %v852
    %v934 = vunpack.c.h.b16 %v852
    %v935 = vunpack.c.l.b16 %v853
    %v936 = vunpack.c.h.b16 %v853
    %v937 = vunpack.c.l.b16 %v854
    %v938 = vunpack.c.h.b16 %v854
    %v939 = vunpack.c.l.b16 %v855
    %v940 = vunpack.c.h.b16 %v855
    %v941 = vunpack.c.l.b16 %v856
    %v942 = vunpack.c.h.b16 %v856
    %v943 = vunpack.c.l.b16 %v857
    %v944 = vunpack.c.h.b16 %v857
    %v945 = vunpack.c.l.b16 %v858
    %v946 = vunpack.c.h.b16 %v858
    %v947 = vunpack.c.l.b16 %v859
    %v948 = vunpack.c.h.b16 %v859
    %v949 = vunpack.c.l.b16 %v860
    %v950 = vunpack.c.h.b16 %v860
    %v951 = vunpack.c.l.b16 %v861
    %v952 = vunpack.c.h.b16 %v861
    %v953 = vunpack.c.l.b16 %v862
    %v954 = vunpack.c.h.b16 %v862
    %v955 = vunpack.c.l.b16 %v863
    %v956 = vunpack.c.h.b16 %v863
    %v957 = vunpack.c.l.b16 %v864
    %v958 = vunpack.c.h.b16 %v864
    %v959 = vunpack.c.l.b16 %v865
    %v960 = vunpack.c.h.b16 %v865
    %v961 = vunpack.c.l.b16 %v866
    %v962 = vunpack.c.h.b16 %v866
    %v963 = vpack.c.b16 %v903, %v899
    %v964 = vpack.c.b16 %v904, %v900
    %v965 = vpack.c.b16 %v905, %v901
    %v966 = vpack.c.b16 %v906, %v902
    %v967 = vpack.c.b16 %v911, %v907
    %v968 = vpack.c.b16 %v912, %v908
    %v969 = vpack.c.b16 %v913, %v909
    %v970 = vpack.c.b16 %v914, %v910
    %v971 = vpack.c.b16 %v919, %v915
    %v972 = vpack.c.b16 %v920, %v916
    %v973 = vpack.c.b16 %v921, %v917
    %v974 = vpack.c.b16 %v922, %v918
    %v975 = vpack.c.b16 %v927, %v923
    %v976 = vpack.c.b16 %v928, %v924
    %v977 = vpack.c.b16 %v929, %v925
    %v978 = vpack.c.b16 %v930, %v926
    %v979 = vpack.c.b16 %v935, %v931
    %v980 = vpack.c.b16 %v936, %v932
    %v981 = vpack.c.b16 %v937, %v933
    %v982 = vpack.c.b16 %v938, %v934
    %v983 = vpack.c.b16 %v943, %v939
    %v984 = vpack.c.b16 %v944, %v940
    %v985 = vpack.c.b16 %v945, %v941
    %v986 = vpack.c.b16 %v946, %v942
    %v987 = vpack.c.b16 %v951, %v947
    %v988 = vpack.c.b16 %v952, %v948
    %v989 = vpack.c.b16 %v953, %v949
    %v990 = vpack.c.b16 %v954, %v950
    %v991 = vpack.c.b16 %v959, %v955
    %v992 = vpack.c.b16 %v960, %v956
    %v993 = vpack.c.b16 %v961, %v957
    %v994 = vpack.c.b16 %v962, %v958
    %1027 = vmatpush.bf16.msra.mxu0 %v991
    %1028 = vmatpush.bf16.msra.mxu0 %v987
    %1029 = vmatpush.bf16.msra.mxu0 %v983
    %1030 = vmatpush.bf16.msra.mxu0 %v979
    %1031 = vmatpush.bf16.msra.mxu0 %v975
    %1032 = vmatpush.bf16.msra.mxu0 %v971
    %1033 = vmatpush.bf16.msra.mxu0 %v967
    %1034 = vmatpush.bf16.msra.mxu0 %v963
    %1035 = vmatmul.bf16.gmra.mxu0 0
    %v1036 = vpop.f32.mrf.mxu0
    %v1037 = vadd.f32 0.0, %v1036
    %v1038 = vpop.f32.mrf.mxu0
    %1039 = vdwg.mxu0
    %1040 = vmatpush.bf16.msra.mxu0 %v992
    %1041 = vmatpush.bf16.msra.mxu0 %v988
    %1042 = vmatpush.bf16.msra.mxu0 %v984
    %1043 = vmatpush.bf16.msra.mxu0 %v980
    %1044 = vmatpush.bf16.msra.mxu0 %v976
    %1045 = vmatpush.bf16.msra.mxu0 %v972
    %1046 = vmatpush.bf16.msra.mxu0 %v968
    %1047 = vmatpush.bf16.msra.mxu0 %v964
    %1048 = vmatmul.bf16.gmra.mxu0 0
    %v1049 = vpop.f32.mrf.mxu0
    %v1050 = vadd.f32 0.0, %v1049
    %v1051 = vpop.f32.mrf.mxu0
    %1052 = vdwg.mxu0
    %1053 = vmatpush.bf16.msra.mxu0 %v993
    %1054 = vmatpush.bf16.msra.mxu0 %v989
    %1055 = vmatpush.bf16.msra.mxu0 %v985
    %1056 = vmatpush.bf16.msra.mxu0 %v981
    %1057 = vmatpush.bf16.msra.mxu0 %v977
    %1058 = vmatpush.bf16.msra.mxu0 %v973
    %1059 = vmatpush.bf16.msra.mxu0 %v969
    %1060 = vmatpush.bf16.msra.mxu0 %v965
    %1061 = vmatmul.bf16.gmra.mxu0 0
    %v1062 = vpop.f32.mrf.mxu0
    %v1063 = vadd.f32 0.0, %v1062
    %v1064 = vpop.f32.mrf.mxu0
    %1065 = vdwg.mxu0
    %1066 = vmatpush.bf16.msra.mxu0 %v994
    %1067 = vmatpush.bf16.msra.mxu0 %v990
    %1068 = vmatpush.bf16.msra.mxu0 %v986
    %1069 = vmatpush.bf16.msra.mxu0 %v982
    %1070 = vmatpush.bf16.msra.mxu0 %v978
    %1071 = vmatpush.bf16.msra.mxu0 %v974
    %1072 = vmatpush.bf16.msra.mxu0 %v970
    %1073 = vmatpush.bf16.msra.mxu0 %v966
    %1074 = vmatmul.bf16.gmra.mxu0 0
    %v1075 = vpop.f32.mrf.mxu0
    %v1076 = vadd.f32 0.0, %v1075
    %v1077 = vpop.f32.mrf.mxu0
    %1078 = vdwg.mxu0
    %v1079 = vadd.f32 %v831, %v1037
    %v1080 = vadd.f32 %v832, %v1050
    %v1081 = vadd.f32 %v833, %v1063
    %v1082 = vadd.f32 %v834, %v1076
    %v1083 = vxor.u32 %v1079, 2147483648
    %v1084 = vmul.f32 %v1083, 1.442695
    %v1085 = vpow.pop %v1084
    %v1086 = vadd.f32 %v1085, 1.0
    %v1087 = vrcp.pop %v1086
    %v1088 = vmul.f32 %v1086, %v1087
    %v1089 = vsub.f32 1.0, %v1088
    %v1090 = vmul.f32 %v1087, %v1089
    %v1091 = vadd.f32 %v1087, %v1090
    %vm1092 = vweird.f32 %v1086
    %vm1093 = vweird.f32 %v1087
    %vm1094 = vmor %vm1092, %vm1093
    %v1095 = vsel %vm1094, %v1087, %v1091
    %v1096 = vand.u32 2147483647, %v1086
    %vm1097 = vcmp.eq.f32.partialorder %v1096, 8.507059e+37
    %v1098 = vand.u32 %v1086, 2147483648
    %v1099 = vor.u32 1.1754944e-38, %v1098
    %v1100 = vsel %vm1097, %v1099, %v1095
    %v1101 = vmul.f32 1.0, %v1100
    %v1102 = vxor.u32 %v1080, 2147483648
    %v1103 = vmul.f32 %v1102, 1.442695
    %v1104 = vpow.pop %v1103
    %v1105 = vadd.f32 %v1104, 1.0
    %v1106 = vrcp.pop %v1105
    %v1107 = vmul.f32 %v1105, %v1106
    %v1108 = vsub.f32 1.0, %v1107
    %v1109 = vmul.f32 %v1106, %v1108
    %v1110 = vadd.f32 %v1106, %v1109
    %vm1111 = vweird.f32 %v1105
    %vm1112 = vweird.f32 %v1106
    %vm1113 = vmor %vm1111, %vm1112
    %v1114 = vsel %vm1113, %v1106, %v1110
    %v1115 = vand.u32 2147483647, %v1105
    %vm1116 = vcmp.eq.f32.partialorder %v1115, 8.507059e+37
    %v1117 = vand.u32 %v1105, 2147483648
    %v1118 = vor.u32 1.1754944e-38, %v1117
    %v1119 = vsel %vm1116, %v1118, %v1114
    %v1120 = vmul.f32 1.0, %v1119
    %v1121 = vtanh.pop %v1081
    %v1122 = vxor.u32 %v1082, 2147483648
    %v1123 = vmul.f32 %v1122, 1.442695
    %v1124 = vpow.pop %v1123
    %v1125 = vadd.f32 %v1124, 1.0
    %v1126 = vrcp.pop %v1125
    %v1127 = vmul.f32 %v1125, %v1126
    %v1128 = vsub.f32 1.0, %v1127
    %v1129 = vmul.f32 %v1126, %v1128
    %v1130 = vadd.f32 %v1126, %v1129
    %vm1131 = vweird.f32 %v1125
    %vm1132 = vweird.f32 %v1126
    %vm1133 = vmor %vm1131, %vm1132
    %v1134 = vsel %vm1133, %v1126, %v1130
    %v1135 = vand.u32 2147483647, %v1125
    %vm1136 = vcmp.eq.f32.partialorder %v1135, 8.507059e+37
    %v1137 = vand.u32 %v1125, 2147483648
    %v1138 = vor.u32 1.1754944e-38, %v1137
    %v1139 = vsel %vm1136, %v1138, %v1134
    %v1140 = vmul.f32 1.0, %v1139
    %v1141 = vmul.f32 %v1120, 0.0
    %v1142 = vmul.f32 %v1101, %v1121
    %v1143 = vadd.f32 %v1141, %v1142
    %v1144 = vtanh.pop %v1143
    %v1145 = vmul.f32 %v1140, %v1144
    %v1146 = vpack.c.bf16 %v1145, %v1145
    %s1147 = scalar_lea.vmem [#allocation2], 32
    %v1148 = vld [vmem:[%s1147] sm:$0xff]
    %v1149 = vld [vmem:[%s1147 + $0x8] sm:$0xff]
    %v1150 = vld [vmem:[%s1147 + $0x10] sm:$0xff]
    %v1151 = vld [vmem:[%s1147 + $0x18] sm:$0xff]
    %1152 = vmatpush.bf16.msra.mxu0 %v991
    %1153 = vmatpush.bf16.msra.mxu0 %v987
    %1154 = vmatpush.bf16.msra.mxu0 %v983
    %1155 = vmatpush.bf16.msra.mxu0 %v979
    %1156 = vmatpush.bf16.msra.mxu0 %v975
    %1157 = vmatpush.bf16.msra.mxu0 %v971
    %1158 = vmatpush.bf16.msra.mxu0 %v967
    %1159 = vmatpush.bf16.msra.mxu0 %v963
    %1160 = vmatmul.bf16.gmra.mxu0 %v1146
    %v1161 = vpop.f32.mrf.mxu0
    %v1162 = vadd.f32 0.0, %v1161
    %v1163 = vpop.f32.mrf.mxu0
    %1164 = vdwg.mxu0
    %1165 = vmatpush.bf16.msra.mxu0 %v992
    %1166 = vmatpush.bf16.msra.mxu0 %v988
    %1167 = vmatpush.bf16.msra.mxu0 %v984
    %1168 = vmatpush.bf16.msra.mxu0 %v980
    %1169 = vmatpush.bf16.msra.mxu0 %v976
    %1170 = vmatpush.bf16.msra.mxu0 %v972
    %1171 = vmatpush.bf16.msra.mxu0 %v968
    %1172 = vmatpush.bf16.msra.mxu0 %v964
    %1173 = vmatmul.bf16.gmra.mxu0 %v1146
    %v1174 = vpop.f32.mrf.mxu0
    %v1175 = vadd.f32 0.0, %v1174
    %v1176 = vpop.f32.mrf.mxu0
    %1177 = vdwg.mxu0
    %1178 = vmatpush.bf16.msra.mxu0 %v993
    %1179 = vmatpush.bf16.msra.mxu0 %v989
    %1180 = vmatpush.bf16.msra.mxu0 %v985
    %1181 = vmatpush.bf16.msra.mxu0 %v981
    %1182 = vmatpush.bf16.msra.mxu0 %v977
    %1183 = vmatpush.bf16.msra.mxu0 %v973
    %1184 = vmatpush.bf16.msra.mxu0 %v969
    %1185 = vmatpush.bf16.msra.mxu0 %v965
    %1186 = vmatmul.bf16.gmra.mxu0 %v1146
    %v1187 = vpop.f32.mrf.mxu0
    %v1188 = vadd.f32 0.0, %v1187
    %v1189 = vpop.f32.mrf.mxu0
    %1190 = vdwg.mxu0
    %1191 = vmatpush.bf16.msra.mxu0 %v994
    %1192 = vmatpush.bf16.msra.mxu0 %v990
    %1193 = vmatpush.bf16.msra.mxu0 %v986
    %1194 = vmatpush.bf16.msra.mxu0 %v982
    %1195 = vmatpush.bf16.msra.mxu0 %v978
    %1196 = vmatpush.bf16.msra.mxu0 %v974
    %1197 = vmatpush.bf16.msra.mxu0 %v970
    %1198 = vmatpush.bf16.msra.mxu0 %v966
    %1199 = vmatmul.bf16.gmra.mxu0 %v1146
    %v1200 = vpop.f32.mrf.mxu0
    %v1201 = vadd.f32 0.0, %v1200
    %v1202 = vpop.f32.mrf.mxu0
    %1203 = vdwg.mxu0
    %v1204 = vadd.f32 %v1148, %v1162
    %v1205 = vadd.f32 %v1149, %v1175
    %v1206 = vadd.f32 %v1150, %v1188
    %v1207 = vadd.f32 %v1151, %v1201
    %v1208 = vxor.u32 %v1204, 2147483648
    %v1209 = vmul.f32 %v1208, 1.442695
    %v1210 = vpow.pop %v1209
    %v1211 = vadd.f32 %v1210, 1.0
    %v1212 = vrcp.pop %v1211
    %v1213 = vmul.f32 %v1211, %v1212
    %v1214 = vsub.f32 1.0, %v1213
    %v1215 = vmul.f32 %v1212, %v1214
    %v1216 = vadd.f32 %v1212, %v1215
    %vm1217 = vweird.f32 %v1211
    %vm1218 = vweird.f32 %v1212
    %vm1219 = vmor %vm1217, %vm1218
    %v1220 = vsel %vm1219, %v1212, %v1216
    %v1221 = vand.u32 2147483647, %v1211
    %vm1222 = vcmp.eq.f32.partialorder %v1221, 8.507059e+37
    %v1223 = vand.u32 %v1211, 2147483648
    %v1224 = vor.u32 1.1754944e-38, %v1223
    %v1225 = vsel %vm1222, %v1224, %v1220
    %v1226 = vmul.f32 1.0, %v1225
    %v1227 = vxor.u32 %v1205, 2147483648
    %v1228 = vmul.f32 %v1227, 1.442695
    %v1229 = vpow.pop %v1228
    %v1230 = vadd.f32 %v1229, 1.0
    %v1231 = vrcp.pop %v1230
    %v1232 = vmul.f32 %v1230, %v1231
    %v1233 = vsub.f32 1.0, %v1232
    %v1234 = vmul.f32 %v1231, %v1233
    %v1235 = vadd.f32 %v1231, %v1234
    %vm1236 = vweird.f32 %v1230
    %vm1237 = vweird.f32 %v1231
    %vm1238 = vmor %vm1236, %vm1237
    %v1239 = vsel %vm1238, %v1231, %v1235
    %v1240 = vand.u32 2147483647, %v1230
    %vm1241 = vcmp.eq.f32.partialorder %v1240, 8.507059e+37
    %v1242 = vand.u32 %v1230, 2147483648
    %v1243 = vor.u32 1.1754944e-38, %v1242
    %v1244 = vsel %vm1241, %v1243, %v1239
    %v1245 = vmul.f32 1.0, %v1244
    %v1246 = vtanh.pop %v1206
    %v1247 = vxor.u32 %v1207, 2147483648
    %v1248 = vmul.f32 %v1247, 1.442695
    %v1249 = vpow.pop %v1248
    %v1250 = vadd.f32 %v1249, 1.0
    %v1251 = vrcp.pop %v1250
    %v1252 = vmul.f32 %v1250, %v1251
    %v1253 = vsub.f32 1.0, %v1252
    %v1254 = vmul.f32 %v1251, %v1253
    %v1255 = vadd.f32 %v1251, %v1254
    %vm1256 = vweird.f32 %v1250
    %vm1257 = vweird.f32 %v1251
    %vm1258 = vmor %vm1256, %vm1257
    %v1259 = vsel %vm1258, %v1251, %v1255
    %v1260 = vand.u32 2147483647, %v1250
    %vm1261 = vcmp.eq.f32.partialorder %v1260, 8.507059e+37
    %v1262 = vand.u32 %v1250, 2147483648
    %v1263 = vor.u32 1.1754944e-38, %v1262
    %v1264 = vsel %vm1261, %v1263, %v1259
    %v1265 = vmul.f32 1.0, %v1264
    %v1266 = vmul.f32 %v1245, %v1143
    %v1267 = vmul.f32 %v1226, %v1246
    %v1268 = vadd.f32 %v1266, %v1267
    %v1269 = vtanh.pop %v1268
    %v1270 = vmul.f32 %v1265, %v1269
    %v1271 = vpack.c.bf16 %v1270, %v1270
    %s1272 = scalar_lea.vmem [#allocation2], 64
    %v1273 = vld [vmem:[%s1272] sm:$0xff]
    %v1274 = vld [vmem:[%s1272 + $0x8] sm:$0xff]
    %v1275 = vld [vmem:[%s1272 + $0x10] sm:$0xff]
    %v1276 = vld [vmem:[%s1272 + $0x18] sm:$0xff]
    %1277 = vmatpush.bf16.msra.mxu0 %v991
    %1278 = vmatpush.bf16.msra.mxu0 %v987
    %1279 = vmatpush.bf16.msra.mxu0 %v983
    %1280 = vmatpush.bf16.msra.mxu0 %v979
    %1281 = vmatpush.bf16.msra.mxu0 %v975
    %1282 = vmatpush.bf16.msra.mxu0 %v971
    %1283 = vmatpush.bf16.msra.mxu0 %v967
    %1284 = vmatpush.bf16.msra.mxu0 %v963
    %1285 = vmatmul.bf16.gmra.mxu0 %v1271
    %v1286 = vpop.f32.mrf.mxu0
    %v1287 = vadd.f32 0.0, %v1286
    %v1288 = vpop.f32.mrf.mxu0
    %1289 = vdwg.mxu0
    %1290 = vmatpush.bf16.msra.mxu0 %v992
    %1291 = vmatpush.bf16.msra.mxu0 %v988
    %1292 = vmatpush.bf16.msra.mxu0 %v984
    %1293 = vmatpush.bf16.msra.mxu0 %v980
    %1294 = vmatpush.bf16.msra.mxu0 %v976
    %1295 = vmatpush.bf16.msra.mxu0 %v972
    %1296 = vmatpush.bf16.msra.mxu0 %v968
    %1297 = vmatpush.bf16.msra.mxu0 %v964
    %1298 = vmatmul.bf16.gmra.mxu0 %v1271
    %v1299 = vpop.f32.mrf.mxu0
    %v1300 = vadd.f32 0.0, %v1299
    %v1301 = vpop.f32.mrf.mxu0
    %1302 = vdwg.mxu0
    %1303 = vmatpush.bf16.msra.mxu0 %v993
    %1304 = vmatpush.bf16.msra.mxu0 %v989
    %1305 = vmatpush.bf16.msra.mxu0 %v985
    %1306 = vmatpush.bf16.msra.mxu0 %v981
    %1307 = vmatpush.bf16.msra.mxu0 %v977
    %1308 = vmatpush.bf16.msra.mxu0 %v973
    %1309 = vmatpush.bf16.msra.mxu0 %v969
    %1310 = vmatpush.bf16.msra.mxu0 %v965
    %1311 = vmatmul.bf16.gmra.mxu0 %v1271
    %v1312 = vpop.f32.mrf.mxu0
    %v1313 = vadd.f32 0.0, %v1312
    %v1314 = vpop.f32.mrf.mxu0
    %1315 = vdwg.mxu0
    %1316 = vmatpush.bf16.msra.mxu0 %v994
    %1317 = vmatpush.bf16.msra.mxu0 %v990
    %1318 = vmatpush.bf16.msra.mxu0 %v986
    %1319 = vmatpush.bf16.msra.mxu0 %v982
    %1320 = vmatpush.bf16.msra.mxu0 %v978
    %1321 = vmatpush.bf16.msra.mxu0 %v974
    %1322 = vmatpush.bf16.msra.mxu0 %v970
    %1323 = vmatpush.bf16.msra.mxu0 %v966
    %1324 = vmatmul.bf16.gmra.mxu0 %v1271
    %v1325 = vpop.f32.mrf.mxu0
    %v1326 = vadd.f32 0.0, %v1325
    %v1327 = vpop.f32.mrf.mxu0
    %1328 = vdwg.mxu0
    %v1329 = vadd.f32 %v1273, %v1287
    %v1330 = vadd.f32 %v1274, %v1300
    %v1331 = vadd.f32 %v1275, %v1313
    %v1332 = vadd.f32 %v1276, %v1326
    %v1333 = vxor.u32 %v1329, 2147483648
    %v1334 = vmul.f32 %v1333, 1.442695
    %v1335 = vpow.pop %v1334
    %v1336 = vadd.f32 %v1335, 1.0
    %v1337 = vrcp.pop %v1336
    %v1338 = vmul.f32 %v1336, %v1337
    %v1339 = vsub.f32 1.0, %v1338
    %v1340 = vmul.f32 %v1337, %v1339
    %v1341 = vadd.f32 %v1337, %v1340
    %vm1342 = vweird.f32 %v1336
    %vm1343 = vweird.f32 %v1337
    %vm1344 = vmor %vm1342, %vm1343
    %v1345 = vsel %vm1344, %v1337, %v1341
    %v1346 = vand.u32 2147483647, %v1336
    %vm1347 = vcmp.eq.f32.partialorder %v1346, 8.507059e+37
    %v1348 = vand.u32 %v1336, 2147483648
    %v1349 = vor.u32 1.1754944e-38, %v1348
    %v1350 = vsel %vm1347, %v1349, %v1345
    %v1351 = vmul.f32 1.0, %v1350
    %v1352 = vxor.u32 %v1330, 2147483648
    %v1353 = vmul.f32 %v1352, 1.442695
    %v1354 = vpow.pop %v1353
    %v1355 = vadd.f32 %v1354, 1.0
    %v1356 = vrcp.pop %v1355
    %v1357 = vmul.f32 %v1355, %v1356
    %v1358 = vsub.f32 1.0, %v1357
    %v1359 = vmul.f32 %v1356, %v1358
    %v1360 = vadd.f32 %v1356, %v1359
    %vm1361 = vweird.f32 %v1355
    %vm1362 = vweird.f32 %v1356
    %vm1363 = vmor %vm1361, %vm1362
    %v1364 = vsel %vm1363, %v1356, %v1360
    %v1365 = vand.u32 2147483647, %v1355
    %vm1366 = vcmp.eq.f32.partialorder %v1365, 8.507059e+37
    %v1367 = vand.u32 %v1355, 2147483648
    %v1368 = vor.u32 1.1754944e-38, %v1367
    %v1369 = vsel %vm1366, %v1368, %v1364
    %v1370 = vmul.f32 1.0, %v1369
    %v1371 = vtanh.pop %v1331
    %v1372 = vxor.u32 %v1332, 2147483648
    %v1373 = vmul.f32 %v1372, 1.442695
    %v1374 = vpow.pop %v1373
    %v1375 = vadd.f32 %v1374, 1.0
    %v1376 = vrcp.pop %v1375
    %v1377 = vmul.f32 %v1375, %v1376
    %v1378 = vsub.f32 1.0, %v1377
    %v1379 = vmul.f32 %v1376, %v1378
    %v1380 = vadd.f32 %v1376, %v1379
    %vm1381 = vweird.f32 %v1375
    %vm1382 = vweird.f32 %v1376
    %vm1383 = vmor %vm1381, %vm1382
    %v1384 = vsel %vm1383, %v1376, %v1380
    %v1385 = vand.u32 2147483647, %v1375
    %vm1386 = vcmp.eq.f32.partialorder %v1385, 8.507059e+37
    %v1387 = vand.u32 %v1375, 2147483648
    %v1388 = vor.u32 1.1754944e-38, %v1387
    %v1389 = vsel %vm1386, %v1388, %v1384
    %v1390 = vmul.f32 1.0, %v1389
    %v1391 = vmul.f32 %v1370, %v1268
    %v1392 = vmul.f32 %v1351, %v1371
    %v1393 = vadd.f32 %v1391, %v1392
    %v1394 = vtanh.pop %v1393
    %v1395 = vmul.f32 %v1390, %v1394
    %v1396 = vpack.c.bf16 %v1395, %v1395
    %s1397 = scalar_lea.vmem [#allocation2], 96
    %v1398 = vld [vmem:[%s1397] sm:$0xff]
    %v1399 = vld [vmem:[%s1397 + $0x8] sm:$0xff]
    %v1400 = vld [vmem:[%s1397 + $0x10] sm:$0xff]
    %v1401 = vld [vmem:[%s1397 + $0x18] sm:$0xff]
    %1402 = vmatpush.bf16.msra.mxu0 %v991
    %1403 = vmatpush.bf16.msra.mxu0 %v987
    %1404 = vmatpush.bf16.msra.mxu0 %v983
    %1405 = vmatpush.bf16.msra.mxu0 %v979
    %1406 = vmatpush.bf16.msra.mxu0 %v975
    %1407 = vmatpush.bf16.msra.mxu0 %v971
    %1408 = vmatpush.bf16.msra.mxu0 %v967
    %1409 = vmatpush.bf16.msra.mxu0 %v963
    %1410 = vmatmul.bf16.gmra.mxu0 %v1396
    %v1411 = vpop.f32.mrf.mxu0
    %v1412 = vadd.f32 0.0, %v1411
    %v1413 = vpop.f32.mrf.mxu0
    %1414 = vdwg.mxu0
    %1415 = vmatpush.bf16.msra.mxu0 %v992
    %1416 = vmatpush.bf16.msra.mxu0 %v988
    %1417 = vmatpush.bf16.msra.mxu0 %v984
    %1418 = vmatpush.bf16.msra.mxu0 %v980
    %1419 = vmatpush.bf16.msra.mxu0 %v976
    %1420 = vmatpush.bf16.msra.mxu0 %v972
    %1421 = vmatpush.bf16.msra.mxu0 %v968
    %1422 = vmatpush.bf16.msra.mxu0 %v964
    %1423 = vmatmul.bf16.gmra.mxu0 %v1396
    %v1424 = vpop.f32.mrf.mxu0
    %v1425 = vadd.f32 0.0, %v1424
    %v1426 = vpop.f32.mrf.mxu0
    %1427 = vdwg.mxu0
    %1428 = vmatpush.bf16.msra.mxu0 %v993
    %1429 = vmatpush.bf16.msra.mxu0 %v989
    %1430 = vmatpush.bf16.msra.mxu0 %v985
    %1431 = vmatpush.bf16.msra.mxu0 %v981
    %1432 = vmatpush.bf16.msra.mxu0 %v977
    %1433 = vmatpush.bf16.msra.mxu0 %v973
    %1434 = vmatpush.bf16.msra.mxu0 %v969
    %1435 = vmatpush.bf16.msra.mxu0 %v965
    %1436 = vmatmul.bf16.gmra.mxu0 %v1396
    %v1437 = vpop.f32.mrf.mxu0
    %v1438 = vadd.f32 0.0, %v1437
    %v1439 = vpop.f32.mrf.mxu0
    %1440 = vdwg.mxu0
    %1441 = vmatpush.bf16.msra.mxu0 %v994
    %1442 = vmatpush.bf16.msra.mxu0 %v990
    %1443 = vmatpush.bf16.msra.mxu0 %v986
    %1444 = vmatpush.bf16.msra.mxu0 %v982
    %1445 = vmatpush.bf16.msra.mxu0 %v978
    %1446 = vmatpush.bf16.msra.mxu0 %v974
    %1447 = vmatpush.bf16.msra.mxu0 %v970
    %1448 = vmatpush.bf16.msra.mxu0 %v966
    %1449 = vmatmul.bf16.gmra.mxu0 %v1396
    %v1450 = vpop.f32.mrf.mxu0
    %v1451 = vadd.f32 0.0, %v1450
    %v1452 = vpop.f32.mrf.mxu0
    %1453 = vdwg.mxu0
    %v1454 = vadd.f32 %v1398, %v1412
    %v1455 = vadd.f32 %v1399, %v1425
    %v1456 = vadd.f32 %v1400, %v1438
    %v1457 = vadd.f32 %v1401, %v1451
    %v1458 = vxor.u32 %v1454, 2147483648
    %v1459 = vmul.f32 %v1458, 1.442695
    %v1460 = vpow.pop %v1459
    %v1461 = vadd.f32 %v1460, 1.0
    %v1462 = vrcp.pop %v1461
    %v1463 = vmul.f32 %v1461, %v1462
    %v1464 = vsub.f32 1.0, %v1463
    %v1465 = vmul.f32 %v1462, %v1464
    %v1466 = vadd.f32 %v1462, %v1465
    %vm1467 = vweird.f32 %v1461
    %vm1468 = vweird.f32 %v1462
    %vm1469 = vmor %vm1467, %vm1468
    %v1470 = vsel %vm1469, %v1462, %v1466
    %v1471 = vand.u32 2147483647, %v1461
    %vm1472 = vcmp.eq.f32.partialorder %v1471, 8.507059e+37
    %v1473 = vand.u32 %v1461, 2147483648
    %v1474 = vor.u32 1.1754944e-38, %v1473
    %v1475 = vsel %vm1472, %v1474, %v1470
    %v1476 = vmul.f32 1.0, %v1475
    %v1477 = vxor.u32 %v1455, 2147483648
    %v1478 = vmul.f32 %v1477, 1.442695
    %v1479 = vpow.pop %v1478
    %v1480 = vadd.f32 %v1479, 1.0
    %v1481 = vrcp.pop %v1480
    %v1482 = vmul.f32 %v1480, %v1481
    %v1483 = vsub.f32 1.0, %v1482
    %v1484 = vmul.f32 %v1481, %v1483
    %v1485 = vadd.f32 %v1481, %v1484
    %vm1486 = vweird.f32 %v1480
    %vm1487 = vweird.f32 %v1481
    %vm1488 = vmor %vm1486, %vm1487
    %v1489 = vsel %vm1488, %v1481, %v1485
    %v1490 = vand.u32 2147483647, %v1480
    %vm1491 = vcmp.eq.f32.partialorder %v1490, 8.507059e+37
    %v1492 = vand.u32 %v1480, 2147483648
    %v1493 = vor.u32 1.1754944e-38, %v1492
    %v1494 = vsel %vm1491, %v1493, %v1489
    %v1495 = vmul.f32 1.0, %v1494
    %v1496 = vtanh.pop %v1456
    %v1497 = vxor.u32 %v1457, 2147483648
    %v1498 = vmul.f32 %v1497, 1.442695
    %v1499 = vpow.pop %v1498
    %v1500 = vadd.f32 %v1499, 1.0
    %v1501 = vrcp.pop %v1500
    %v1502 = vmul.f32 %v1500, %v1501
    %v1503 = vsub.f32 1.0, %v1502
    %v1504 = vmul.f32 %v1501, %v1503
    %v1505 = vadd.f32 %v1501, %v1504
    %vm1506 = vweird.f32 %v1500
    %vm1507 = vweird.f32 %v1501
    %vm1508 = vmor %vm1506, %vm1507
    %v1509 = vsel %vm1508, %v1501, %v1505
    %v1510 = vand.u32 2147483647, %v1500
    %vm1511 = vcmp.eq.f32.partialorder %v1510, 8.507059e+37
    %v1512 = vand.u32 %v1500, 2147483648
    %v1513 = vor.u32 1.1754944e-38, %v1512
    %v1514 = vsel %vm1511, %v1513, %v1509
    %v1515 = vmul.f32 1.0, %v1514
    %v1516 = vmul.f32 %v1495, %v1393
    %v1517 = vmul.f32 %v1476, %v1496
    %v1518 = vadd.f32 %v1516, %v1517
    %v1519 = vtanh.pop %v1518
    %v1520 = vmul.f32 %v1515, %v1519
    %v1521 = vpack.c.bf16 %v1520, %v1520
    %s1522 = scalar_lea.vmem [#allocation2], 128
    %v1523 = vld [vmem:[%s1522] sm:$0xff]
    %v1524 = vld [vmem:[%s1522 + $0x8] sm:$0xff]
    %v1525 = vld [vmem:[%s1522 + $0x10] sm:$0xff]
    %v1526 = vld [vmem:[%s1522 + $0x18] sm:$0xff]
    %1527 = vmatpush.bf16.msra.mxu0 %v991
    %1528 = vmatpush.bf16.msra.mxu0 %v987
    %1529 = vmatpush.bf16.msra.mxu0 %v983
    %1530 = vmatpush.bf16.msra.mxu0 %v979
    %1531 = vmatpush.bf16.msra.mxu0 %v975
    %1532 = vmatpush.bf16.msra.mxu0 %v971
    %1533 = vmatpush.bf16.msra.mxu0 %v967
    %1534 = vmatpush.bf16.msra.mxu0 %v963
    %1535 = vmatmul.bf16.gmra.mxu0 %v1521
    %v1536 = vpop.f32.mrf.mxu0
    %v1537 = vadd.f32 0.0, %v1536
    %v1538 = vpop.f32.mrf.mxu0
    %1539 = vdwg.mxu0
    %1540 = vmatpush.bf16.msra.mxu0 %v992
    %1541 = vmatpush.bf16.msra.mxu0 %v988
    %1542 = vmatpush.bf16.msra.mxu0 %v984
    %1543 = vmatpush.bf16.msra.mxu0 %v980
    %1544 = vmatpush.bf16.msra.mxu0 %v976
    %1545 = vmatpush.bf16.msra.mxu0 %v972
    %1546 = vmatpush.bf16.msra.mxu0 %v968
    %1547 = vmatpush.bf16.msra.mxu0 %v964
    %1548 = vmatmul.bf16.gmra.mxu0 %v1521
    %v1549 = vpop.f32.mrf.mxu0
    %v1550 = vadd.f32 0.0, %v1549
    %v1551 = vpop.f32.mrf.mxu0
    %1552 = vdwg.mxu0
    %1553 = vmatpush.bf16.msra.mxu0 %v993
    %1554 = vmatpush.bf16.msra.mxu0 %v989
    %1555 = vmatpush.bf16.msra.mxu0 %v985
    %1556 = vmatpush.bf16.msra.mxu0 %v981
    %1557 = vmatpush.bf16.msra.mxu0 %v977
    %1558 = vmatpush.bf16.msra.mxu0 %v973
    %1559 = vmatpush.bf16.msra.mxu0 %v969
    %1560 = vmatpush.bf16.msra.mxu0 %v965
    %1561 = vmatmul.bf16.gmra.mxu0 %v1521
    %v1562 = vpop.f32.mrf.mxu0
    %v1563 = vadd.f32 0.0, %v1562
    %v1564 = vpop.f32.mrf.mxu0
    %1565 = vdwg.mxu0
    %1566 = vmatpush.bf16.msra.mxu0 %v994
    %1567 = vmatpush.bf16.msra.mxu0 %v990
    %1568 = vmatpush.bf16.msra.mxu0 %v986
    %1569 = vmatpush.bf16.msra.mxu0 %v982
    %1570 = vmatpush.bf16.msra.mxu0 %v978
    %1571 = vmatpush.bf16.msra.mxu0 %v974
    %1572 = vmatpush.bf16.msra.mxu0 %v970
    %1573 = vmatpush.bf16.msra.mxu0 %v966
    %1574 = vmatmul.bf16.gmra.mxu0 %v1521
    %v1575 = vpop.f32.mrf.mxu0
    %v1576 = vadd.f32 0.0, %v1575
    %v1577 = vpop.f32.mrf.mxu0
    %1578 = vdwg.mxu0
    %v1579 = vadd.f32 %v1523, %v1537
    %v1580 = vadd.f32 %v1524, %v1550
    %v1581 = vadd.f32 %v1525, %v1563
    %v1582 = vadd.f32 %v1526, %v1576
    %v1583 = vxor.u32 %v1579, 2147483648
    %v1584 = vmul.f32 %v1583, 1.442695
    %v1585 = vpow.pop %v1584
    %v1586 = vadd.f32 %v1585, 1.0
    %v1587 = vrcp.pop %v1586
    %v1588 = vmul.f32 %v1586, %v1587
    %v1589 = vsub.f32 1.0, %v1588
    %v1590 = vmul.f32 %v1587, %v1589
    %v1591 = vadd.f32 %v1587, %v1590
    %vm1592 = vweird.f32 %v1586
    %vm1593 = vweird.f32 %v1587
    %vm1594 = vmor %vm1592, %vm1593
    %v1595 = vsel %vm1594, %v1587, %v1591
    %v1596 = vand.u32 2147483647, %v1586
    %vm1597 = vcmp.eq.f32.partialorder %v1596, 8.507059e+37
    %v1598 = vand.u32 %v1586, 2147483648
    %v1599 = vor.u32 1.1754944e-38, %v1598
    %v1600 = vsel %vm1597, %v1599, %v1595
    %v1601 = vmul.f32 1.0, %v1600
    %v1602 = vxor.u32 %v1580, 2147483648
    %v1603 = vmul.f32 %v1602, 1.442695
    %v1604 = vpow.pop %v1603
    %v1605 = vadd.f32 %v1604, 1.0
    %v1606 = vrcp.pop %v1605
    %v1607 = vmul.f32 %v1605, %v1606
    %v1608 = vsub.f32 1.0, %v1607
    %v1609 = vmul.f32 %v1606, %v1608
    %v1610 = vadd.f32 %v1606, %v1609
    %vm1611 = vweird.f32 %v1605
    %vm1612 = vweird.f32 %v1606
    %vm1613 = vmor %vm1611, %vm1612
    %v1614 = vsel %vm1613, %v1606, %v1610
    %v1615 = vand.u32 2147483647, %v1605
    %vm1616 = vcmp.eq.f32.partialorder %v1615, 8.507059e+37
    %v1617 = vand.u32 %v1605, 2147483648
    %v1618 = vor.u32 1.1754944e-38, %v1617
    %v1619 = vsel %vm1616, %v1618, %v1614
    %v1620 = vmul.f32 1.0, %v1619
    %v1621 = vtanh.pop %v1581
    %v1622 = vxor.u32 %v1582, 2147483648
    %v1623 = vmul.f32 %v1622, 1.442695
    %v1624 = vpow.pop %v1623
    %v1625 = vadd.f32 %v1624, 1.0
    %v1626 = vrcp.pop %v1625
    %v1627 = vmul.f32 %v1625, %v1626
    %v1628 = vsub.f32 1.0, %v1627
    %v1629 = vmul.f32 %v1626, %v1628
    %v1630 = vadd.f32 %v1626, %v1629
    %vm1631 = vweird.f32 %v1625
    %vm1632 = vweird.f32 %v1626
    %vm1633 = vmor %vm1631, %vm1632
    %v1634 = vsel %vm1633, %v1626, %v1630
    %v1635 = vand.u32 2147483647, %v1625
    %vm1636 = vcmp.eq.f32.partialorder %v1635, 8.507059e+37
    %v1637 = vand.u32 %v1625, 2147483648
    %v1638 = vor.u32 1.1754944e-38, %v1637
    %v1639 = vsel %vm1636, %v1638, %v1634
    %v1640 = vmul.f32 1.0, %v1639
    %v1641 = vmul.f32 %v1620, %v1518
    %v1642 = vmul.f32 %v1601, %v1621
    %v1643 = vadd.f32 %v1641, %v1642
    %v1644 = vtanh.pop %v1643
    %v1645 = vmul.f32 %v1640, %v1644
    %v1646 = vpack.c.bf16 %v1645, %v1645
    %s1647 = scalar_lea.vmem [#allocation2], 160
    %v1648 = vld [vmem:[%s1647] sm:$0xff]
    %v1649 = vld [vmem:[%s1647 + $0x8] sm:$0xff]
    %v1650 = vld [vmem:[%s1647 + $0x10] sm:$0xff]
    %v1651 = vld [vmem:[%s1647 + $0x18] sm:$0xff]
    %1652 = vmatpush.bf16.msra.mxu0 %v991
    %1653 = vmatpush.bf16.msra.mxu0 %v987
    %1654 = vmatpush.bf16.msra.mxu0 %v983
    %1655 = vmatpush.bf16.msra.mxu0 %v979
    %1656 = vmatpush.bf16.msra.mxu0 %v975
    %1657 = vmatpush.bf16.msra.mxu0 %v971
    %1658 = vmatpush.bf16.msra.mxu0 %v967
    %1659 = vmatpush.bf16.msra.mxu0 %v963
    %1660 = vmatmul.bf16.gmra.mxu0 %v1646
    %v1661 = vpop.f32.mrf.mxu0
    %v1662 = vadd.f32 0.0, %v1661
    %v1663 = vpop.f32.mrf.mxu0
    %1664 = vdwg.mxu0
    %1665 = vmatpush.bf16.msra.mxu0 %v992
    %1666 = vmatpush.bf16.msra.mxu0 %v988
    %1667 = vmatpush.bf16.msra.mxu0 %v984
    %1668 = vmatpush.bf16.msra.mxu0 %v980
    %1669 = vmatpush.bf16.msra.mxu0 %v976
    %1670 = vmatpush.bf16.msra.mxu0 %v972
    %1671 = vmatpush.bf16.msra.mxu0 %v968
    %1672 = vmatpush.bf16.msra.mxu0 %v964
    %1673 = vmatmul.bf16.gmra.mxu0 %v1646
    %v1674 = vpop.f32.mrf.mxu0
    %v1675 = vadd.f32 0.0, %v1674
    %v1676 = vpop.f32.mrf.mxu0
    %1677 = vdwg.mxu0
    %1678 = vmatpush.bf16.msra.mxu0 %v993
    %1679 = vmatpush.bf16.msra.mxu0 %v989
    %1680 = vmatpush.bf16.msra.mxu0 %v985
    %1681 = vmatpush.bf16.msra.mxu0 %v981
    %1682 = vmatpush.bf16.msra.mxu0 %v977
    %1683 = vmatpush.bf16.msra.mxu0 %v973
    %1684 = vmatpush.bf16.msra.mxu0 %v969
    %1685 = vmatpush.bf16.msra.mxu0 %v965
    %1686 = vmatmul.bf16.gmra.mxu0 %v1646
    %v1687 = vpop.f32.mrf.mxu0
    %v1688 = vadd.f32 0.0, %v1687
    %v1689 = vpop.f32.mrf.mxu0
    %1690 = vdwg.mxu0
    %1691 = vmatpush.bf16.msra.mxu0 %v994
    %1692 = vmatpush.bf16.msra.mxu0 %v990
    %1693 = vmatpush.bf16.msra.mxu0 %v986
    %1694 = vmatpush.bf16.msra.mxu0 %v982
    %1695 = vmatpush.bf16.msra.mxu0 %v978
    %1696 = vmatpush.bf16.msra.mxu0 %v974
    %1697 = vmatpush.bf16.msra.mxu0 %v970
    %1698 = vmatpush.bf16.msra.mxu0 %v966
    %1699 = vmatmul.bf16.gmra.mxu0 %v1646
    %v1700 = vpop.f32.mrf.mxu0
    %v1701 = vadd.f32 0.0, %v1700
    %v1702 = vpop.f32.mrf.mxu0
    %1703 = vdwg.mxu0
    %v1704 = vadd.f32 %v1648, %v1662
    %v1705 = vadd.f32 %v1649, %v1675
    %v1706 = vadd.f32 %v1650, %v1688
    %v1707 = vadd.f32 %v1651, %v1701
    %v1708 = vxor.u32 %v1704, 2147483648
    %v1709 = vmul.f32 %v1708, 1.442695
    %v1710 = vpow.pop %v1709
    %v1711 = vadd.f32 %v1710, 1.0
    %v1712 = vrcp.pop %v1711
    %v1713 = vmul.f32 %v1711, %v1712
    %v1714 = vsub.f32 1.0, %v1713
    %v1715 = vmul.f32 %v1712, %v1714
    %v1716 = vadd.f32 %v1712, %v1715
    %vm1717 = vweird.f32 %v1711
    %vm1718 = vweird.f32 %v1712
    %vm1719 = vmor %vm1717, %vm1718
    %v1720 = vsel %vm1719, %v1712, %v1716
    %v1721 = vand.u32 2147483647, %v1711
    %vm1722 = vcmp.eq.f32.partialorder %v1721, 8.507059e+37
    %v1723 = vand.u32 %v1711, 2147483648
    %v1724 = vor.u32 1.1754944e-38, %v1723
    %v1725 = vsel %vm1722, %v1724, %v1720
    %v1726 = vmul.f32 1.0, %v1725
    %v1727 = vxor.u32 %v1705, 2147483648
    %v1728 = vmul.f32 %v1727, 1.442695
    %v1729 = vpow.pop %v1728
    %v1730 = vadd.f32 %v1729, 1.0
    %v1731 = vrcp.pop %v1730
    %v1732 = vmul.f32 %v1730, %v1731
    %v1733 = vsub.f32 1.0, %v1732
    %v1734 = vmul.f32 %v1731, %v1733
    %v1735 = vadd.f32 %v1731, %v1734
    %vm1736 = vweird.f32 %v1730
    %vm1737 = vweird.f32 %v1731
    %vm1738 = vmor %vm1736, %vm1737
    %v1739 = vsel %vm1738, %v1731, %v1735
    %v1740 = vand.u32 2147483647, %v1730
    %vm1741 = vcmp.eq.f32.partialorder %v1740, 8.507059e+37
    %v1742 = vand.u32 %v1730, 2147483648
    %v1743 = vor.u32 1.1754944e-38, %v1742
    %v1744 = vsel %vm1741, %v1743, %v1739
    %v1745 = vmul.f32 1.0, %v1744
    %v1746 = vtanh.pop %v1706
    %v1747 = vxor.u32 %v1707, 2147483648
    %v1748 = vmul.f32 %v1747, 1.442695
    %v1749 = vpow.pop %v1748
    %v1750 = vadd.f32 %v1749, 1.0
    %v1751 = vrcp.pop %v1750
    %v1752 = vmul.f32 %v1750, %v1751
    %v1753 = vsub.f32 1.0, %v1752
    %v1754 = vmul.f32 %v1751, %v1753
    %v1755 = vadd.f32 %v1751, %v1754
    %vm1756 = vweird.f32 %v1750
    %vm1757 = vweird.f32 %v1751
    %vm1758 = vmor %vm1756, %vm1757
    %v1759 = vsel %vm1758, %v1751, %v1755
    %v1760 = vand.u32 2147483647, %v1750
    %vm1761 = vcmp.eq.f32.partialorder %v1760, 8.507059e+37
    %v1762 = vand.u32 %v1750, 2147483648
    %v1763 = vor.u32 1.1754944e-38, %v1762
    %v1764 = vsel %vm1761, %v1763, %v1759
    %v1765 = vmul.f32 1.0, %v1764
    %v1766 = vmul.f32 %v1745, %v1643
    %v1767 = vmul.f32 %v1726, %v1746
    %v1768 = vadd.f32 %v1766, %v1767
    %v1769 = vtanh.pop %v1768
    %v1770 = vmul.f32 %v1765, %v1769
    %v1771 = vpack.c.bf16 %v1770, %v1770
    %s1772 = scalar_lea.vmem [#allocation2], 192
    %v1773 = vld [vmem:[%s1772] sm:$0xff]
    %v1774 = vld [vmem:[%s1772 + $0x8] sm:$0xff]
    %v1775 = vld [vmem:[%s1772 + $0x10] sm:$0xff]
    %v1776 = vld [vmem:[%s1772 + $0x18] sm:$0xff]
    %1777 = vmatpush.bf16.msra.mxu0 %v991
    %1778 = vmatpush.bf16.msra.mxu0 %v987
    %1779 = vmatpush.bf16.msra.mxu0 %v983
    %1780 = vmatpush.bf16.msra.mxu0 %v979
    %1781 = vmatpush.bf16.msra.mxu0 %v975
    %1782 = vmatpush.bf16.msra.mxu0 %v971
    %1783 = vmatpush.bf16.msra.mxu0 %v967
    %1784 = vmatpush.bf16.msra.mxu0 %v963
    %1785 = vmatmul.bf16.gmra.mxu0 %v1771
    %v1786 = vpop.f32.mrf.mxu0
    %v1787 = vadd.f32 0.0, %v1786
    %v1788 = vpop.f32.mrf.mxu0
    %1789 = vdwg.mxu0
    %1790 = vmatpush.bf16.msra.mxu0 %v992
    %1791 = vmatpush.bf16.msra.mxu0 %v988
    %1792 = vmatpush.bf16.msra.mxu0 %v984
    %1793 = vmatpush.bf16.msra.mxu0 %v980
    %1794 = vmatpush.bf16.msra.mxu0 %v976
    %1795 = vmatpush.bf16.msra.mxu0 %v972
    %1796 = vmatpush.bf16.msra.mxu0 %v968
    %1797 = vmatpush.bf16.msra.mxu0 %v964
    %1798 = vmatmul.bf16.gmra.mxu0 %v1771
    %v1799 = vpop.f32.mrf.mxu0
    %v1800 = vadd.f32 0.0, %v1799
    %v1801 = vpop.f32.mrf.mxu0
    %1802 = vdwg.mxu0
    %1803 = vmatpush.bf16.msra.mxu0 %v993
    %1804 = vmatpush.bf16.msra.mxu0 %v989
    %1805 = vmatpush.bf16.msra.mxu0 %v985
    %1806 = vmatpush.bf16.msra.mxu0 %v981
    %1807 = vmatpush.bf16.msra.mxu0 %v977
    %1808 = vmatpush.bf16.msra.mxu0 %v973
    %1809 = vmatpush.bf16.msra.mxu0 %v969
    %1810 = vmatpush.bf16.msra.mxu0 %v965
    %1811 = vmatmul.bf16.gmra.mxu0 %v1771
    %v1812 = vpop.f32.mrf.mxu0
    %v1813 = vadd.f32 0.0, %v1812
    %v1814 = vpop.f32.mrf.mxu0
    %1815 = vdwg.mxu0
    %1816 = vmatpush.bf16.msra.mxu0 %v994
    %1817 = vmatpush.bf16.msra.mxu0 %v990
    %1818 = vmatpush.bf16.msra.mxu0 %v986
    %1819 = vmatpush.bf16.msra.mxu0 %v982
    %1820 = vmatpush.bf16.msra.mxu0 %v978
    %1821 = vmatpush.bf16.msra.mxu0 %v974
    %1822 = vmatpush.bf16.msra.mxu0 %v970
    %1823 = vmatpush.bf16.msra.mxu0 %v966
    %1824 = vmatmul.bf16.gmra.mxu0 %v1771
    %v1825 = vpop.f32.mrf.mxu0
    %v1826 = vadd.f32 0.0, %v1825
    %v1827 = vpop.f32.mrf.mxu0
    %1828 = vdwg.mxu0
    %v1829 = vadd.f32 %v1773, %v1787
    %v1830 = vadd.f32 %v1774, %v1800
    %v1831 = vadd.f32 %v1775, %v1813
    %v1832 = vadd.f32 %v1776, %v1826
    %v1833 = vxor.u32 %v1829, 2147483648
    %v1834 = vmul.f32 %v1833, 1.442695
    %v1835 = vpow.pop %v1834
    %v1836 = vadd.f32 %v1835, 1.0
    %v1837 = vrcp.pop %v1836
    %v1838 = vmul.f32 %v1836, %v1837
    %v1839 = vsub.f32 1.0, %v1838
    %v1840 = vmul.f32 %v1837, %v1839
    %v1841 = vadd.f32 %v1837, %v1840
    %vm1842 = vweird.f32 %v1836
    %vm1843 = vweird.f32 %v1837
    %vm1844 = vmor %vm1842, %vm1843
    %v1845 = vsel %vm1844, %v1837, %v1841
    %v1846 = vand.u32 2147483647, %v1836
    %vm1847 = vcmp.eq.f32.partialorder %v1846, 8.507059e+37
    %v1848 = vand.u32 %v1836, 2147483648
    %v1849 = vor.u32 1.1754944e-38, %v1848
    %v1850 = vsel %vm1847, %v1849, %v1845
    %v1851 = vmul.f32 1.0, %v1850
    %v1852 = vxor.u32 %v1830, 2147483648
    %v1853 = vmul.f32 %v1852, 1.442695
    %v1854 = vpow.pop %v1853
    %v1855 = vadd.f32 %v1854, 1.0
    %v1856 = vrcp.pop %v1855
    %v1857 = vmul.f32 %v1855, %v1856
    %v1858 = vsub.f32 1.0, %v1857
    %v1859 = vmul.f32 %v1856, %v1858
    %v1860 = vadd.f32 %v1856, %v1859
    %vm1861 = vweird.f32 %v1855
    %vm1862 = vweird.f32 %v1856
    %vm1863 = vmor %vm1861, %vm1862
    %v1864 = vsel %vm1863, %v1856, %v1860
    %v1865 = vand.u32 2147483647, %v1855
    %vm1866 = vcmp.eq.f32.partialorder %v1865, 8.507059e+37
    %v1867 = vand.u32 %v1855, 2147483648
    %v1868 = vor.u32 1.1754944e-38, %v1867
    %v1869 = vsel %vm1866, %v1868, %v1864
    %v1870 = vmul.f32 1.0, %v1869
    %v1871 = vtanh.pop %v1831
    %v1872 = vxor.u32 %v1832, 2147483648
    %v1873 = vmul.f32 %v1872, 1.442695
    %v1874 = vpow.pop %v1873
    %v1875 = vadd.f32 %v1874, 1.0
    %v1876 = vrcp.pop %v1875
    %v1877 = vmul.f32 %v1875, %v1876
    %v1878 = vsub.f32 1.0, %v1877
    %v1879 = vmul.f32 %v1876, %v1878
    %v1880 = vadd.f32 %v1876, %v1879
    %vm1881 = vweird.f32 %v1875
    %vm1882 = vweird.f32 %v1876
    %vm1883 = vmor %vm1881, %vm1882
    %v1884 = vsel %vm1883, %v1876, %v1880
    %v1885 = vand.u32 2147483647, %v1875
    %vm1886 = vcmp.eq.f32.partialorder %v1885, 8.507059e+37
    %v1887 = vand.u32 %v1875, 2147483648
    %v1888 = vor.u32 1.1754944e-38, %v1887
    %v1889 = vsel %vm1886, %v1888, %v1884
    %v1890 = vmul.f32 1.0, %v1889
    %v1891 = vmul.f32 %v1870, %v1768
    %v1892 = vmul.f32 %v1851, %v1871
    %v1893 = vadd.f32 %v1891, %v1892
    %v1894 = vtanh.pop %v1893
    %v1895 = vmul.f32 %v1890, %v1894
    %v1896 = vpack.c.bf16 %v1895, %v1895
    %s1897 = scalar_lea.vmem [#allocation2], 224
    %v1898 = vld [vmem:[%s1897] sm:$0xff]
    %v1899 = vld [vmem:[%s1897 + $0x8] sm:$0xff]
    %v1900 = vld [vmem:[%s1897 + $0x10] sm:$0xff]
    %v1901 = vld [vmem:[%s1897 + $0x18] sm:$0xff]
    %1902 = vmatpush.bf16.msra.mxu0 %v991
    %1903 = vmatpush.bf16.msra.mxu0 %v987
    %1904 = vmatpush.bf16.msra.mxu0 %v983
    %1905 = vmatpush.bf16.msra.mxu0 %v979
    %1906 = vmatpush.bf16.msra.mxu0 %v975
    %1907 = vmatpush.bf16.msra.mxu0 %v971
    %1908 = vmatpush.bf16.msra.mxu0 %v967
    %1909 = vmatpush.bf16.msra.mxu0 %v963
    %1910 = vmatmul.bf16.gmra.mxu0 %v1896
    %v1911 = vpop.f32.mrf.mxu0
    %v1912 = vadd.f32 0.0, %v1911
    %v1913 = vpop.f32.mrf.mxu0
    %1914 = vdwg.mxu0
    %1915 = vmatpush.bf16.msra.mxu0 %v992
    %1916 = vmatpush.bf16.msra.mxu0 %v988
    %1917 = vmatpush.bf16.msra.mxu0 %v984
    %1918 = vmatpush.bf16.msra.mxu0 %v980
    %1919 = vmatpush.bf16.msra.mxu0 %v976
    %1920 = vmatpush.bf16.msra.mxu0 %v972
    %1921 = vmatpush.bf16.msra.mxu0 %v968
    %1922 = vmatpush.bf16.msra.mxu0 %v964
    %1923 = vmatmul.bf16.gmra.mxu0 %v1896
    %v1924 = vpop.f32.mrf.mxu0
    %v1925 = vadd.f32 0.0, %v1924
    %v1926 = vpop.f32.mrf.mxu0
    %1927 = vdwg.mxu0
    %1928 = vmatpush.bf16.msra.mxu0 %v993
    %1929 = vmatpush.bf16.msra.mxu0 %v989
    %1930 = vmatpush.bf16.msra.mxu0 %v985
    %1931 = vmatpush.bf16.msra.mxu0 %v981
    %1932 = vmatpush.bf16.msra.mxu0 %v977
    %1933 = vmatpush.bf16.msra.mxu0 %v973
    %1934 = vmatpush.bf16.msra.mxu0 %v969
    %1935 = vmatpush.bf16.msra.mxu0 %v965
    %1936 = vmatmul.bf16.gmra.mxu0 %v1896
    %v1937 = vpop.f32.mrf.mxu0
    %v1938 = vadd.f32 0.0, %v1937
    %v1939 = vpop.f32.mrf.mxu0
    %1940 = vdwg.mxu0
    %1941 = vmatpush.bf16.msra.mxu0 %v994
    %1942 = vmatpush.bf16.msra.mxu0 %v990
    %1943 = vmatpush.bf16.msra.mxu0 %v986
    %1944 = vmatpush.bf16.msra.mxu0 %v982
    %1945 = vmatpush.bf16.msra.mxu0 %v978
    %1946 = vmatpush.bf16.msra.mxu0 %v974
    %1947 = vmatpush.bf16.msra.mxu0 %v970
    %1948 = vmatpush.bf16.msra.mxu0 %v966
    %1949 = vmatmul.bf16.gmra.mxu0 %v1896
    %v1950 = vpop.f32.mrf.mxu0
    %v1951 = vadd.f32 0.0, %v1950
    %v1952 = vpop.f32.mrf.mxu0
    %1953 = vdwg.mxu0
    %v1954 = vadd.f32 %v1898, %v1912
    %v1955 = vadd.f32 %v1899, %v1925
    %v1956 = vadd.f32 %v1900, %v1938
    %v1957 = vadd.f32 %v1901, %v1951
    %v1958 = vxor.u32 %v1954, 2147483648
    %v1959 = vmul.f32 %v1958, 1.442695
    %v1960 = vpow.pop %v1959
    %v1961 = vadd.f32 %v1960, 1.0
    %v1962 = vrcp.pop %v1961
    %v1963 = vmul.f32 %v1961, %v1962
    %v1964 = vsub.f32 1.0, %v1963
    %v1965 = vmul.f32 %v1962, %v1964
    %v1966 = vadd.f32 %v1962, %v1965
    %vm1967 = vweird.f32 %v1961
    %vm1968 = vweird.f32 %v1962
    %vm1969 = vmor %vm1967, %vm1968
    %v1970 = vsel %vm1969, %v1962, %v1966
    %v1971 = vand.u32 2147483647, %v1961
    %vm1972 = vcmp.eq.f32.partialorder %v1971, 8.507059e+37
    %v1973 = vand.u32 %v1961, 2147483648
    %v1974 = vor.u32 1.1754944e-38, %v1973
    %v1975 = vsel %vm1972, %v1974, %v1970
    %v1976 = vmul.f32 1.0, %v1975
    %v1977 = vxor.u32 %v1955, 2147483648
    %v1978 = vmul.f32 %v1977, 1.442695
    %v1979 = vpow.pop %v1978
    %v1980 = vadd.f32 %v1979, 1.0
    %v1981 = vrcp.pop %v1980
    %v1982 = vmul.f32 %v1980, %v1981
    %v1983 = vsub.f32 1.0, %v1982
    %v1984 = vmul.f32 %v1981, %v1983
    %v1985 = vadd.f32 %v1981, %v1984
    %vm1986 = vweird.f32 %v1980
    %vm1987 = vweird.f32 %v1981
    %vm1988 = vmor %vm1986, %vm1987
    %v1989 = vsel %vm1988, %v1981, %v1985
    %v1990 = vand.u32 2147483647, %v1980
    %vm1991 = vcmp.eq.f32.partialorder %v1990, 8.507059e+37
    %v1992 = vand.u32 %v1980, 2147483648
    %v1993 = vor.u32 1.1754944e-38, %v1992
    %v1994 = vsel %vm1991, %v1993, %v1989
    %v1995 = vmul.f32 1.0, %v1994
    %v1996 = vtanh.pop %v1956
    %v1997 = vxor.u32 %v1957, 2147483648
    %v1998 = vmul.f32 %v1997, 1.442695
    %v1999 = vpow.pop %v1998
    %v2000 = vadd.f32 %v1999, 1.0
    %v2001 = vrcp.pop %v2000
    %v2002 = vmul.f32 %v2000, %v2001
    %v2003 = vsub.f32 1.0, %v2002
    %v2004 = vmul.f32 %v2001, %v2003
    %v2005 = vadd.f32 %v2001, %v2004
    %vm2006 = vweird.f32 %v2000
    %vm2007 = vweird.f32 %v2001
    %vm2008 = vmor %vm2006, %vm2007
    %v2009 = vsel %vm2008, %v2001, %v2005
    %v2010 = vand.u32 2147483647, %v2000
    %vm2011 = vcmp.eq.f32.partialorder %v2010, 8.507059e+37
    %v2012 = vand.u32 %v2000, 2147483648
    %v2013 = vor.u32 1.1754944e-38, %v2012
    %v2014 = vsel %vm2011, %v2013, %v2009
    %v2015 = vmul.f32 1.0, %v2014
    %v2016 = vmul.f32 %v1995, %v1893
    %v2017 = vmul.f32 %v1976, %v1996
    %v2018 = vadd.f32 %v2016, %v2017
    %v2019 = vtanh.pop %v2018
    %v2020 = vmul.f32 %v2015, %v2019
    %v2021 = vpack.c.bf16 %v2020, %v2020
    %v2022 = vld [vmem:[#allocation3] sm:$0xff]
    %v2023 = vld [vmem:[#allocation3 + $0x8] sm:$0xff]
    %v2024 = vld [vmem:[#allocation3 + $0x10] sm:$0xff]
    %v2025 = vld [vmem:[#allocation3 + $0x18] sm:$0xff]
    %v2026 = vld [vmem:[#allocation7] sm:$0xff]
    %v2027 = vld [vmem:[#allocation7 + $0x8] sm:$0xff]
    %v2028 = vld [vmem:[#allocation7 + $0x10] sm:$0xff]
    %v2029 = vld [vmem:[#allocation7 + $0x18] sm:$0xff]
    %v2030 = vld [vmem:[#allocation7 + $0x20] sm:$0xff]
    %v2031 = vld [vmem:[#allocation7 + $0x28] sm:$0xff]
    %v2032 = vld [vmem:[#allocation7 + $0x30] sm:$0xff]
    %v2033 = vld [vmem:[#allocation7 + $0x38] sm:$0xff]
    %v2034 = vld [vmem:[#allocation7 + $0x40] sm:$0xff]
    %v2035 = vld [vmem:[#allocation7 + $0x48] sm:$0xff]
    %v2036 = vld [vmem:[#allocation7 + $0x50] sm:$0xff]
    %v2037 = vld [vmem:[#allocation7 + $0x58] sm:$0xff]
    %v2038 = vld [vmem:[#allocation7 + $0x60] sm:$0xff]
    %v2039 = vld [vmem:[#allocation7 + $0x68] sm:$0xff]
    %v2040 = vld [vmem:[#allocation7 + $0x70] sm:$0xff]
    %v2041 = vld [vmem:[#allocation7 + $0x78] sm:$0xff]
    %v2042 = vld [vmem:[#allocation7 + $0x80] sm:$0xff]
    %v2043 = vld [vmem:[#allocation7 + $0x88] sm:$0xff]
    %v2044 = vld [vmem:[#allocation7 + $0x90] sm:$0xff]
    %v2045 = vld [vmem:[#allocation7 + $0x98] sm:$0xff]
    %v2046 = vld [vmem:[#allocation7 + $0xa0] sm:$0xff]
    %v2047 = vld [vmem:[#allocation7 + $0xa8] sm:$0xff]
    %v2048 = vld [vmem:[#allocation7 + $0xb0] sm:$0xff]
    %v2049 = vld [vmem:[#allocation7 + $0xb8] sm:$0xff]
    %v2050 = vld [vmem:[#allocation7 + $0xc0] sm:$0xff]
    %v2051 = vld [vmem:[#allocation7 + $0xc8] sm:$0xff]
    %v2052 = vld [vmem:[#allocation7 + $0xd0] sm:$0xff]
    %v2053 = vld [vmem:[#allocation7 + $0xd8] sm:$0xff]
    %v2054 = vld [vmem:[#allocation7 + $0xe0] sm:$0xff]
    %v2055 = vld [vmem:[#allocation7 + $0xe8] sm:$0xff]
    %v2056 = vld [vmem:[#allocation7 + $0xf0] sm:$0xff]
    %v2057 = vld [vmem:[#allocation7 + $0xf8] sm:$0xff]
    %v2090 = vunpack.c.l.b16 %v2026
    %v2091 = vunpack.c.h.b16 %v2026
    %v2092 = vunpack.c.l.b16 %v2027
    %v2093 = vunpack.c.h.b16 %v2027
    %v2094 = vunpack.c.l.b16 %v2028
    %v2095 = vunpack.c.h.b16 %v2028
    %v2096 = vunpack.c.l.b16 %v2029
    %v2097 = vunpack.c.h.b16 %v2029
    %v2098 = vunpack.c.l.b16 %v2030
    %v2099 = vunpack.c.h.b16 %v2030
    %v2100 = vunpack.c.l.b16 %v2031
    %v2101 = vunpack.c.h.b16 %v2031
    %v2102 = vunpack.c.l.b16 %v2032
    %v2103 = vunpack.c.h.b16 %v2032
    %v2104 = vunpack.c.l.b16 %v2033
    %v2105 = vunpack.c.h.b16 %v2033
    %v2106 = vunpack.c.l.b16 %v2034
    %v2107 = vunpack.c.h.b16 %v2034
    %v2108 = vunpack.c.l.b16 %v2035
    %v2109 = vunpack.c.h.b16 %v2035
    %v2110 = vunpack.c.l.b16 %v2036
    %v2111 = vunpack.c.h.b16 %v2036
    %v2112 = vunpack.c.l.b16 %v2037
    %v2113 = vunpack.c.h.b16 %v2037
    %v2114 = vunpack.c.l.b16 %v2038
    %v2115 = vunpack.c.h.b16 %v2038
    %v2116 = vunpack.c.l.b16 %v2039
    %v2117 = vunpack.c.h.b16 %v2039
    %v2118 = vunpack.c.l.b16 %v2040
    %v2119 = vunpack.c.h.b16 %v2040
    %v2120 = vunpack.c.l.b16 %v2041
    %v2121 = vunpack.c.h.b16 %v2041
    %v2122 = vunpack.c.l.b16 %v2042
    %v2123 = vunpack.c.h.b16 %v2042
    %v2124 = vunpack.c.l.b16 %v2043
    %v2125 = vunpack.c.h.b16 %v2043
    %v2126 = vunpack.c.l.b16 %v2044
    %v2127 = vunpack.c.h.b16 %v2044
    %v2128 = vunpack.c.l.b16 %v2045
    %v2129 = vunpack.c.h.b16 %v2045
    %v2130 = vunpack.c.l.b16 %v2046
    %v2131 = vunpack.c.h.b16 %v2046
    %v2132 = vunpack.c.l.b16 %v2047
    %v2133 = vunpack.c.h.b16 %v2047
    %v2134 = vunpack.c.l.b16 %v2048
    %v2135 = vunpack.c.h.b16 %v2048
    %v2136 = vunpack.c.l.b16 %v2049
    %v2137 = vunpack.c.h.b16 %v2049
    %v2138 = vunpack.c.l.b16 %v2050
    %v2139 = vunpack.c.h.b16 %v2050
    %v2140 = vunpack.c.l.b16 %v2051
    %v2141 = vunpack.c.h.b16 %v2051
    %v2142 = vunpack.c.l.b16 %v2052
    %v2143 = vunpack.c.h.b16 %v2052
    %v2144 = vunpack.c.l.b16 %v2053
    %v2145 = vunpack.c.h.b16 %v2053
    %v2146 = vunpack.c.l.b16 %v2054
    %v2147 = vunpack.c.h.b16 %v2054
    %v2148 = vunpack.c.l.b16 %v2055
    %v2149 = vunpack.c.h.b16 %v2055
    %v2150 = vunpack.c.l.b16 %v2056
    %v2151 = vunpack.c.h.b16 %v2056
    %v2152 = vunpack.c.l.b16 %v2057
    %v2153 = vunpack.c.h.b16 %v2057
    %v2154 = vpack.c.b16 %v2094, %v2090
    %v2155 = vpack.c.b16 %v2095, %v2091
    %v2156 = vpack.c.b16 %v2096, %v2092
    %v2157 = vpack.c.b16 %v2097, %v2093
    %v2158 = vpack.c.b16 %v2102, %v2098
    %v2159 = vpack.c.b16 %v2103, %v2099
    %v2160 = vpack.c.b16 %v2104, %v2100
    %v2161 = vpack.c.b16 %v2105, %v2101
    %v2162 = vpack.c.b16 %v2110, %v2106
    %v2163 = vpack.c.b16 %v2111, %v2107
    %v2164 = vpack.c.b16 %v2112, %v2108
    %v2165 = vpack.c.b16 %v2113, %v2109
    %v2166 = vpack.c.b16 %v2118, %v2114
    %v2167 = vpack.c.b16 %v2119, %v2115
    %v2168 = vpack.c.b16 %v2120, %v2116
    %v2169 = vpack.c.b16 %v2121, %v2117
    %v2170 = vpack.c.b16 %v2126, %v2122
    %v2171 = vpack.c.b16 %v2127, %v2123
    %v2172 = vpack.c.b16 %v2128, %v2124
    %v2173 = vpack.c.b16 %v2129, %v2125
    %v2174 = vpack.c.b16 %v2134, %v2130
    %v2175 = vpack.c.b16 %v2135, %v2131
    %v2176 = vpack.c.b16 %v2136, %v2132
    %v2177 = vpack.c.b16 %v2137, %v2133
    %v2178 = vpack.c.b16 %v2142, %v2138
    %v2179 = vpack.c.b16 %v2143, %v2139
    %v2180 = vpack.c.b16 %v2144, %v2140
    %v2181 = vpack.c.b16 %v2145, %v2141
    %v2182 = vpack.c.b16 %v2150, %v2146
    %v2183 = vpack.c.b16 %v2151, %v2147
    %v2184 = vpack.c.b16 %v2152, %v2148
    %v2185 = vpack.c.b16 %v2153, %v2149
    %2218 = vmatpush.bf16.msra.mxu0 %v2182
    %2219 = vmatpush.bf16.msra.mxu0 %v2178
    %2220 = vmatpush.bf16.msra.mxu0 %v2174
    %2221 = vmatpush.bf16.msra.mxu0 %v2170
    %2222 = vmatpush.bf16.msra.mxu0 %v2166
    %2223 = vmatpush.bf16.msra.mxu0 %v2162
    %2224 = vmatpush.bf16.msra.mxu0 %v2158
    %2225 = vmatpush.bf16.msra.mxu0 %v2154
    %2226 = vmatmul.bf16.gmra.mxu0 %v2021
    %v2227 = vpop.f32.mrf.mxu0
    %v2228 = vadd.f32 0.0, %v2227
    %v2229 = vpop.f32.mrf.mxu0
    %2230 = vdwg.mxu0
    %2231 = vmatpush.bf16.msra.mxu0 %v2183
    %2232 = vmatpush.bf16.msra.mxu0 %v2179
    %2233 = vmatpush.bf16.msra.mxu0 %v2175
    %2234 = vmatpush.bf16.msra.mxu0 %v2171
    %2235 = vmatpush.bf16.msra.mxu0 %v2167
    %2236 = vmatpush.bf16.msra.mxu0 %v2163
    %2237 = vmatpush.bf16.msra.mxu0 %v2159
    %2238 = vmatpush.bf16.msra.mxu0 %v2155
    %2239 = vmatmul.bf16.gmra.mxu0 %v2021
    %v2240 = vpop.f32.mrf.mxu0
    %v2241 = vadd.f32 0.0, %v2240
    %v2242 = vpop.f32.mrf.mxu0
    %2243 = vdwg.mxu0
    %2244 = vmatpush.bf16.msra.mxu0 %v2184
    %2245 = vmatpush.bf16.msra.mxu0 %v2180
    %2246 = vmatpush.bf16.msra.mxu0 %v2176
    %2247 = vmatpush.bf16.msra.mxu0 %v2172
    %2248 = vmatpush.bf16.msra.mxu0 %v2168
    %2249 = vmatpush.bf16.msra.mxu0 %v2164
    %2250 = vmatpush.bf16.msra.mxu0 %v2160
    %2251 = vmatpush.bf16.msra.mxu0 %v2156
    %2252 = vmatmul.bf16.gmra.mxu0 %v2021
    %v2253 = vpop.f32.mrf.mxu0
    %v2254 = vadd.f32 0.0, %v2253
    %v2255 = vpop.f32.mrf.mxu0
    %2256 = vdwg.mxu0
    %2257 = vmatpush.bf16.msra.mxu0 %v2185
    %2258 = vmatpush.bf16.msra.mxu0 %v2181
    %2259 = vmatpush.bf16.msra.mxu0 %v2177
    %2260 = vmatpush.bf16.msra.mxu0 %v2173
    %2261 = vmatpush.bf16.msra.mxu0 %v2169
    %2262 = vmatpush.bf16.msra.mxu0 %v2165
    %2263 = vmatpush.bf16.msra.mxu0 %v2161
    %2264 = vmatpush.bf16.msra.mxu0 %v2157
    %2265 = vmatmul.bf16.gmra.mxu0 %v2021
    %v2266 = vpop.f32.mrf.mxu0
    %v2267 = vadd.f32 0.0, %v2266
    %v2268 = vpop.f32.mrf.mxu0
    %2269 = vdwg.mxu0
    %v2270 = vadd.f32 %v2022, %v2228
    %v2271 = vadd.f32 %v2023, %v2241
    %v2272 = vadd.f32 %v2024, %v2254
    %v2273 = vadd.f32 %v2025, %v2267
    %v2274 = vxor.u32 %v2270, 2147483648
    %v2275 = vmul.f32 %v2274, 1.442695
    %v2276 = vpow.pop %v2275
    %v2277 = vadd.f32 %v2276, 1.0
    %v2278 = vrcp.pop %v2277
    %v2279 = vmul.f32 %v2277, %v2278
    %v2280 = vsub.f32 1.0, %v2279
    %v2281 = vmul.f32 %v2278, %v2280
    %v2282 = vadd.f32 %v2278, %v2281
    %vm2283 = vweird.f32 %v2277
    %vm2284 = vweird.f32 %v2278
    %vm2285 = vmor %vm2283, %vm2284
    %v2286 = vsel %vm2285, %v2278, %v2282
    %v2287 = vand.u32 2147483647, %v2277
    %vm2288 = vcmp.eq.f32.partialorder %v2287, 8.507059e+37
    %v2289 = vand.u32 %v2277, 2147483648
    %v2290 = vor.u32 1.1754944e-38, %v2289
    %v2291 = vsel %vm2288, %v2290, %v2286
    %v2292 = vmul.f32 1.0, %v2291
    %v2293 = vxor.u32 %v2271, 2147483648
    %v2294 = vmul.f32 %v2293, 1.442695
    %v2295 = vpow.pop %v2294
    %v2296 = vadd.f32 %v2295, 1.0
    %v2297 = vrcp.pop %v2296
    %v2298 = vmul.f32 %v2296, %v2297
    %v2299 = vsub.f32 1.0, %v2298
    %v2300 = vmul.f32 %v2297, %v2299
    %v2301 = vadd.f32 %v2297, %v2300
    %vm2302 = vweird.f32 %v2296
    %vm2303 = vweird.f32 %v2297
    %vm2304 = vmor %vm2302, %vm2303
    %v2305 = vsel %vm2304, %v2297, %v2301
    %v2306 = vand.u32 2147483647, %v2296
    %vm2307 = vcmp.eq.f32.partialorder %v2306, 8.507059e+37
    %v2308 = vand.u32 %v2296, 2147483648
    %v2309 = vor.u32 1.1754944e-38, %v2308
    %v2310 = vsel %vm2307, %v2309, %v2305
    %v2311 = vmul.f32 1.0, %v2310
    %v2312 = vtanh.pop %v2272
    %v2313 = vxor.u32 %v2273, 2147483648
    %v2314 = vmul.f32 %v2313, 1.442695
    %v2315 = vpow.pop %v2314
    %v2316 = vadd.f32 %v2315, 1.0
    %v2317 = vrcp.pop %v2316
    %v2318 = vmul.f32 %v2316, %v2317
    %v2319 = vsub.f32 1.0, %v2318
    %v2320 = vmul.f32 %v2317, %v2319
    %v2321 = vadd.f32 %v2317, %v2320
    %vm2322 = vweird.f32 %v2316
    %vm2323 = vweird.f32 %v2317
    %vm2324 = vmor %vm2322, %vm2323
    %v2325 = vsel %vm2324, %v2317, %v2321
    %v2326 = vand.u32 2147483647, %v2316
    %vm2327 = vcmp.eq.f32.partialorder %v2326, 8.507059e+37
    %v2328 = vand.u32 %v2316, 2147483648
    %v2329 = vor.u32 1.1754944e-38, %v2328
    %v2330 = vsel %vm2327, %v2329, %v2325
    %v2331 = vmul.f32 1.0, %v2330
    %v2332 = vmul.f32 %v2311, %v2018
    %v2333 = vmul.f32 %v2292, %v2312
    %v2334 = vadd.f32 %v2332, %v2333
    %v2335 = vtanh.pop %v2334
    %v2336 = vmul.f32 %v2331, %v2335
    %2337 = vst [vmem:[%s8] sm:$0xff] %v2336
    %v2338 = vpack.c.bf16 %v2336, %v2336
    %s2339 = scalar_lea.vmem [#allocation3], 32
    %v2340 = vld [vmem:[%s2339] sm:$0xff]
    %v2341 = vld [vmem:[%s2339 + $0x8] sm:$0xff]
    %v2342 = vld [vmem:[%s2339 + $0x10] sm:$0xff]
    %v2343 = vld [vmem:[%s2339 + $0x18] sm:$0xff]
    %v2344 = vld [vmem:[#allocation7] sm:$0xff]
    %v2345 = vld [vmem:[#allocation7 + $0x8] sm:$0xff]
    %v2346 = vld [vmem:[#allocation7 + $0x10] sm:$0xff]
    %v2347 = vld [vmem:[#allocation7 + $0x18] sm:$0xff]
    %v2348 = vld [vmem:[#allocation7 + $0x20] sm:$0xff]
    %v2349 = vld [vmem:[#allocation7 + $0x28] sm:$0xff]
    %v2350 = vld [vmem:[#allocation7 + $0x30] sm:$0xff]
    %v2351 = vld [vmem:[#allocation7 + $0x38] sm:$0xff]
    %v2352 = vld [vmem:[#allocation7 + $0x40] sm:$0xff]
    %v2353 = vld [vmem:[#allocation7 + $0x48] sm:$0xff]
    %v2354 = vld [vmem:[#allocation7 + $0x50] sm:$0xff]
    %v2355 = vld [vmem:[#allocation7 + $0x58] sm:$0xff]
    %v2356 = vld [vmem:[#allocation7 + $0x60] sm:$0xff]
    %v2357 = vld [vmem:[#allocation7 + $0x68] sm:$0xff]
    %v2358 = vld [vmem:[#allocation7 + $0x70] sm:$0xff]
    %v2359 = vld [vmem:[#allocation7 + $0x78] sm:$0xff]
    %v2360 = vld [vmem:[#allocation7 + $0x80] sm:$0xff]
    %v2361 = vld [vmem:[#allocation7 + $0x88] sm:$0xff]
    %v2362 = vld [vmem:[#allocation7 + $0x90] sm:$0xff]
    %v2363 = vld [vmem:[#allocation7 + $0x98] sm:$0xff]
    %v2364 = vld [vmem:[#allocation7 + $0xa0] sm:$0xff]
    %v2365 = vld [vmem:[#allocation7 + $0xa8] sm:$0xff]
    %v2366 = vld [vmem:[#allocation7 + $0xb0] sm:$0xff]
    %v2367 = vld [vmem:[#allocation7 + $0xb8] sm:$0xff]
    %v2368 = vld [vmem:[#allocation7 + $0xc0] sm:$0xff]
    %v2369 = vld [vmem:[#allocation7 + $0xc8] sm:$0xff]
    %v2370 = vld [vmem:[#allocation7 + $0xd0] sm:$0xff]
    %v2371 = vld [vmem:[#allocation7 + $0xd8] sm:$0xff]
    %v2372 = vld [vmem:[#allocation7 + $0xe0] sm:$0xff]
    %v2373 = vld [vmem:[#allocation7 + $0xe8] sm:$0xff]
    %v2374 = vld [vmem:[#allocation7 + $0xf0] sm:$0xff]
    %v2375 = vld [vmem:[#allocation7 + $0xf8] sm:$0xff]
    %v2408 = vunpack.c.l.b16 %v2344
    %v2409 = vunpack.c.h.b16 %v2344
    %v2410 = vunpack.c.l.b16 %v2345
    %v2411 = vunpack.c.h.b16 %v2345
    %v2412 = vunpack.c.l.b16 %v2346
    %v2413 = vunpack.c.h.b16 %v2346
    %v2414 = vunpack.c.l.b16 %v2347
    %v2415 = vunpack.c.h.b16 %v2347
    %v2416 = vunpack.c.l.b16 %v2348
    %v2417 = vunpack.c.h.b16 %v2348
    %v2418 = vunpack.c.l.b16 %v2349
    %v2419 = vunpack.c.h.b16 %v2349
    %v2420 = vunpack.c.l.b16 %v2350
    %v2421 = vunpack.c.h.b16 %v2350
    %v2422 = vunpack.c.l.b16 %v2351
    %v2423 = vunpack.c.h.b16 %v2351
    %v2424 = vunpack.c.l.b16 %v2352
    %v2425 = vunpack.c.h.b16 %v2352
    %v2426 = vunpack.c.l.b16 %v2353
    %v2427 = vunpack.c.h.b16 %v2353
    %v2428 = vunpack.c.l.b16 %v2354
    %v2429 = vunpack.c.h.b16 %v2354
    %v2430 = vunpack.c.l.b16 %v2355
    %v2431 = vunpack.c.h.b16 %v2355
    %v2432 = vunpack.c.l.b16 %v2356
    %v2433 = vunpack.c.h.b16 %v2356
    %v2434 = vunpack.c.l.b16 %v2357
    %v2435 = vunpack.c.h.b16 %v2357
    %v2436 = vunpack.c.l.b16 %v2358
    %v2437 = vunpack.c.h.b16 %v2358
    %v2438 = vunpack.c.l.b16 %v2359
    %v2439 = vunpack.c.h.b16 %v2359
    %v2440 = vunpack.c.l.b16 %v2360
    %v2441 = vunpack.c.h.b16 %v2360
    %v2442 = vunpack.c.l.b16 %v2361
    %v2443 = vunpack.c.h.b16 %v2361
    %v2444 = vunpack.c.l.b16 %v2362
    %v2445 = vunpack.c.h.b16 %v2362
    %v2446 = vunpack.c.l.b16 %v2363
    %v2447 = vunpack.c.h.b16 %v2363
    %v2448 = vunpack.c.l.b16 %v2364
    %v2449 = vunpack.c.h.b16 %v2364
    %v2450 = vunpack.c.l.b16 %v2365
    %v2451 = vunpack.c.h.b16 %v2365
    %v2452 = vunpack.c.l.b16 %v2366
    %v2453 = vunpack.c.h.b16 %v2366
    %v2454 = vunpack.c.l.b16 %v2367
    %v2455 = vunpack.c.h.b16 %v2367
    %v2456 = vunpack.c.l.b16 %v2368
    %v2457 = vunpack.c.h.b16 %v2368
    %v2458 = vunpack.c.l.b16 %v2369
    %v2459 = vunpack.c.h.b16 %v2369
    %v2460 = vunpack.c.l.b16 %v2370
    %v2461 = vunpack.c.h.b16 %v2370
    %v2462 = vunpack.c.l.b16 %v2371
    %v2463 = vunpack.c.h.b16 %v2371
    %v2464 = vunpack.c.l.b16 %v2372
    %v2465 = vunpack.c.h.b16 %v2372
    %v2466 = vunpack.c.l.b16 %v2373
    %v2467 = vunpack.c.h.b16 %v2373
    %v2468 = vunpack.c.l.b16 %v2374
    %v2469 = vunpack.c.h.b16 %v2374
    %v2470 = vunpack.c.l.b16 %v2375
    %v2471 = vunpack.c.h.b16 %v2375
    %v2472 = vpack.c.b16 %v2412, %v2408
    %v2473 = vpack.c.b16 %v2413, %v2409
    %v2474 = vpack.c.b16 %v2414, %v2410
    %v2475 = vpack.c.b16 %v2415, %v2411
    %v2476 = vpack.c.b16 %v2420, %v2416
    %v2477 = vpack.c.b16 %v2421, %v2417
    %v2478 = vpack.c.b16 %v2422, %v2418
    %v2479 = vpack.c.b16 %v2423, %v2419
    %v2480 = vpack.c.b16 %v2428, %v2424
    %v2481 = vpack.c.b16 %v2429, %v2425
    %v2482 = vpack.c.b16 %v2430, %v2426
    %v2483 = vpack.c.b16 %v2431, %v2427
    %v2484 = vpack.c.b16 %v2436, %v2432
    %v2485 = vpack.c.b16 %v2437, %v2433
    %v2486 = vpack.c.b16 %v2438, %v2434
    %v2487 = vpack.c.b16 %v2439, %v2435
    %v2488 = vpack.c.b16 %v2444, %v2440
    %v2489 = vpack.c.b16 %v2445, %v2441
    %v2490 = vpack.c.b16 %v2446, %v2442
    %v2491 = vpack.c.b16 %v2447, %v2443
    %v2492 = vpack.c.b16 %v2452, %v2448
    %v2493 = vpack.c.b16 %v2453, %v2449
    %v2494 = vpack.c.b16 %v2454, %v2450
    %v2495 = vpack.c.b16 %v2455, %v2451
    %v2496 = vpack.c.b16 %v2460, %v2456
    %v2497 = vpack.c.b16 %v2461, %v2457
    %v2498 = vpack.c.b16 %v2462, %v2458
    %v2499 = vpack.c.b16 %v2463, %v2459
    %v2500 = vpack.c.b16 %v2468, %v2464
    %v2501 = vpack.c.b16 %v2469, %v2465
    %v2502 = vpack.c.b16 %v2470, %v2466
    %v2503 = vpack.c.b16 %v2471, %v2467
    %2536 = vmatpush.bf16.msra.mxu0 %v2500
    %2537 = vmatpush.bf16.msra.mxu0 %v2496
    %2538 = vmatpush.bf16.msra.mxu0 %v2492
    %2539 = vmatpush.bf16.msra.mxu0 %v2488
    %2540 = vmatpush.bf16.msra.mxu0 %v2484
    %2541 = vmatpush.bf16.msra.mxu0 %v2480
    %2542 = vmatpush.bf16.msra.mxu0 %v2476
    %2543 = vmatpush.bf16.msra.mxu0 %v2472
    %2544 = vmatmul.bf16.gmra.mxu0 %v2338
    %v2545 = vpop.f32.mrf.mxu0
    %v2546 = vadd.f32 0.0, %v2545
    %v2547 = vpop.f32.mrf.mxu0
    %2548 = vdwg.mxu0
    %2549 = vmatpush.bf16.msra.mxu0 %v2501
    %2550 = vmatpush.bf16.msra.mxu0 %v2497
    %2551 = vmatpush.bf16.msra.mxu0 %v2493
    %2552 = vmatpush.bf16.msra.mxu0 %v2489
    %2553 = vmatpush.bf16.msra.mxu0 %v2485
    %2554 = vmatpush.bf16.msra.mxu0 %v2481
    %2555 = vmatpush.bf16.msra.mxu0 %v2477
    %2556 = vmatpush.bf16.msra.mxu0 %v2473
    %2557 = vmatmul.bf16.gmra.mxu0 %v2338
    %v2558 = vpop.f32.mrf.mxu0
    %v2559 = vadd.f32 0.0, %v2558
    %v2560 = vpop.f32.mrf.mxu0
    %2561 = vdwg.mxu0
    %2562 = vmatpush.bf16.msra.mxu0 %v2502
    %2563 = vmatpush.bf16.msra.mxu0 %v2498
    %2564 = vmatpush.bf16.msra.mxu0 %v2494
    %2565 = vmatpush.bf16.msra.mxu0 %v2490
    %2566 = vmatpush.bf16.msra.mxu0 %v2486
    %2567 = vmatpush.bf16.msra.mxu0 %v2482
    %2568 = vmatpush.bf16.msra.mxu0 %v2478
    %2569 = vmatpush.bf16.msra.mxu0 %v2474
    %2570 = vmatmul.bf16.gmra.mxu0 %v2338
    %v2571 = vpop.f32.mrf.mxu0
    %v2572 = vadd.f32 0.0, %v2571
    %v2573 = vpop.f32.mrf.mxu0
    %2574 = vdwg.mxu0
    %2575 = vmatpush.bf16.msra.mxu0 %v2503
    %2576 = vmatpush.bf16.msra.mxu0 %v2499
    %2577 = vmatpush.bf16.msra.mxu0 %v2495
    %2578 = vmatpush.bf16.msra.mxu0 %v2491
    %2579 = vmatpush.bf16.msra.mxu0 %v2487
    %2580 = vmatpush.bf16.msra.mxu0 %v2483
    %2581 = vmatpush.bf16.msra.mxu0 %v2479
    %2582 = vmatpush.bf16.msra.mxu0 %v2475
    %2583 = vmatmul.bf16.gmra.mxu0 %v2338
    %v2584 = vpop.f32.mrf.mxu0
    %v2585 = vadd.f32 0.0, %v2584
    %v2586 = vpop.f32.mrf.mxu0
    %2587 = vdwg.mxu0
    %v2588 = vadd.f32 %v2340, %v2546
    %v2589 = vadd.f32 %v2341, %v2559
    %v2590 = vadd.f32 %v2342, %v2572
    %v2591 = vadd.f32 %v2343, %v2585
    %v2592 = vxor.u32 %v2588, 2147483648
    %v2593 = vmul.f32 %v2592, 1.442695
    %v2594 = vpow.pop %v2593
    %v2595 = vadd.f32 %v2594, 1.0
    %v2596 = vrcp.pop %v2595
    %v2597 = vmul.f32 %v2595, %v2596
    %v2598 = vsub.f32 1.0, %v2597
    %v2599 = vmul.f32 %v2596, %v2598
    %v2600 = vadd.f32 %v2596, %v2599
    %vm2601 = vweird.f32 %v2595
    %vm2602 = vweird.f32 %v2596
    %vm2603 = vmor %vm2601, %vm2602
    %v2604 = vsel %vm2603, %v2596, %v2600
    %v2605 = vand.u32 2147483647, %v2595
    %vm2606 = vcmp.eq.f32.partialorder %v2605, 8.507059e+37
    %v2607 = vand.u32 %v2595, 2147483648
    %v2608 = vor.u32 1.1754944e-38, %v2607
    %v2609 = vsel %vm2606, %v2608, %v2604
    %v2610 = vmul.f32 1.0, %v2609
    %v2611 = vxor.u32 %v2589, 2147483648
    %v2612 = vmul.f32 %v2611, 1.442695
    %v2613 = vpow.pop %v2612
    %v2614 = vadd.f32 %v2613, 1.0
    %v2615 = vrcp.pop %v2614
    %v2616 = vmul.f32 %v2614, %v2615
    %v2617 = vsub.f32 1.0, %v2616
    %v2618 = vmul.f32 %v2615, %v2617
    %v2619 = vadd.f32 %v2615, %v2618
    %vm2620 = vweird.f32 %v2614
    %vm2621 = vweird.f32 %v2615
    %vm2622 = vmor %vm2620, %vm2621
    %v2623 = vsel %vm2622, %v2615, %v2619
    %v2624 = vand.u32 2147483647, %v2614
    %vm2625 = vcmp.eq.f32.partialorder %v2624, 8.507059e+37
    %v2626 = vand.u32 %v2614, 2147483648
    %v2627 = vor.u32 1.1754944e-38, %v2626
    %v2628 = vsel %vm2625, %v2627, %v2623
    %v2629 = vmul.f32 1.0, %v2628
    %v2630 = vtanh.pop %v2590
    %v2631 = vxor.u32 %v2591, 2147483648
    %v2632 = vmul.f32 %v2631, 1.442695
    %v2633 = vpow.pop %v2632
    %v2634 = vadd.f32 %v2633, 1.0
    %v2635 = vrcp.pop %v2634
    %v2636 = vmul.f32 %v2634, %v2635
    %v2637 = vsub.f32 1.0, %v2636
    %v2638 = vmul.f32 %v2635, %v2637
    %v2639 = vadd.f32 %v2635, %v2638
    %vm2640 = vweird.f32 %v2634
    %vm2641 = vweird.f32 %v2635
    %vm2642 = vmor %vm2640, %vm2641
    %v2643 = vsel %vm2642, %v2635, %v2639
    %v2644 = vand.u32 2147483647, %v2634
    %vm2645 = vcmp.eq.f32.partialorder %v2644, 8.507059e+37
    %v2646 = vand.u32 %v2634, 2147483648
    %v2647 = vor.u32 1.1754944e-38, %v2646
    %v2648 = vsel %vm2645, %v2647, %v2643
    %v2649 = vmul.f32 1.0, %v2648
    %v2650 = vmul.f32 %v2629, %v2334
    %v2651 = vmul.f32 %v2610, %v2630
    %v2652 = vadd.f32 %v2650, %v2651
    %v2653 = vtanh.pop %v2652
    %v2654 = vmul.f32 %v2649, %v2653
    %s2655 = scalar_lea.vmem %s8, 8
    %2656 = vst [vmem:[%s2655] sm:$0xff] %v2654
    %v2657 = vpack.c.bf16 %v2654, %v2654
    %s2658 = scalar_lea.vmem [#allocation3], 64
    %v2659 = vld [vmem:[%s2658] sm:$0xff]
    %v2660 = vld [vmem:[%s2658 + $0x8] sm:$0xff]
    %v2661 = vld [vmem:[%s2658 + $0x10] sm:$0xff]
    %v2662 = vld [vmem:[%s2658 + $0x18] sm:$0xff]
    %v2663 = vld [vmem:[#allocation7] sm:$0xff]
    %v2664 = vld [vmem:[#allocation7 + $0x8] sm:$0xff]
    %v2665 = vld [vmem:[#allocation7 + $0x10] sm:$0xff]
    %v2666 = vld [vmem:[#allocation7 + $0x18] sm:$0xff]
    %v2667 = vld [vmem:[#allocation7 + $0x20] sm:$0xff]
    %v2668 = vld [vmem:[#allocation7 + $0x28] sm:$0xff]
    %v2669 = vld [vmem:[#allocation7 + $0x30] sm:$0xff]
    %v2670 = vld [vmem:[#allocation7 + $0x38] sm:$0xff]
    %v2671 = vld [vmem:[#allocation7 + $0x40] sm:$0xff]
    %v2672 = vld [vmem:[#allocation7 + $0x48] sm:$0xff]
    %v2673 = vld [vmem:[#allocation7 + $0x50] sm:$0xff]
    %v2674 = vld [vmem:[#allocation7 + $0x58] sm:$0xff]
    %v2675 = vld [vmem:[#allocation7 + $0x60] sm:$0xff]
    %v2676 = vld [vmem:[#allocation7 + $0x68] sm:$0xff]
    %v2677 = vld [vmem:[#allocation7 + $0x70] sm:$0xff]
    %v2678 = vld [vmem:[#allocation7 + $0x78] sm:$0xff]
    %v2679 = vld [vmem:[#allocation7 + $0x80] sm:$0xff]
    %v2680 = vld [vmem:[#allocation7 + $0x88] sm:$0xff]
    %v2681 = vld [vmem:[#allocation7 + $0x90] sm:$0xff]
    %v2682 = vld [vmem:[#allocation7 + $0x98] sm:$0xff]
    %v2683 = vld [vmem:[#allocation7 + $0xa0] sm:$0xff]
    %v2684 = vld [vmem:[#allocation7 + $0xa8] sm:$0xff]
    %v2685 = vld [vmem:[#allocation7 + $0xb0] sm:$0xff]
    %v2686 = vld [vmem:[#allocation7 + $0xb8] sm:$0xff]
    %v2687 = vld [vmem:[#allocation7 + $0xc0] sm:$0xff]
    %v2688 = vld [vmem:[#allocation7 + $0xc8] sm:$0xff]
    %v2689 = vld [vmem:[#allocation7 + $0xd0] sm:$0xff]
    %v2690 = vld [vmem:[#allocation7 + $0xd8] sm:$0xff]
    %v2691 = vld [vmem:[#allocation7 + $0xe0] sm:$0xff]
    %v2692 = vld [vmem:[#allocation7 + $0xe8] sm:$0xff]
    %v2693 = vld [vmem:[#allocation7 + $0xf0] sm:$0xff]
    %v2694 = vld [vmem:[#allocation7 + $0xf8] sm:$0xff]
    %v2727 = vunpack.c.l.b16 %v2663
    %v2728 = vunpack.c.h.b16 %v2663
    %v2729 = vunpack.c.l.b16 %v2664
    %v2730 = vunpack.c.h.b16 %v2664
    %v2731 = vunpack.c.l.b16 %v2665
    %v2732 = vunpack.c.h.b16 %v2665
    %v2733 = vunpack.c.l.b16 %v2666
    %v2734 = vunpack.c.h.b16 %v2666
    %v2735 = vunpack.c.l.b16 %v2667
    %v2736 = vunpack.c.h.b16 %v2667
    %v2737 = vunpack.c.l.b16 %v2668
    %v2738 = vunpack.c.h.b16 %v2668
    %v2739 = vunpack.c.l.b16 %v2669
    %v2740 = vunpack.c.h.b16 %v2669
    %v2741 = vunpack.c.l.b16 %v2670
    %v2742 = vunpack.c.h.b16 %v2670
    %v2743 = vunpack.c.l.b16 %v2671
    %v2744 = vunpack.c.h.b16 %v2671
    %v2745 = vunpack.c.l.b16 %v2672
    %v2746 = vunpack.c.h.b16 %v2672
    %v2747 = vunpack.c.l.b16 %v2673
    %v2748 = vunpack.c.h.b16 %v2673
    %v2749 = vunpack.c.l.b16 %v2674
    %v2750 = vunpack.c.h.b16 %v2674
    %v2751 = vunpack.c.l.b16 %v2675
    %v2752 = vunpack.c.h.b16 %v2675
    %v2753 = vunpack.c.l.b16 %v2676
    %v2754 = vunpack.c.h.b16 %v2676
    %v2755 = vunpack.c.l.b16 %v2677
    %v2756 = vunpack.c.h.b16 %v2677
    %v2757 = vunpack.c.l.b16 %v2678
    %v2758 = vunpack.c.h.b16 %v2678
    %v2759 = vunpack.c.l.b16 %v2679
    %v2760 = vunpack.c.h.b16 %v2679
    %v2761 = vunpack.c.l.b16 %v2680
    %v2762 = vunpack.c.h.b16 %v2680
    %v2763 = vunpack.c.l.b16 %v2681
    %v2764 = vunpack.c.h.b16 %v2681
    %v2765 = vunpack.c.l.b16 %v2682
    %v2766 = vunpack.c.h.b16 %v2682
    %v2767 = vunpack.c.l.b16 %v2683
    %v2768 = vunpack.c.h.b16 %v2683
    %v2769 = vunpack.c.l.b16 %v2684
    %v2770 = vunpack.c.h.b16 %v2684
    %v2771 = vunpack.c.l.b16 %v2685
    %v2772 = vunpack.c.h.b16 %v2685
    %v2773 = vunpack.c.l.b16 %v2686
    %v2774 = vunpack.c.h.b16 %v2686
    %v2775 = vunpack.c.l.b16 %v2687
    %v2776 = vunpack.c.h.b16 %v2687
    %v2777 = vunpack.c.l.b16 %v2688
    %v2778 = vunpack.c.h.b16 %v2688
    %v2779 = vunpack.c.l.b16 %v2689
    %v2780 = vunpack.c.h.b16 %v2689
    %v2781 = vunpack.c.l.b16 %v2690
    %v2782 = vunpack.c.h.b16 %v2690
    %v2783 = vunpack.c.l.b16 %v2691
    %v2784 = vunpack.c.h.b16 %v2691
    %v2785 = vunpack.c.l.b16 %v2692
    %v2786 = vunpack.c.h.b16 %v2692
    %v2787 = vunpack.c.l.b16 %v2693
    %v2788 = vunpack.c.h.b16 %v2693
    %v2789 = vunpack.c.l.b16 %v2694
    %v2790 = vunpack.c.h.b16 %v2694
    %v2791 = vpack.c.b16 %v2731, %v2727
    %v2792 = vpack.c.b16 %v2732, %v2728
    %v2793 = vpack.c.b16 %v2733, %v2729
    %v2794 = vpack.c.b16 %v2734, %v2730
    %v2795 = vpack.c.b16 %v2739, %v2735
    %v2796 = vpack.c.b16 %v2740, %v2736
    %v2797 = vpack.c.b16 %v2741, %v2737
    %v2798 = vpack.c.b16 %v2742, %v2738
    %v2799 = vpack.c.b16 %v2747, %v2743
    %v2800 = vpack.c.b16 %v2748, %v2744
    %v2801 = vpack.c.b16 %v2749, %v2745
    %v2802 = vpack.c.b16 %v2750, %v2746
    %v2803 = vpack.c.b16 %v2755, %v2751
    %v2804 = vpack.c.b16 %v2756, %v2752
    %v2805 = vpack.c.b16 %v2757, %v2753
    %v2806 = vpack.c.b16 %v2758, %v2754
    %v2807 = vpack.c.b16 %v2763, %v2759
    %v2808 = vpack.c.b16 %v2764, %v2760
    %v2809 = vpack.c.b16 %v2765, %v2761
    %v2810 = vpack.c.b16 %v2766, %v2762
    %v2811 = vpack.c.b16 %v2771, %v2767
    %v2812 = vpack.c.b16 %v2772, %v2768
    %v2813 = vpack.c.b16 %v2773, %v2769
    %v2814 = vpack.c.b16 %v2774, %v2770
    %v2815 = vpack.c.b16 %v2779, %v2775
    %v2816 = vpack.c.b16 %v2780, %v2776
    %v2817 = vpack.c.b16 %v2781, %v2777
    %v2818 = vpack.c.b16 %v2782, %v2778
    %v2819 = vpack.c.b16 %v2787, %v2783
    %v2820 = vpack.c.b16 %v2788, %v2784
    %v2821 = vpack.c.b16 %v2789, %v2785
    %v2822 = vpack.c.b16 %v2790, %v2786
    %2855 = vmatpush.bf16.msra.mxu0 %v2819
    %2856 = vmatpush.bf16.msra.mxu0 %v2815
    %2857 = vmatpush.bf16.msra.mxu0 %v2811
    %2858 = vmatpush.bf16.msra.mxu0 %v2807
    %2859 = vmatpush.bf16.msra.mxu0 %v2803
    %2860 = vmatpush.bf16.msra.mxu0 %v2799
    %2861 = vmatpush.bf16.msra.mxu0 %v2795
    %2862 = vmatpush.bf16.msra.mxu0 %v2791
    %2863 = vmatmul.bf16.gmra.mxu0 %v2657
    %v2864 = vpop.f32.mrf.mxu0
    %v2865 = vadd.f32 0.0, %v2864
    %v2866 = vpop.f32.mrf.mxu0
    %2867 = vdwg.mxu0
    %2868 = vmatpush.bf16.msra.mxu0 %v2820
    %2869 = vmatpush.bf16.msra.mxu0 %v2816
    %2870 = vmatpush.bf16.msra.mxu0 %v2812
    %2871 = vmatpush.bf16.msra.mxu0 %v2808
    %2872 = vmatpush.bf16.msra.mxu0 %v2804
    %2873 = vmatpush.bf16.msra.mxu0 %v2800
    %2874 = vmatpush.bf16.msra.mxu0 %v2796
    %2875 = vmatpush.bf16.msra.mxu0 %v2792
    %2876 = vmatmul.bf16.gmra.mxu0 %v2657
    %v2877 = vpop.f32.mrf.mxu0
    %v2878 = vadd.f32 0.0, %v2877
    %v2879 = vpop.f32.mrf.mxu0
    %2880 = vdwg.mxu0
    %2881 = vmatpush.bf16.msra.mxu0 %v2821
    %2882 = vmatpush.bf16.msra.mxu0 %v2817
    %2883 = vmatpush.bf16.msra.mxu0 %v2813
    %2884 = vmatpush.bf16.msra.mxu0 %v2809
    %2885 = vmatpush.bf16.msra.mxu0 %v2805
    %2886 = vmatpush.bf16.msra.mxu0 %v2801
    %2887 = vmatpush.bf16.msra.mxu0 %v2797
    %2888 = vmatpush.bf16.msra.mxu0 %v2793
    %2889 = vmatmul.bf16.gmra.mxu0 %v2657
    %v2890 = vpop.f32.mrf.mxu0
    %v2891 = vadd.f32 0.0, %v2890
    %v2892 = vpop.f32.mrf.mxu0
    %2893 = vdwg.mxu0
    %2894 = vmatpush.bf16.msra.mxu0 %v2822
    %2895 = vmatpush.bf16.msra.mxu0 %v2818
    %2896 = vmatpush.bf16.msra.mxu0 %v2814
    %2897 = vmatpush.bf16.msra.mxu0 %v2810
    %2898 = vmatpush.bf16.msra.mxu0 %v2806
    %2899 = vmatpush.bf16.msra.mxu0 %v2802
    %2900 = vmatpush.bf16.msra.mxu0 %v2798
    %2901 = vmatpush.bf16.msra.mxu0 %v2794
    %2902 = vmatmul.bf16.gmra.mxu0 %v2657
    %v2903 = vpop.f32.mrf.mxu0
    %v2904 = vadd.f32 0.0, %v2903
    %v2905 = vpop.f32.mrf.mxu0
    %2906 = vdwg.mxu0
    %v2907 = vadd.f32 %v2659, %v2865
    %v2908 = vadd.f32 %v2660, %v2878
    %v2909 = vadd.f32 %v2661, %v2891
    %v2910 = vadd.f32 %v2662, %v2904
    %v2911 = vxor.u32 %v2907, 2147483648
    %v2912 = vmul.f32 %v2911, 1.442695
    %v2913 = vpow.pop %v2912
    %v2914 = vadd.f32 %v2913, 1.0
    %v2915 = vrcp.pop %v2914
    %v2916 = vmul.f32 %v2914, %v2915
    %v2917 = vsub.f32 1.0, %v2916
    %v2918 = vmul.f32 %v2915, %v2917
    %v2919 = vadd.f32 %v2915, %v2918
    %vm2920 = vweird.f32 %v2914
    %vm2921 = vweird.f32 %v2915
    %vm2922 = vmor %vm2920, %vm2921
    %v2923 = vsel %vm2922, %v2915, %v2919
    %v2924 = vand.u32 2147483647, %v2914
    %vm2925 = vcmp.eq.f32.partialorder %v2924, 8.507059e+37
    %v2926 = vand.u32 %v2914, 2147483648
    %v2927 = vor.u32 1.1754944e-38, %v2926
    %v2928 = vsel %vm2925, %v2927, %v2923
    %v2929 = vmul.f32 1.0, %v2928
    %v2930 = vxor.u32 %v2908, 2147483648
    %v2931 = vmul.f32 %v2930, 1.442695
    %v2932 = vpow.pop %v2931
    %v2933 = vadd.f32 %v2932, 1.0
    %v2934 = vrcp.pop %v2933
    %v2935 = vmul.f32 %v2933, %v2934
    %v2936 = vsub.f32 1.0, %v2935
    %v2937 = vmul.f32 %v2934, %v2936
    %v2938 = vadd.f32 %v2934, %v2937
    %vm2939 = vweird.f32 %v2933
    %vm2940 = vweird.f32 %v2934
    %vm2941 = vmor %vm2939, %vm2940
    %v2942 = vsel %vm2941, %v2934, %v2938
    %v2943 = vand.u32 2147483647, %v2933
    %vm2944 = vcmp.eq.f32.partialorder %v2943, 8.507059e+37
    %v2945 = vand.u32 %v2933, 2147483648
    %v2946 = vor.u32 1.1754944e-38, %v2945
    %v2947 = vsel %vm2944, %v2946, %v2942
    %v2948 = vmul.f32 1.0, %v2947
    %v2949 = vtanh.pop %v2909
    %v2950 = vxor.u32 %v2910, 2147483648
    %v2951 = vmul.f32 %v2950, 1.442695
    %v2952 = vpow.pop %v2951
    %v2953 = vadd.f32 %v2952, 1.0
    %v2954 = vrcp.pop %v2953
    %v2955 = vmul.f32 %v2953, %v2954
    %v2956 = vsub.f32 1.0, %v2955
    %v2957 = vmul.f32 %v2954, %v2956
    %v2958 = vadd.f32 %v2954, %v2957
    %vm2959 = vweird.f32 %v2953
    %vm2960 = vweird.f32 %v2954
    %vm2961 = vmor %vm2959, %vm2960
    %v2962 = vsel %vm2961, %v2954, %v2958
    %v2963 = vand.u32 2147483647, %v2953
    %vm2964 = vcmp.eq.f32.partialorder %v2963, 8.507059e+37
    %v2965 = vand.u32 %v2953, 2147483648
    %v2966 = vor.u32 1.1754944e-38, %v2965
    %v2967 = vsel %vm2964, %v2966, %v2962
    %v2968 = vmul.f32 1.0, %v2967
    %v2969 = vmul.f32 %v2948, %v2652
    %v2970 = vmul.f32 %v2929, %v2949
    %v2971 = vadd.f32 %v2969, %v2970
    %v2972 = vtanh.pop %v2971
    %v2973 = vmul.f32 %v2968, %v2972
    %s2974 = scalar_lea.vmem %s8, 16
    %2975 = vst [vmem:[%s2974] sm:$0xff] %v2973
    %v2976 = vpack.c.bf16 %v2973, %v2973
    %s2977 = scalar_lea.vmem [#allocation3], 96
    %v2978 = vld [vmem:[%s2977] sm:$0xff]
    %v2979 = vld [vmem:[%s2977 + $0x8] sm:$0xff]
    %v2980 = vld [vmem:[%s2977 + $0x10] sm:$0xff]
    %v2981 = vld [vmem:[%s2977 + $0x18] sm:$0xff]
    %v2982 = vld [vmem:[#allocation7] sm:$0xff]
    %v2983 = vld [vmem:[#allocation7 + $0x8] sm:$0xff]
    %v2984 = vld [vmem:[#allocation7 + $0x10] sm:$0xff]
    %v2985 = vld [vmem:[#allocation7 + $0x18] sm:$0xff]
    %v2986 = vld [vmem:[#allocation7 + $0x20] sm:$0xff]
    %v2987 = vld [vmem:[#allocation7 + $0x28] sm:$0xff]
    %v2988 = vld [vmem:[#allocation7 + $0x30] sm:$0xff]
    %v2989 = vld [vmem:[#allocation7 + $0x38] sm:$0xff]
    %v2990 = vld [vmem:[#allocation7 + $0x40] sm:$0xff]
    %v2991 = vld [vmem:[#allocation7 + $0x48] sm:$0xff]
    %v2992 = vld [vmem:[#allocation7 + $0x50] sm:$0xff]
    %v2993 = vld [vmem:[#allocation7 + $0x58] sm:$0xff]
    %v2994 = vld [vmem:[#allocation7 + $0x60] sm:$0xff]
    %v2995 = vld [vmem:[#allocation7 + $0x68] sm:$0xff]
    %v2996 = vld [vmem:[#allocation7 + $0x70] sm:$0xff]
    %v2997 = vld [vmem:[#allocation7 + $0x78] sm:$0xff]
    %v2998 = vld [vmem:[#allocation7 + $0x80] sm:$0xff]
    %v2999 = vld [vmem:[#allocation7 + $0x88] sm:$0xff]
    %v3000 = vld [vmem:[#allocation7 + $0x90] sm:$0xff]
    %v3001 = vld [vmem:[#allocation7 + $0x98] sm:$0xff]
    %v3002 = vld [vmem:[#allocation7 + $0xa0] sm:$0xff]
    %v3003 = vld [vmem:[#allocation7 + $0xa8] sm:$0xff]
    %v3004 = vld [vmem:[#allocation7 + $0xb0] sm:$0xff]
    %v3005 = vld [vmem:[#allocation7 + $0xb8] sm:$0xff]
    %v3006 = vld [vmem:[#allocation7 + $0xc0] sm:$0xff]
    %v3007 = vld [vmem:[#allocation7 + $0xc8] sm:$0xff]
    %v3008 = vld [vmem:[#allocation7 + $0xd0] sm:$0xff]
    %v3009 = vld [vmem:[#allocation7 + $0xd8] sm:$0xff]
    %v3010 = vld [vmem:[#allocation7 + $0xe0] sm:$0xff]
    %v3011 = vld [vmem:[#allocation7 + $0xe8] sm:$0xff]
    %v3012 = vld [vmem:[#allocation7 + $0xf0] sm:$0xff]
    %v3013 = vld [vmem:[#allocation7 + $0xf8] sm:$0xff]
    %v3046 = vunpack.c.l.b16 %v2982
    %v3047 = vunpack.c.h.b16 %v2982
    %v3048 = vunpack.c.l.b16 %v2983
    %v3049 = vunpack.c.h.b16 %v2983
    %v3050 = vunpack.c.l.b16 %v2984
    %v3051 = vunpack.c.h.b16 %v2984
    %v3052 = vunpack.c.l.b16 %v2985
    %v3053 = vunpack.c.h.b16 %v2985
    %v3054 = vunpack.c.l.b16 %v2986
    %v3055 = vunpack.c.h.b16 %v2986
    %v3056 = vunpack.c.l.b16 %v2987
    %v3057 = vunpack.c.h.b16 %v2987
    %v3058 = vunpack.c.l.b16 %v2988
    %v3059 = vunpack.c.h.b16 %v2988
    %v3060 = vunpack.c.l.b16 %v2989
    %v3061 = vunpack.c.h.b16 %v2989
    %v3062 = vunpack.c.l.b16 %v2990
    %v3063 = vunpack.c.h.b16 %v2990
    %v3064 = vunpack.c.l.b16 %v2991
    %v3065 = vunpack.c.h.b16 %v2991
    %v3066 = vunpack.c.l.b16 %v2992
    %v3067 = vunpack.c.h.b16 %v2992
    %v3068 = vunpack.c.l.b16 %v2993
    %v3069 = vunpack.c.h.b16 %v2993
    %v3070 = vunpack.c.l.b16 %v2994
    %v3071 = vunpack.c.h.b16 %v2994
    %v3072 = vunpack.c.l.b16 %v2995
    %v3073 = vunpack.c.h.b16 %v2995
    %v3074 = vunpack.c.l.b16 %v2996
    %v3075 = vunpack.c.h.b16 %v2996
    %v3076 = vunpack.c.l.b16 %v2997
    %v3077 = vunpack.c.h.b16 %v2997
    %v3078 = vunpack.c.l.b16 %v2998
    %v3079 = vunpack.c.h.b16 %v2998
    %v3080 = vunpack.c.l.b16 %v2999
    %v3081 = vunpack.c.h.b16 %v2999
    %v3082 = vunpack.c.l.b16 %v3000
    %v3083 = vunpack.c.h.b16 %v3000
    %v3084 = vunpack.c.l.b16 %v3001
    %v3085 = vunpack.c.h.b16 %v3001
    %v3086 = vunpack.c.l.b16 %v3002
    %v3087 = vunpack.c.h.b16 %v3002
    %v3088 = vunpack.c.l.b16 %v3003
    %v3089 = vunpack.c.h.b16 %v3003
    %v3090 = vunpack.c.l.b16 %v3004
    %v3091 = vunpack.c.h.b16 %v3004
    %v3092 = vunpack.c.l.b16 %v3005
    %v3093 = vunpack.c.h.b16 %v3005
    %v3094 = vunpack.c.l.b16 %v3006
    %v3095 = vunpack.c.h.b16 %v3006
    %v3096 = vunpack.c.l.b16 %v3007
    %v3097 = vunpack.c.h.b16 %v3007
    %v3098 = vunpack.c.l.b16 %v3008
    %v3099 = vunpack.c.h.b16 %v3008
    %v3100 = vunpack.c.l.b16 %v3009
    %v3101 = vunpack.c.h.b16 %v3009
    %v3102 = vunpack.c.l.b16 %v3010
    %v3103 = vunpack.c.h.b16 %v3010
    %v3104 = vunpack.c.l.b16 %v3011
    %v3105 = vunpack.c.h.b16 %v3011
    %v3106 = vunpack.c.l.b16 %v3012
    %v3107 = vunpack.c.h.b16 %v3012
    %v3108 = vunpack.c.l.b16 %v3013
    %v3109 = vunpack.c.h.b16 %v3013
    %v3110 = vpack.c.b16 %v3050, %v3046
    %v3111 = vpack.c.b16 %v3051, %v3047
    %v3112 = vpack.c.b16 %v3052, %v3048
    %v3113 = vpack.c.b16 %v3053, %v3049
    %v3114 = vpack.c.b16 %v3058, %v3054
    %v3115 = vpack.c.b16 %v3059, %v3055
    %v3116 = vpack.c.b16 %v3060, %v3056
    %v3117 = vpack.c.b16 %v3061, %v3057
    %v3118 = vpack.c.b16 %v3066, %v3062
    %v3119 = vpack.c.b16 %v3067, %v3063
    %v3120 = vpack.c.b16 %v3068, %v3064
    %v3121 = vpack.c.b16 %v3069, %v3065
    %v3122 = vpack.c.b16 %v3074, %v3070
    %v3123 = vpack.c.b16 %v3075, %v3071
    %v3124 = vpack.c.b16 %v3076, %v3072
    %v3125 = vpack.c.b16 %v3077, %v3073
    %v3126 = vpack.c.b16 %v3082, %v3078
    %v3127 = vpack.c.b16 %v3083, %v3079
    %v3128 = vpack.c.b16 %v3084, %v3080
    %v3129 = vpack.c.b16 %v3085, %v3081
    %v3130 = vpack.c.b16 %v3090, %v3086
    %v3131 = vpack.c.b16 %v3091, %v3087
    %v3132 = vpack.c.b16 %v3092, %v3088
    %v3133 = vpack.c.b16 %v3093, %v3089
    %v3134 = vpack.c.b16 %v3098, %v3094
    %v3135 = vpack.c.b16 %v3099, %v3095
    %v3136 = vpack.c.b16 %v3100, %v3096
    %v3137 = vpack.c.b16 %v3101, %v3097
    %v3138 = vpack.c.b16 %v3106, %v3102
    %v3139 = vpack.c.b16 %v3107, %v3103
    %v3140 = vpack.c.b16 %v3108, %v3104
    %v3141 = vpack.c.b16 %v3109, %v3105
    %3174 = vmatpush.bf16.msra.mxu0 %v3138
    %3175 = vmatpush.bf16.msra.mxu0 %v3134
    %3176 = vmatpush.bf16.msra.mxu0 %v3130
    %3177 = vmatpush.bf16.msra.mxu0 %v3126
    %3178 = vmatpush.bf16.msra.mxu0 %v3122
    %3179 = vmatpush.bf16.msra.mxu0 %v3118
    %3180 = vmatpush.bf16.msra.mxu0 %v3114
    %3181 = vmatpush.bf16.msra.mxu0 %v3110
    %3182 = vmatmul.bf16.gmra.mxu0 %v2976
    %v3183 = vpop.f32.mrf.mxu0
    %v3184 = vadd.f32 0.0, %v3183
    %v3185 = vpop.f32.mrf.mxu0
    %3186 = vdwg.mxu0
    %3187 = vmatpush.bf16.msra.mxu0 %v3139
    %3188 = vmatpush.bf16.msra.mxu0 %v3135
    %3189 = vmatpush.bf16.msra.mxu0 %v3131
    %3190 = vmatpush.bf16.msra.mxu0 %v3127
    %3191 = vmatpush.bf16.msra.mxu0 %v3123
    %3192 = vmatpush.bf16.msra.mxu0 %v3119
    %3193 = vmatpush.bf16.msra.mxu0 %v3115
    %3194 = vmatpush.bf16.msra.mxu0 %v3111
    %3195 = vmatmul.bf16.gmra.mxu0 %v2976
    %v3196 = vpop.f32.mrf.mxu0
    %v3197 = vadd.f32 0.0, %v3196
    %v3198 = vpop.f32.mrf.mxu0
    %3199 = vdwg.mxu0
    %3200 = vmatpush.bf16.msra.mxu0 %v3140
    %3201 = vmatpush.bf16.msra.mxu0 %v3136
    %3202 = vmatpush.bf16.msra.mxu0 %v3132
    %3203 = vmatpush.bf16.msra.mxu0 %v3128
    %3204 = vmatpush.bf16.msra.mxu0 %v3124
    %3205 = vmatpush.bf16.msra.mxu0 %v3120
    %3206 = vmatpush.bf16.msra.mxu0 %v3116
    %3207 = vmatpush.bf16.msra.mxu0 %v3112
    %3208 = vmatmul.bf16.gmra.mxu0 %v2976
    %v3209 = vpop.f32.mrf.mxu0
    %v3210 = vadd.f32 0.0, %v3209
    %v3211 = vpop.f32.mrf.mxu0
    %3212 = vdwg.mxu0
    %3213 = vmatpush.bf16.msra.mxu0 %v3141
    %3214 = vmatpush.bf16.msra.mxu0 %v3137
    %3215 = vmatpush.bf16.msra.mxu0 %v3133
    %3216 = vmatpush.bf16.msra.mxu0 %v3129
    %3217 = vmatpush.bf16.msra.mxu0 %v3125
    %3218 = vmatpush.bf16.msra.mxu0 %v3121
    %3219 = vmatpush.bf16.msra.mxu0 %v3117
    %3220 = vmatpush.bf16.msra.mxu0 %v3113
    %3221 = vmatmul.bf16.gmra.mxu0 %v2976
    %v3222 = vpop.f32.mrf.mxu0
    %v3223 = vadd.f32 0.0, %v3222
    %v3224 = vpop.f32.mrf.mxu0
    %3225 = vdwg.mxu0
    %v3226 = vadd.f32 %v2978, %v3184
    %v3227 = vadd.f32 %v2979, %v3197
    %v3228 = vadd.f32 %v2980, %v3210
    %v3229 = vadd.f32 %v2981, %v3223
    %v3230 = vxor.u32 %v3226, 2147483648
    %v3231 = vmul.f32 %v3230, 1.442695
    %v3232 = vpow.pop %v3231
    %v3233 = vadd.f32 %v3232, 1.0
    %v3234 = vrcp.pop %v3233
    %v3235 = vmul.f32 %v3233, %v3234
    %v3236 = vsub.f32 1.0, %v3235
    %v3237 = vmul.f32 %v3234, %v3236
    %v3238 = vadd.f32 %v3234, %v3237
    %vm3239 = vweird.f32 %v3233
    %vm3240 = vweird.f32 %v3234
    %vm3241 = vmor %vm3239, %vm3240
    %v3242 = vsel %vm3241, %v3234, %v3238
    %v3243 = vand.u32 2147483647, %v3233
    %vm3244 = vcmp.eq.f32.partialorder %v3243, 8.507059e+37
    %v3245 = vand.u32 %v3233, 2147483648
    %v3246 = vor.u32 1.1754944e-38, %v3245
    %v3247 = vsel %vm3244, %v3246, %v3242
    %v3248 = vmul.f32 1.0, %v3247
    %v3249 = vxor.u32 %v3227, 2147483648
    %v3250 = vmul.f32 %v3249, 1.442695
    %v3251 = vpow.pop %v3250
    %v3252 = vadd.f32 %v3251, 1.0
    %v3253 = vrcp.pop %v3252
    %v3254 = vmul.f32 %v3252, %v3253
    %v3255 = vsub.f32 1.0, %v3254
    %v3256 = vmul.f32 %v3253, %v3255
    %v3257 = vadd.f32 %v3253, %v3256
    %vm3258 = vweird.f32 %v3252
    %vm3259 = vweird.f32 %v3253
    %vm3260 = vmor %vm3258, %vm3259
    %v3261 = vsel %vm3260, %v3253, %v3257
    %v3262 = vand.u32 2147483647, %v3252
    %vm3263 = vcmp.eq.f32.partialorder %v3262, 8.507059e+37
    %v3264 = vand.u32 %v3252, 2147483648
    %v3265 = vor.u32 1.1754944e-38, %v3264
    %v3266 = vsel %vm3263, %v3265, %v3261
    %v3267 = vmul.f32 1.0, %v3266
    %v3268 = vtanh.pop %v3228
    %v3269 = vxor.u32 %v3229, 2147483648
    %v3270 = vmul.f32 %v3269, 1.442695
    %v3271 = vpow.pop %v3270
    %v3272 = vadd.f32 %v3271, 1.0
    %v3273 = vrcp.pop %v3272
    %v3274 = vmul.f32 %v3272, %v3273
    %v3275 = vsub.f32 1.0, %v3274
    %v3276 = vmul.f32 %v3273, %v3275
    %v3277 = vadd.f32 %v3273, %v3276
    %vm3278 = vweird.f32 %v3272
    %vm3279 = vweird.f32 %v3273
    %vm3280 = vmor %vm3278, %vm3279
    %v3281 = vsel %vm3280, %v3273, %v3277
    %v3282 = vand.u32 2147483647, %v3272
    %vm3283 = vcmp.eq.f32.partialorder %v3282, 8.507059e+37
    %v3284 = vand.u32 %v3272, 2147483648
    %v3285 = vor.u32 1.1754944e-38, %v3284
    %v3286 = vsel %vm3283, %v3285, %v3281
    %v3287 = vmul.f32 1.0, %v3286
    %v3288 = vmul.f32 %v3267, %v2971
    %v3289 = vmul.f32 %v3248, %v3268
    %v3290 = vadd.f32 %v3288, %v3289
    %v3291 = vtanh.pop %v3290
    %v3292 = vmul.f32 %v3287, %v3291
    %s3293 = scalar_lea.vmem %s8, 24
    %3294 = vst [vmem:[%s3293] sm:$0xff] %v3292
    %v3295 = vpack.c.bf16 %v3292, %v3292
    %s3296 = scalar_lea.vmem [#allocation3], 128
    %v3297 = vld [vmem:[%s3296] sm:$0xff]
    %v3298 = vld [vmem:[%s3296 + $0x8] sm:$0xff]
    %v3299 = vld [vmem:[%s3296 + $0x10] sm:$0xff]
    %v3300 = vld [vmem:[%s3296 + $0x18] sm:$0xff]
    %v3301 = vld [vmem:[#allocation7] sm:$0xff]
    %v3302 = vld [vmem:[#allocation7 + $0x8] sm:$0xff]
    %v3303 = vld [vmem:[#allocation7 + $0x10] sm:$0xff]
    %v3304 = vld [vmem:[#allocation7 + $0x18] sm:$0xff]
    %v3305 = vld [vmem:[#allocation7 + $0x20] sm:$0xff]
    %v3306 = vld [vmem:[#allocation7 + $0x28] sm:$0xff]
    %v3307 = vld [vmem:[#allocation7 + $0x30] sm:$0xff]
    %v3308 = vld [vmem:[#allocation7 + $0x38] sm:$0xff]
    %v3309 = vld [vmem:[#allocation7 + $0x40] sm:$0xff]
    %v3310 = vld [vmem:[#allocation7 + $0x48] sm:$0xff]
    %v3311 = vld [vmem:[#allocation7 + $0x50] sm:$0xff]
    %v3312 = vld [vmem:[#allocation7 + $0x58] sm:$0xff]
    %v3313 = vld [vmem:[#allocation7 + $0x60] sm:$0xff]
    %v3314 = vld [vmem:[#allocation7 + $0x68] sm:$0xff]
    %v3315 = vld [vmem:[#allocation7 + $0x70] sm:$0xff]
    %v3316 = vld [vmem:[#allocation7 + $0x78] sm:$0xff]
    %v3317 = vld [vmem:[#allocation7 + $0x80] sm:$0xff]
    %v3318 = vld [vmem:[#allocation7 + $0x88] sm:$0xff]
    %v3319 = vld [vmem:[#allocation7 + $0x90] sm:$0xff]
    %v3320 = vld [vmem:[#allocation7 + $0x98] sm:$0xff]
    %v3321 = vld [vmem:[#allocation7 + $0xa0] sm:$0xff]
    %v3322 = vld [vmem:[#allocation7 + $0xa8] sm:$0xff]
    %v3323 = vld [vmem:[#allocation7 + $0xb0] sm:$0xff]
    %v3324 = vld [vmem:[#allocation7 + $0xb8] sm:$0xff]
    %v3325 = vld [vmem:[#allocation7 + $0xc0] sm:$0xff]
    %v3326 = vld [vmem:[#allocation7 + $0xc8] sm:$0xff]
    %v3327 = vld [vmem:[#allocation7 + $0xd0] sm:$0xff]
    %v3328 = vld [vmem:[#allocation7 + $0xd8] sm:$0xff]
    %v3329 = vld [vmem:[#allocation7 + $0xe0] sm:$0xff]
    %v3330 = vld [vmem:[#allocation7 + $0xe8] sm:$0xff]
    %v3331 = vld [vmem:[#allocation7 + $0xf0] sm:$0xff]
    %v3332 = vld [vmem:[#allocation7 + $0xf8] sm:$0xff]
    %v3365 = vunpack.c.l.b16 %v3301
    %v3366 = vunpack.c.h.b16 %v3301
    %v3367 = vunpack.c.l.b16 %v3302
    %v3368 = vunpack.c.h.b16 %v3302
    %v3369 = vunpack.c.l.b16 %v3303
    %v3370 = vunpack.c.h.b16 %v3303
    %v3371 = vunpack.c.l.b16 %v3304
    %v3372 = vunpack.c.h.b16 %v3304
    %v3373 = vunpack.c.l.b16 %v3305
    %v3374 = vunpack.c.h.b16 %v3305
    %v3375 = vunpack.c.l.b16 %v3306
    %v3376 = vunpack.c.h.b16 %v3306
    %v3377 = vunpack.c.l.b16 %v3307
    %v3378 = vunpack.c.h.b16 %v3307
    %v3379 = vunpack.c.l.b16 %v3308
    %v3380 = vunpack.c.h.b16 %v3308
    %v3381 = vunpack.c.l.b16 %v3309
    %v3382 = vunpack.c.h.b16 %v3309
    %v3383 = vunpack.c.l.b16 %v3310
    %v3384 = vunpack.c.h.b16 %v3310
    %v3385 = vunpack.c.l.b16 %v3311
    %v3386 = vunpack.c.h.b16 %v3311
    %v3387 = vunpack.c.l.b16 %v3312
    %v3388 = vunpack.c.h.b16 %v3312
    %v3389 = vunpack.c.l.b16 %v3313
    %v3390 = vunpack.c.h.b16 %v3313
    %v3391 = vunpack.c.l.b16 %v3314
    %v3392 = vunpack.c.h.b16 %v3314
    %v3393 = vunpack.c.l.b16 %v3315
    %v3394 = vunpack.c.h.b16 %v3315
    %v3395 = vunpack.c.l.b16 %v3316
    %v3396 = vunpack.c.h.b16 %v3316
    %v3397 = vunpack.c.l.b16 %v3317
    %v3398 = vunpack.c.h.b16 %v3317
    %v3399 = vunpack.c.l.b16 %v3318
    %v3400 = vunpack.c.h.b16 %v3318
    %v3401 = vunpack.c.l.b16 %v3319
    %v3402 = vunpack.c.h.b16 %v3319
    %v3403 = vunpack.c.l.b16 %v3320
    %v3404 = vunpack.c.h.b16 %v3320
    %v3405 = vunpack.c.l.b16 %v3321
    %v3406 = vunpack.c.h.b16 %v3321
    %v3407 = vunpack.c.l.b16 %v3322
    %v3408 = vunpack.c.h.b16 %v3322
    %v3409 = vunpack.c.l.b16 %v3323
    %v3410 = vunpack.c.h.b16 %v3323
    %v3411 = vunpack.c.l.b16 %v3324
    %v3412 = vunpack.c.h.b16 %v3324
    %v3413 = vunpack.c.l.b16 %v3325
    %v3414 = vunpack.c.h.b16 %v3325
    %v3415 = vunpack.c.l.b16 %v3326
    %v3416 = vunpack.c.h.b16 %v3326
    %v3417 = vunpack.c.l.b16 %v3327
    %v3418 = vunpack.c.h.b16 %v3327
    %v3419 = vunpack.c.l.b16 %v3328
    %v3420 = vunpack.c.h.b16 %v3328
    %v3421 = vunpack.c.l.b16 %v3329
    %v3422 = vunpack.c.h.b16 %v3329
    %v3423 = vunpack.c.l.b16 %v3330
    %v3424 = vunpack.c.h.b16 %v3330
    %v3425 = vunpack.c.l.b16 %v3331
    %v3426 = vunpack.c.h.b16 %v3331
    %v3427 = vunpack.c.l.b16 %v3332
    %v3428 = vunpack.c.h.b16 %v3332
    %v3429 = vpack.c.b16 %v3369, %v3365
    %v3430 = vpack.c.b16 %v3370, %v3366
    %v3431 = vpack.c.b16 %v3371, %v3367
    %v3432 = vpack.c.b16 %v3372, %v3368
    %v3433 = vpack.c.b16 %v3377, %v3373
    %v3434 = vpack.c.b16 %v3378, %v3374
    %v3435 = vpack.c.b16 %v3379, %v3375
    %v3436 = vpack.c.b16 %v3380, %v3376
    %v3437 = vpack.c.b16 %v3385, %v3381
    %v3438 = vpack.c.b16 %v3386, %v3382
    %v3439 = vpack.c.b16 %v3387, %v3383
    %v3440 = vpack.c.b16 %v3388, %v3384
    %v3441 = vpack.c.b16 %v3393, %v3389
    %v3442 = vpack.c.b16 %v3394, %v3390
    %v3443 = vpack.c.b16 %v3395, %v3391
    %v3444 = vpack.c.b16 %v3396, %v3392
    %v3445 = vpack.c.b16 %v3401, %v3397
    %v3446 = vpack.c.b16 %v3402, %v3398
    %v3447 = vpack.c.b16 %v3403, %v3399
    %v3448 = vpack.c.b16 %v3404, %v3400
    %v3449 = vpack.c.b16 %v3409, %v3405
    %v3450 = vpack.c.b16 %v3410, %v3406
    %v3451 = vpack.c.b16 %v3411, %v3407
    %v3452 = vpack.c.b16 %v3412, %v3408
    %v3453 = vpack.c.b16 %v3417, %v3413
    %v3454 = vpack.c.b16 %v3418, %v3414
    %v3455 = vpack.c.b16 %v3419, %v3415
    %v3456 = vpack.c.b16 %v3420, %v3416
    %v3457 = vpack.c.b16 %v3425, %v3421
    %v3458 = vpack.c.b16 %v3426, %v3422
    %v3459 = vpack.c.b16 %v3427, %v3423
    %v3460 = vpack.c.b16 %v3428, %v3424
    %3493 = vmatpush.bf16.msra.mxu0 %v3457
    %3494 = vmatpush.bf16.msra.mxu0 %v3453
    %3495 = vmatpush.bf16.msra.mxu0 %v3449
    %3496 = vmatpush.bf16.msra.mxu0 %v3445
    %3497 = vmatpush.bf16.msra.mxu0 %v3441
    %3498 = vmatpush.bf16.msra.mxu0 %v3437
    %3499 = vmatpush.bf16.msra.mxu0 %v3433
    %3500 = vmatpush.bf16.msra.mxu0 %v3429
    %3501 = vmatmul.bf16.gmra.mxu0 %v3295
    %v3502 = vpop.f32.mrf.mxu0
    %v3503 = vadd.f32 0.0, %v3502
    %v3504 = vpop.f32.mrf.mxu0
    %3505 = vdwg.mxu0
    %3506 = vmatpush.bf16.msra.mxu0 %v3458
    %3507 = vmatpush.bf16.msra.mxu0 %v3454
    %3508 = vmatpush.bf16.msra.mxu0 %v3450
    %3509 = vmatpush.bf16.msra.mxu0 %v3446
    %3510 = vmatpush.bf16.msra.mxu0 %v3442
    %3511 = vmatpush.bf16.msra.mxu0 %v3438
    %3512 = vmatpush.bf16.msra.mxu0 %v3434
    %3513 = vmatpush.bf16.msra.mxu0 %v3430
    %3514 = vmatmul.bf16.gmra.mxu0 %v3295
    %v3515 = vpop.f32.mrf.mxu0
    %v3516 = vadd.f32 0.0, %v3515
    %v3517 = vpop.f32.mrf.mxu0
    %3518 = vdwg.mxu0
    %3519 = vmatpush.bf16.msra.mxu0 %v3459
    %3520 = vmatpush.bf16.msra.mxu0 %v3455
    %3521 = vmatpush.bf16.msra.mxu0 %v3451
    %3522 = vmatpush.bf16.msra.mxu0 %v3447
    %3523 = vmatpush.bf16.msra.mxu0 %v3443
    %3524 = vmatpush.bf16.msra.mxu0 %v3439
    %3525 = vmatpush.bf16.msra.mxu0 %v3435
    %3526 = vmatpush.bf16.msra.mxu0 %v3431
    %3527 = vmatmul.bf16.gmra.mxu0 %v3295
    %v3528 = vpop.f32.mrf.mxu0
    %v3529 = vadd.f32 0.0, %v3528
    %v3530 = vpop.f32.mrf.mxu0
    %3531 = vdwg.mxu0
    %3532 = vmatpush.bf16.msra.mxu0 %v3460
    %3533 = vmatpush.bf16.msra.mxu0 %v3456
    %3534 = vmatpush.bf16.msra.mxu0 %v3452
    %3535 = vmatpush.bf16.msra.mxu0 %v3448
    %3536 = vmatpush.bf16.msra.mxu0 %v3444
    %3537 = vmatpush.bf16.msra.mxu0 %v3440
    %3538 = vmatpush.bf16.msra.mxu0 %v3436
    %3539 = vmatpush.bf16.msra.mxu0 %v3432
    %3540 = vmatmul.bf16.gmra.mxu0 %v3295
    %v3541 = vpop.f32.mrf.mxu0
    %v3542 = vadd.f32 0.0, %v3541
    %v3543 = vpop.f32.mrf.mxu0
    %3544 = vdwg.mxu0
    %v3545 = vadd.f32 %v3297, %v3503
    %v3546 = vadd.f32 %v3298, %v3516
    %v3547 = vadd.f32 %v3299, %v3529
    %v3548 = vadd.f32 %v3300, %v3542
    %v3549 = vxor.u32 %v3545, 2147483648
    %v3550 = vmul.f32 %v3549, 1.442695
    %v3551 = vpow.pop %v3550
    %v3552 = vadd.f32 %v3551, 1.0
    %v3553 = vrcp.pop %v3552
    %v3554 = vmul.f32 %v3552, %v3553
    %v3555 = vsub.f32 1.0, %v3554
    %v3556 = vmul.f32 %v3553, %v3555
    %v3557 = vadd.f32 %v3553, %v3556
    %vm3558 = vweird.f32 %v3552
    %vm3559 = vweird.f32 %v3553
    %vm3560 = vmor %vm3558, %vm3559
    %v3561 = vsel %vm3560, %v3553, %v3557
    %v3562 = vand.u32 2147483647, %v3552
    %vm3563 = vcmp.eq.f32.partialorder %v3562, 8.507059e+37
    %v3564 = vand.u32 %v3552, 2147483648
    %v3565 = vor.u32 1.1754944e-38, %v3564
    %v3566 = vsel %vm3563, %v3565, %v3561
    %v3567 = vmul.f32 1.0, %v3566
    %v3568 = vxor.u32 %v3546, 2147483648
    %v3569 = vmul.f32 %v3568, 1.442695
    %v3570 = vpow.pop %v3569
    %v3571 = vadd.f32 %v3570, 1.0
    %v3572 = vrcp.pop %v3571
    %v3573 = vmul.f32 %v3571, %v3572
    %v3574 = vsub.f32 1.0, %v3573
    %v3575 = vmul.f32 %v3572, %v3574
    %v3576 = vadd.f32 %v3572, %v3575
    %vm3577 = vweird.f32 %v3571
    %vm3578 = vweird.f32 %v3572
    %vm3579 = vmor %vm3577, %vm3578
    %v3580 = vsel %vm3579, %v3572, %v3576
    %v3581 = vand.u32 2147483647, %v3571
    %vm3582 = vcmp.eq.f32.partialorder %v3581, 8.507059e+37
    %v3583 = vand.u32 %v3571, 2147483648
    %v3584 = vor.u32 1.1754944e-38, %v3583
    %v3585 = vsel %vm3582, %v3584, %v3580
    %v3586 = vmul.f32 1.0, %v3585
    %v3587 = vtanh.pop %v3547
    %v3588 = vxor.u32 %v3548, 2147483648
    %v3589 = vmul.f32 %v3588, 1.442695
    %v3590 = vpow.pop %v3589
    %v3591 = vadd.f32 %v3590, 1.0
    %v3592 = vrcp.pop %v3591
    %v3593 = vmul.f32 %v3591, %v3592
    %v3594 = vsub.f32 1.0, %v3593
    %v3595 = vmul.f32 %v3592, %v3594
    %v3596 = vadd.f32 %v3592, %v3595
    %vm3597 = vweird.f32 %v3591
    %vm3598 = vweird.f32 %v3592
    %vm3599 = vmor %vm3597, %vm3598
    %v3600 = vsel %vm3599, %v3592, %v3596
    %v3601 = vand.u32 2147483647, %v3591
    %vm3602 = vcmp.eq.f32.partialorder %v3601, 8.507059e+37
    %v3603 = vand.u32 %v3591, 2147483648
    %v3604 = vor.u32 1.1754944e-38, %v3603
    %v3605 = vsel %vm3602, %v3604, %v3600
    %v3606 = vmul.f32 1.0, %v3605
    %v3607 = vmul.f32 %v3586, %v3290
    %v3608 = vmul.f32 %v3567, %v3587
    %v3609 = vadd.f32 %v3607, %v3608
    %v3610 = vtanh.pop %v3609
    %v3611 = vmul.f32 %v3606, %v3610
    %s3612 = scalar_lea.vmem %s8, 32
    %3613 = vst [vmem:[%s3612] sm:$0xff] %v3611
    %v3614 = vpack.c.bf16 %v3611, %v3611
    %s3615 = scalar_lea.vmem [#allocation3], 160
    %v3616 = vld [vmem:[%s3615] sm:$0xff]
    %v3617 = vld [vmem:[%s3615 + $0x8] sm:$0xff]
    %v3618 = vld [vmem:[%s3615 + $0x10] sm:$0xff]
    %v3619 = vld [vmem:[%s3615 + $0x18] sm:$0xff]
    %v3620 = vld [vmem:[#allocation7] sm:$0xff]
    %v3621 = vld [vmem:[#allocation7 + $0x8] sm:$0xff]
    %v3622 = vld [vmem:[#allocation7 + $0x10] sm:$0xff]
    %v3623 = vld [vmem:[#allocation7 + $0x18] sm:$0xff]
    %v3624 = vld [vmem:[#allocation7 + $0x20] sm:$0xff]
    %v3625 = vld [vmem:[#allocation7 + $0x28] sm:$0xff]
    %v3626 = vld [vmem:[#allocation7 + $0x30] sm:$0xff]
    %v3627 = vld [vmem:[#allocation7 + $0x38] sm:$0xff]
    %v3628 = vld [vmem:[#allocation7 + $0x40] sm:$0xff]
    %v3629 = vld [vmem:[#allocation7 + $0x48] sm:$0xff]
    %v3630 = vld [vmem:[#allocation7 + $0x50] sm:$0xff]
    %v3631 = vld [vmem:[#allocation7 + $0x58] sm:$0xff]
    %v3632 = vld [vmem:[#allocation7 + $0x60] sm:$0xff]
    %v3633 = vld [vmem:[#allocation7 + $0x68] sm:$0xff]
    %v3634 = vld [vmem:[#allocation7 + $0x70] sm:$0xff]
    %v3635 = vld [vmem:[#allocation7 + $0x78] sm:$0xff]
    %v3636 = vld [vmem:[#allocation7 + $0x80] sm:$0xff]
    %v3637 = vld [vmem:[#allocation7 + $0x88] sm:$0xff]
    %v3638 = vld [vmem:[#allocation7 + $0x90] sm:$0xff]
    %v3639 = vld [vmem:[#allocation7 + $0x98] sm:$0xff]
    %v3640 = vld [vmem:[#allocation7 + $0xa0] sm:$0xff]
    %v3641 = vld [vmem:[#allocation7 + $0xa8] sm:$0xff]
    %v3642 = vld [vmem:[#allocation7 + $0xb0] sm:$0xff]
    %v3643 = vld [vmem:[#allocation7 + $0xb8] sm:$0xff]
    %v3644 = vld [vmem:[#allocation7 + $0xc0] sm:$0xff]
    %v3645 = vld [vmem:[#allocation7 + $0xc8] sm:$0xff]
    %v3646 = vld [vmem:[#allocation7 + $0xd0] sm:$0xff]
    %v3647 = vld [vmem:[#allocation7 + $0xd8] sm:$0xff]
    %v3648 = vld [vmem:[#allocation7 + $0xe0] sm:$0xff]
    %v3649 = vld [vmem:[#allocation7 + $0xe8] sm:$0xff]
    %v3650 = vld [vmem:[#allocation7 + $0xf0] sm:$0xff]
    %v3651 = vld [vmem:[#allocation7 + $0xf8] sm:$0xff]
    %v3684 = vunpack.c.l.b16 %v3620
    %v3685 = vunpack.c.h.b16 %v3620
    %v3686 = vunpack.c.l.b16 %v3621
    %v3687 = vunpack.c.h.b16 %v3621
    %v3688 = vunpack.c.l.b16 %v3622
    %v3689 = vunpack.c.h.b16 %v3622
    %v3690 = vunpack.c.l.b16 %v3623
    %v3691 = vunpack.c.h.b16 %v3623
    %v3692 = vunpack.c.l.b16 %v3624
    %v3693 = vunpack.c.h.b16 %v3624
    %v3694 = vunpack.c.l.b16 %v3625
    %v3695 = vunpack.c.h.b16 %v3625
    %v3696 = vunpack.c.l.b16 %v3626
    %v3697 = vunpack.c.h.b16 %v3626
    %v3698 = vunpack.c.l.b16 %v3627
    %v3699 = vunpack.c.h.b16 %v3627
    %v3700 = vunpack.c.l.b16 %v3628
    %v3701 = vunpack.c.h.b16 %v3628
    %v3702 = vunpack.c.l.b16 %v3629
    %v3703 = vunpack.c.h.b16 %v3629
    %v3704 = vunpack.c.l.b16 %v3630
    %v3705 = vunpack.c.h.b16 %v3630
    %v3706 = vunpack.c.l.b16 %v3631
    %v3707 = vunpack.c.h.b16 %v3631
    %v3708 = vunpack.c.l.b16 %v3632
    %v3709 = vunpack.c.h.b16 %v3632
    %v3710 = vunpack.c.l.b16 %v3633
    %v3711 = vunpack.c.h.b16 %v3633
    %v3712 = vunpack.c.l.b16 %v3634
    %v3713 = vunpack.c.h.b16 %v3634
    %v3714 = vunpack.c.l.b16 %v3635
    %v3715 = vunpack.c.h.b16 %v3635
    %v3716 = vunpack.c.l.b16 %v3636
    %v3717 = vunpack.c.h.b16 %v3636
    %v3718 = vunpack.c.l.b16 %v3637
    %v3719 = vunpack.c.h.b16 %v3637
    %v3720 = vunpack.c.l.b16 %v3638
    %v3721 = vunpack.c.h.b16 %v3638
    %v3722 = vunpack.c.l.b16 %v3639
    %v3723 = vunpack.c.h.b16 %v3639
    %v3724 = vunpack.c.l.b16 %v3640
    %v3725 = vunpack.c.h.b16 %v3640
    %v3726 = vunpack.c.l.b16 %v3641
    %v3727 = vunpack.c.h.b16 %v3641
    %v3728 = vunpack.c.l.b16 %v3642
    %v3729 = vunpack.c.h.b16 %v3642
    %v3730 = vunpack.c.l.b16 %v3643
    %v3731 = vunpack.c.h.b16 %v3643
    %v3732 = vunpack.c.l.b16 %v3644
    %v3733 = vunpack.c.h.b16 %v3644
    %v3734 = vunpack.c.l.b16 %v3645
    %v3735 = vunpack.c.h.b16 %v3645
    %v3736 = vunpack.c.l.b16 %v3646
    %v3737 = vunpack.c.h.b16 %v3646
    %v3738 = vunpack.c.l.b16 %v3647
    %v3739 = vunpack.c.h.b16 %v3647
    %v3740 = vunpack.c.l.b16 %v3648
    %v3741 = vunpack.c.h.b16 %v3648
    %v3742 = vunpack.c.l.b16 %v3649
    %v3743 = vunpack.c.h.b16 %v3649
    %v3744 = vunpack.c.l.b16 %v3650
    %v3745 = vunpack.c.h.b16 %v3650
    %v3746 = vunpack.c.l.b16 %v3651
    %v3747 = vunpack.c.h.b16 %v3651
    %v3748 = vpack.c.b16 %v3688, %v3684
    %v3749 = vpack.c.b16 %v3689, %v3685
    %v3750 = vpack.c.b16 %v3690, %v3686
    %v3751 = vpack.c.b16 %v3691, %v3687
    %v3752 = vpack.c.b16 %v3696, %v3692
    %v3753 = vpack.c.b16 %v3697, %v3693
    %v3754 = vpack.c.b16 %v3698, %v3694
    %v3755 = vpack.c.b16 %v3699, %v3695
    %v3756 = vpack.c.b16 %v3704, %v3700
    %v3757 = vpack.c.b16 %v3705, %v3701
    %v3758 = vpack.c.b16 %v3706, %v3702
    %v3759 = vpack.c.b16 %v3707, %v3703
    %v3760 = vpack.c.b16 %v3712, %v3708
    %v3761 = vpack.c.b16 %v3713, %v3709
    %v3762 = vpack.c.b16 %v3714, %v3710
    %v3763 = vpack.c.b16 %v3715, %v3711
    %v3764 = vpack.c.b16 %v3720, %v3716
    %v3765 = vpack.c.b16 %v3721, %v3717
    %v3766 = vpack.c.b16 %v3722, %v3718
    %v3767 = vpack.c.b16 %v3723, %v3719
    %v3768 = vpack.c.b16 %v3728, %v3724
    %v3769 = vpack.c.b16 %v3729, %v3725
    %v3770 = vpack.c.b16 %v3730, %v3726
    %v3771 = vpack.c.b16 %v3731, %v3727
    %v3772 = vpack.c.b16 %v3736, %v3732
    %v3773 = vpack.c.b16 %v3737, %v3733
    %v3774 = vpack.c.b16 %v3738, %v3734
    %v3775 = vpack.c.b16 %v3739, %v3735
    %v3776 = vpack.c.b16 %v3744, %v3740
    %v3777 = vpack.c.b16 %v3745, %v3741
    %v3778 = vpack.c.b16 %v3746, %v3742
    %v3779 = vpack.c.b16 %v3747, %v3743
    %3812 = vmatpush.bf16.msra.mxu0 %v3776
    %3813 = vmatpush.bf16.msra.mxu0 %v3772
    %3814 = vmatpush.bf16.msra.mxu0 %v3768
    %3815 = vmatpush.bf16.msra.mxu0 %v3764
    %3816 = vmatpush.bf16.msra.mxu0 %v3760
    %3817 = vmatpush.bf16.msra.mxu0 %v3756
    %3818 = vmatpush.bf16.msra.mxu0 %v3752
    %3819 = vmatpush.bf16.msra.mxu0 %v3748
    %3820 = vmatmul.bf16.gmra.mxu0 %v3614
    %v3821 = vpop.f32.mrf.mxu0
    %v3822 = vadd.f32 0.0, %v3821
    %v3823 = vpop.f32.mrf.mxu0
    %3824 = vdwg.mxu0
    %3825 = vmatpush.bf16.msra.mxu0 %v3777
    %3826 = vmatpush.bf16.msra.mxu0 %v3773
    %3827 = vmatpush.bf16.msra.mxu0 %v3769
    %3828 = vmatpush.bf16.msra.mxu0 %v3765
    %3829 = vmatpush.bf16.msra.mxu0 %v3761
    %3830 = vmatpush.bf16.msra.mxu0 %v3757
    %3831 = vmatpush.bf16.msra.mxu0 %v3753
    %3832 = vmatpush.bf16.msra.mxu0 %v3749
    %3833 = vmatmul.bf16.gmra.mxu0 %v3614
    %v3834 = vpop.f32.mrf.mxu0
    %v3835 = vadd.f32 0.0, %v3834
    %v3836 = vpop.f32.mrf.mxu0
    %3837 = vdwg.mxu0
    %3838 = vmatpush.bf16.msra.mxu0 %v3778
    %3839 = vmatpush.bf16.msra.mxu0 %v3774
    %3840 = vmatpush.bf16.msra.mxu0 %v3770
    %3841 = vmatpush.bf16.msra.mxu0 %v3766
    %3842 = vmatpush.bf16.msra.mxu0 %v3762
    %3843 = vmatpush.bf16.msra.mxu0 %v3758
    %3844 = vmatpush.bf16.msra.mxu0 %v3754
    %3845 = vmatpush.bf16.msra.mxu0 %v3750
    %3846 = vmatmul.bf16.gmra.mxu0 %v3614
    %v3847 = vpop.f32.mrf.mxu0
    %v3848 = vadd.f32 0.0, %v3847
    %v3849 = vpop.f32.mrf.mxu0
    %3850 = vdwg.mxu0
    %3851 = vmatpush.bf16.msra.mxu0 %v3779
    %3852 = vmatpush.bf16.msra.mxu0 %v3775
    %3853 = vmatpush.bf16.msra.mxu0 %v3771
    %3854 = vmatpush.bf16.msra.mxu0 %v3767
    %3855 = vmatpush.bf16.msra.mxu0 %v3763
    %3856 = vmatpush.bf16.msra.mxu0 %v3759
    %3857 = vmatpush.bf16.msra.mxu0 %v3755
    %3858 = vmatpush.bf16.msra.mxu0 %v3751
    %3859 = vmatmul.bf16.gmra.mxu0 %v3614
    %v3860 = vpop.f32.mrf.mxu0
    %v3861 = vadd.f32 0.0, %v3860
    %v3862 = vpop.f32.mrf.mxu0
    %3863 = vdwg.mxu0
    %v3864 = vadd.f32 %v3616, %v3822
    %v3865 = vadd.f32 %v3617, %v3835
    %v3866 = vadd.f32 %v3618, %v3848
    %v3867 = vadd.f32 %v3619, %v3861
    %v3868 = vxor.u32 %v3864, 2147483648
    %v3869 = vmul.f32 %v3868, 1.442695
    %v3870 = vpow.pop %v3869
    %v3871 = vadd.f32 %v3870, 1.0
    %v3872 = vrcp.pop %v3871
    %v3873 = vmul.f32 %v3871, %v3872
    %v3874 = vsub.f32 1.0, %v3873
    %v3875 = vmul.f32 %v3872, %v3874
    %v3876 = vadd.f32 %v3872, %v3875
    %vm3877 = vweird.f32 %v3871
    %vm3878 = vweird.f32 %v3872
    %vm3879 = vmor %vm3877, %vm3878
    %v3880 = vsel %vm3879, %v3872, %v3876
    %v3881 = vand.u32 2147483647, %v3871
    %vm3882 = vcmp.eq.f32.partialorder %v3881, 8.507059e+37
    %v3883 = vand.u32 %v3871, 2147483648
    %v3884 = vor.u32 1.1754944e-38, %v3883
    %v3885 = vsel %vm3882, %v3884, %v3880
    %v3886 = vmul.f32 1.0, %v3885
    %v3887 = vxor.u32 %v3865, 2147483648
    %v3888 = vmul.f32 %v3887, 1.442695
    %v3889 = vpow.pop %v3888
    %v3890 = vadd.f32 %v3889, 1.0
    %v3891 = vrcp.pop %v3890
    %v3892 = vmul.f32 %v3890, %v3891
    %v3893 = vsub.f32 1.0, %v3892
    %v3894 = vmul.f32 %v3891, %v3893
    %v3895 = vadd.f32 %v3891, %v3894
    %vm3896 = vweird.f32 %v3890
    %vm3897 = vweird.f32 %v3891
    %vm3898 = vmor %vm3896, %vm3897
    %v3899 = vsel %vm3898, %v3891, %v3895
    %v3900 = vand.u32 2147483647, %v3890
    %vm3901 = vcmp.eq.f32.partialorder %v3900, 8.507059e+37
    %v3902 = vand.u32 %v3890, 2147483648
    %v3903 = vor.u32 1.1754944e-38, %v3902
    %v3904 = vsel %vm3901, %v3903, %v3899
    %v3905 = vmul.f32 1.0, %v3904
    %v3906 = vtanh.pop %v3866
    %v3907 = vxor.u32 %v3867, 2147483648
    %v3908 = vmul.f32 %v3907, 1.442695
    %v3909 = vpow.pop %v3908
    %v3910 = vadd.f32 %v3909, 1.0
    %v3911 = vrcp.pop %v3910
    %v3912 = vmul.f32 %v3910, %v3911
    %v3913 = vsub.f32 1.0, %v3912
    %v3914 = vmul.f32 %v3911, %v3913
    %v3915 = vadd.f32 %v3911, %v3914
    %vm3916 = vweird.f32 %v3910
    %vm3917 = vweird.f32 %v3911
    %vm3918 = vmor %vm3916, %vm3917
    %v3919 = vsel %vm3918, %v3911, %v3915
    %v3920 = vand.u32 2147483647, %v3910
    %vm3921 = vcmp.eq.f32.partialorder %v3920, 8.507059e+37
    %v3922 = vand.u32 %v3910, 2147483648
    %v3923 = vor.u32 1.1754944e-38, %v3922
    %v3924 = vsel %vm3921, %v3923, %v3919
    %v3925 = vmul.f32 1.0, %v3924
    %v3926 = vmul.f32 %v3905, %v3609
    %v3927 = vmul.f32 %v3886, %v3906
    %v3928 = vadd.f32 %v3926, %v3927
    %v3929 = vtanh.pop %v3928
    %v3930 = vmul.f32 %v3925, %v3929
    %s3931 = scalar_lea.vmem %s8, 40
    %3932 = vst [vmem:[%s3931] sm:$0xff] %v3930
    %v3933 = vpack.c.bf16 %v3930, %v3930
    %s3934 = scalar_lea.vmem [#allocation3], 192
    %v3935 = vld [vmem:[%s3934] sm:$0xff]
    %v3936 = vld [vmem:[%s3934 + $0x8] sm:$0xff]
    %v3937 = vld [vmem:[%s3934 + $0x10] sm:$0xff]
    %v3938 = vld [vmem:[%s3934 + $0x18] sm:$0xff]
    %v3939 = vld [vmem:[#allocation7] sm:$0xff]
    %v3940 = vld [vmem:[#allocation7 + $0x8] sm:$0xff]
    %v3941 = vld [vmem:[#allocation7 + $0x10] sm:$0xff]
    %v3942 = vld [vmem:[#allocation7 + $0x18] sm:$0xff]
    %v3943 = vld [vmem:[#allocation7 + $0x20] sm:$0xff]
    %v3944 = vld [vmem:[#allocation7 + $0x28] sm:$0xff]
    %v3945 = vld [vmem:[#allocation7 + $0x30] sm:$0xff]
    %v3946 = vld [vmem:[#allocation7 + $0x38] sm:$0xff]
    %v3947 = vld [vmem:[#allocation7 + $0x40] sm:$0xff]
    %v3948 = vld [vmem:[#allocation7 + $0x48] sm:$0xff]
    %v3949 = vld [vmem:[#allocation7 + $0x50] sm:$0xff]
    %v3950 = vld [vmem:[#allocation7 + $0x58] sm:$0xff]
    %v3951 = vld [vmem:[#allocation7 + $0x60] sm:$0xff]
    %v3952 = vld [vmem:[#allocation7 + $0x68] sm:$0xff]
    %v3953 = vld [vmem:[#allocation7 + $0x70] sm:$0xff]
    %v3954 = vld [vmem:[#allocation7 + $0x78] sm:$0xff]
    %v3955 = vld [vmem:[#allocation7 + $0x80] sm:$0xff]
    %v3956 = vld [vmem:[#allocation7 + $0x88] sm:$0xff]
    %v3957 = vld [vmem:[#allocation7 + $0x90] sm:$0xff]
    %v3958 = vld [vmem:[#allocation7 + $0x98] sm:$0xff]
    %v3959 = vld [vmem:[#allocation7 + $0xa0] sm:$0xff]
    %v3960 = vld [vmem:[#allocation7 + $0xa8] sm:$0xff]
    %v3961 = vld [vmem:[#allocation7 + $0xb0] sm:$0xff]
    %v3962 = vld [vmem:[#allocation7 + $0xb8] sm:$0xff]
    %v3963 = vld [vmem:[#allocation7 + $0xc0] sm:$0xff]
    %v3964 = vld [vmem:[#allocation7 + $0xc8] sm:$0xff]
    %v3965 = vld [vmem:[#allocation7 + $0xd0] sm:$0xff]
    %v3966 = vld [vmem:[#allocation7 + $0xd8] sm:$0xff]
    %v3967 = vld [vmem:[#allocation7 + $0xe0] sm:$0xff]
    %v3968 = vld [vmem:[#allocation7 + $0xe8] sm:$0xff]
    %v3969 = vld [vmem:[#allocation7 + $0xf0] sm:$0xff]
    %v3970 = vld [vmem:[#allocation7 + $0xf8] sm:$0xff]
    %v4003 = vunpack.c.l.b16 %v3939
    %v4004 = vunpack.c.h.b16 %v3939
    %v4005 = vunpack.c.l.b16 %v3940
    %v4006 = vunpack.c.h.b16 %v3940
    %v4007 = vunpack.c.l.b16 %v3941
    %v4008 = vunpack.c.h.b16 %v3941
    %v4009 = vunpack.c.l.b16 %v3942
    %v4010 = vunpack.c.h.b16 %v3942
    %v4011 = vunpack.c.l.b16 %v3943
    %v4012 = vunpack.c.h.b16 %v3943
    %v4013 = vunpack.c.l.b16 %v3944
    %v4014 = vunpack.c.h.b16 %v3944
    %v4015 = vunpack.c.l.b16 %v3945
    %v4016 = vunpack.c.h.b16 %v3945
    %v4017 = vunpack.c.l.b16 %v3946
    %v4018 = vunpack.c.h.b16 %v3946
    %v4019 = vunpack.c.l.b16 %v3947
    %v4020 = vunpack.c.h.b16 %v3947
    %v4021 = vunpack.c.l.b16 %v3948
    %v4022 = vunpack.c.h.b16 %v3948
    %v4023 = vunpack.c.l.b16 %v3949
    %v4024 = vunpack.c.h.b16 %v3949
    %v4025 = vunpack.c.l.b16 %v3950
    %v4026 = vunpack.c.h.b16 %v3950
    %v4027 = vunpack.c.l.b16 %v3951
    %v4028 = vunpack.c.h.b16 %v3951
    %v4029 = vunpack.c.l.b16 %v3952
    %v4030 = vunpack.c.h.b16 %v3952
    %v4031 = vunpack.c.l.b16 %v3953
    %v4032 = vunpack.c.h.b16 %v3953
    %v4033 = vunpack.c.l.b16 %v3954
    %v4034 = vunpack.c.h.b16 %v3954
    %v4035 = vunpack.c.l.b16 %v3955
    %v4036 = vunpack.c.h.b16 %v3955
    %v4037 = vunpack.c.l.b16 %v3956
    %v4038 = vunpack.c.h.b16 %v3956
    %v4039 = vunpack.c.l.b16 %v3957
    %v4040 = vunpack.c.h.b16 %v3957
    %v4041 = vunpack.c.l.b16 %v3958
    %v4042 = vunpack.c.h.b16 %v3958
    %v4043 = vunpack.c.l.b16 %v3959
    %v4044 = vunpack.c.h.b16 %v3959
    %v4045 = vunpack.c.l.b16 %v3960
    %v4046 = vunpack.c.h.b16 %v3960
    %v4047 = vunpack.c.l.b16 %v3961
    %v4048 = vunpack.c.h.b16 %v3961
    %v4049 = vunpack.c.l.b16 %v3962
    %v4050 = vunpack.c.h.b16 %v3962
    %v4051 = vunpack.c.l.b16 %v3963
    %v4052 = vunpack.c.h.b16 %v3963
    %v4053 = vunpack.c.l.b16 %v3964
    %v4054 = vunpack.c.h.b16 %v3964
    %v4055 = vunpack.c.l.b16 %v3965
    %v4056 = vunpack.c.h.b16 %v3965
    %v4057 = vunpack.c.l.b16 %v3966
    %v4058 = vunpack.c.h.b16 %v3966
    %v4059 = vunpack.c.l.b16 %v3967
    %v4060 = vunpack.c.h.b16 %v3967
    %v4061 = vunpack.c.l.b16 %v3968
    %v4062 = vunpack.c.h.b16 %v3968
    %v4063 = vunpack.c.l.b16 %v3969
    %v4064 = vunpack.c.h.b16 %v3969
    %v4065 = vunpack.c.l.b16 %v3970
    %v4066 = vunpack.c.h.b16 %v3970
    %v4067 = vpack.c.b16 %v4007, %v4003
    %v4068 = vpack.c.b16 %v4008, %v4004
    %v4069 = vpack.c.b16 %v4009, %v4005
    %v4070 = vpack.c.b16 %v4010, %v4006
    %v4071 = vpack.c.b16 %v4015, %v4011
    %v4072 = vpack.c.b16 %v4016, %v4012
    %v4073 = vpack.c.b16 %v4017, %v4013
    %v4074 = vpack.c.b16 %v4018, %v4014
    %v4075 = vpack.c.b16 %v4023, %v4019
    %v4076 = vpack.c.b16 %v4024, %v4020
    %v4077 = vpack.c.b16 %v4025, %v4021
    %v4078 = vpack.c.b16 %v4026, %v4022
    %v4079 = vpack.c.b16 %v4031, %v4027
    %v4080 = vpack.c.b16 %v4032, %v4028
    %v4081 = vpack.c.b16 %v4033, %v4029
    %v4082 = vpack.c.b16 %v4034, %v4030
    %v4083 = vpack.c.b16 %v4039, %v4035
    %v4084 = vpack.c.b16 %v4040, %v4036
    %v4085 = vpack.c.b16 %v4041, %v4037
    %v4086 = vpack.c.b16 %v4042, %v4038
    %v4087 = vpack.c.b16 %v4047, %v4043
    %v4088 = vpack.c.b16 %v4048, %v4044
    %v4089 = vpack.c.b16 %v4049, %v4045
    %v4090 = vpack.c.b16 %v4050, %v4046
    %v4091 = vpack.c.b16 %v4055, %v4051
    %v4092 = vpack.c.b16 %v4056, %v4052
    %v4093 = vpack.c.b16 %v4057, %v4053
    %v4094 = vpack.c.b16 %v4058, %v4054
    %v4095 = vpack.c.b16 %v4063, %v4059
    %v4096 = vpack.c.b16 %v4064, %v4060
    %v4097 = vpack.c.b16 %v4065, %v4061
    %v4098 = vpack.c.b16 %v4066, %v4062
    %4131 = vmatpush.bf16.msra.mxu0 %v4095
    %4132 = vmatpush.bf16.msra.mxu0 %v4091
    %4133 = vmatpush.bf16.msra.mxu0 %v4087
    %4134 = vmatpush.bf16.msra.mxu0 %v4083
    %4135 = vmatpush.bf16.msra.mxu0 %v4079
    %4136 = vmatpush.bf16.msra.mxu0 %v4075
    %4137 = vmatpush.bf16.msra.mxu0 %v4071
    %4138 = vmatpush.bf16.msra.mxu0 %v4067
    %4139 = vmatmul.bf16.gmra.mxu0 %v3933
    %v4140 = vpop.f32.mrf.mxu0
    %v4141 = vadd.f32 0.0, %v4140
    %v4142 = vpop.f32.mrf.mxu0
    %4143 = vdwg.mxu0
    %4144 = vmatpush.bf16.msra.mxu0 %v4096
    %4145 = vmatpush.bf16.msra.mxu0 %v4092
    %4146 = vmatpush.bf16.msra.mxu0 %v4088
    %4147 = vmatpush.bf16.msra.mxu0 %v4084
    %4148 = vmatpush.bf16.msra.mxu0 %v4080
    %4149 = vmatpush.bf16.msra.mxu0 %v4076
    %4150 = vmatpush.bf16.msra.mxu0 %v4072
    %4151 = vmatpush.bf16.msra.mxu0 %v4068
    %4152 = vmatmul.bf16.gmra.mxu0 %v3933
    %v4153 = vpop.f32.mrf.mxu0
    %v4154 = vadd.f32 0.0, %v4153
    %v4155 = vpop.f32.mrf.mxu0
    %4156 = vdwg.mxu0
    %4157 = vmatpush.bf16.msra.mxu0 %v4097
    %4158 = vmatpush.bf16.msra.mxu0 %v4093
    %4159 = vmatpush.bf16.msra.mxu0 %v4089
    %4160 = vmatpush.bf16.msra.mxu0 %v4085
    %4161 = vmatpush.bf16.msra.mxu0 %v4081
    %4162 = vmatpush.bf16.msra.mxu0 %v4077
    %4163 = vmatpush.bf16.msra.mxu0 %v4073
    %4164 = vmatpush.bf16.msra.mxu0 %v4069
    %4165 = vmatmul.bf16.gmra.mxu0 %v3933
    %v4166 = vpop.f32.mrf.mxu0
    %v4167 = vadd.f32 0.0, %v4166
    %v4168 = vpop.f32.mrf.mxu0
    %4169 = vdwg.mxu0
    %4170 = vmatpush.bf16.msra.mxu0 %v4098
    %4171 = vmatpush.bf16.msra.mxu0 %v4094
    %4172 = vmatpush.bf16.msra.mxu0 %v4090
    %4173 = vmatpush.bf16.msra.mxu0 %v4086
    %4174 = vmatpush.bf16.msra.mxu0 %v4082
    %4175 = vmatpush.bf16.msra.mxu0 %v4078
    %4176 = vmatpush.bf16.msra.mxu0 %v4074
    %4177 = vmatpush.bf16.msra.mxu0 %v4070
    %4178 = vmatmul.bf16.gmra.mxu0 %v3933
    %v4179 = vpop.f32.mrf.mxu0
    %v4180 = vadd.f32 0.0, %v4179
    %v4181 = vpop.f32.mrf.mxu0
    %4182 = vdwg.mxu0
    %v4183 = vadd.f32 %v3935, %v4141
    %v4184 = vadd.f32 %v3936, %v4154
    %v4185 = vadd.f32 %v3937, %v4167
    %v4186 = vadd.f32 %v3938, %v4180
    %v4187 = vxor.u32 %v4183, 2147483648
    %v4188 = vmul.f32 %v4187, 1.442695
    %v4189 = vpow.pop %v4188
    %v4190 = vadd.f32 %v4189, 1.0
    %v4191 = vrcp.pop %v4190
    %v4192 = vmul.f32 %v4190, %v4191
    %v4193 = vsub.f32 1.0, %v4192
    %v4194 = vmul.f32 %v4191, %v4193
    %v4195 = vadd.f32 %v4191, %v4194
    %vm4196 = vweird.f32 %v4190
    %vm4197 = vweird.f32 %v4191
    %vm4198 = vmor %vm4196, %vm4197
    %v4199 = vsel %vm4198, %v4191, %v4195
    %v4200 = vand.u32 2147483647, %v4190
    %vm4201 = vcmp.eq.f32.partialorder %v4200, 8.507059e+37
    %v4202 = vand.u32 %v4190, 2147483648
    %v4203 = vor.u32 1.1754944e-38, %v4202
    %v4204 = vsel %vm4201, %v4203, %v4199
    %v4205 = vmul.f32 1.0, %v4204
    %v4206 = vxor.u32 %v4184, 2147483648
    %v4207 = vmul.f32 %v4206, 1.442695
    %v4208 = vpow.pop %v4207
    %v4209 = vadd.f32 %v4208, 1.0
    %v4210 = vrcp.pop %v4209
    %v4211 = vmul.f32 %v4209, %v4210
    %v4212 = vsub.f32 1.0, %v4211
    %v4213 = vmul.f32 %v4210, %v4212
    %v4214 = vadd.f32 %v4210, %v4213
    %vm4215 = vweird.f32 %v4209
    %vm4216 = vweird.f32 %v4210
    %vm4217 = vmor %vm4215, %vm4216
    %v4218 = vsel %vm4217, %v4210, %v4214
    %v4219 = vand.u32 2147483647, %v4209
    %vm4220 = vcmp.eq.f32.partialorder %v4219, 8.507059e+37
    %v4221 = vand.u32 %v4209, 2147483648
    %v4222 = vor.u32 1.1754944e-38, %v4221
    %v4223 = vsel %vm4220, %v4222, %v4218
    %v4224 = vmul.f32 1.0, %v4223
    %v4225 = vtanh.pop %v4185
    %v4226 = vxor.u32 %v4186, 2147483648
    %v4227 = vmul.f32 %v4226, 1.442695
    %v4228 = vpow.pop %v4227
    %v4229 = vadd.f32 %v4228, 1.0
    %v4230 = vrcp.pop %v4229
    %v4231 = vmul.f32 %v4229, %v4230
    %v4232 = vsub.f32 1.0, %v4231
    %v4233 = vmul.f32 %v4230, %v4232
    %v4234 = vadd.f32 %v4230, %v4233
    %vm4235 = vweird.f32 %v4229
    %vm4236 = vweird.f32 %v4230
    %vm4237 = vmor %vm4235, %vm4236
    %v4238 = vsel %vm4237, %v4230, %v4234
    %v4239 = vand.u32 2147483647, %v4229
    %vm4240 = vcmp.eq.f32.partialorder %v4239, 8.507059e+37
    %v4241 = vand.u32 %v4229, 2147483648
    %v4242 = vor.u32 1.1754944e-38, %v4241
    %v4243 = vsel %vm4240, %v4242, %v4238
    %v4244 = vmul.f32 1.0, %v4243
    %v4245 = vmul.f32 %v4224, %v3928
    %v4246 = vmul.f32 %v4205, %v4225
    %v4247 = vadd.f32 %v4245, %v4246
    %v4248 = vtanh.pop %v4247
    %v4249 = vmul.f32 %v4244, %v4248
    %s4250 = scalar_lea.vmem %s8, 48
    %4251 = vst [vmem:[%s4250] sm:$0xff] %v4249
    %v4252 = vpack.c.bf16 %v4249, %v4249
    %s4253 = scalar_lea.vmem [#allocation3], 224
    %v4254 = vld [vmem:[%s4253] sm:$0xff]
    %v4255 = vld [vmem:[%s4253 + $0x8] sm:$0xff]
    %v4256 = vld [vmem:[%s4253 + $0x10] sm:$0xff]
    %v4257 = vld [vmem:[%s4253 + $0x18] sm:$0xff]
    %v4258 = vld [vmem:[#allocation7] sm:$0xff]
    %v4259 = vld [vmem:[#allocation7 + $0x8] sm:$0xff]
    %v4260 = vld [vmem:[#allocation7 + $0x10] sm:$0xff]
    %v4261 = vld [vmem:[#allocation7 + $0x18] sm:$0xff]
    %v4262 = vld [vmem:[#allocation7 + $0x20] sm:$0xff]
    %v4263 = vld [vmem:[#allocation7 + $0x28] sm:$0xff]
    %v4264 = vld [vmem:[#allocation7 + $0x30] sm:$0xff]
    %v4265 = vld [vmem:[#allocation7 + $0x38] sm:$0xff]
    %v4266 = vld [vmem:[#allocation7 + $0x40] sm:$0xff]
    %v4267 = vld [vmem:[#allocation7 + $0x48] sm:$0xff]
    %v4268 = vld [vmem:[#allocation7 + $0x50] sm:$0xff]
    %v4269 = vld [vmem:[#allocation7 + $0x58] sm:$0xff]
    %v4270 = vld [vmem:[#allocation7 + $0x60] sm:$0xff]
    %v4271 = vld [vmem:[#allocation7 + $0x68] sm:$0xff]
    %v4272 = vld [vmem:[#allocation7 + $0x70] sm:$0xff]
    %v4273 = vld [vmem:[#allocation7 + $0x78] sm:$0xff]
    %v4274 = vld [vmem:[#allocation7 + $0x80] sm:$0xff]
    %v4275 = vld [vmem:[#allocation7 + $0x88] sm:$0xff]
    %v4276 = vld [vmem:[#allocation7 + $0x90] sm:$0xff]
    %v4277 = vld [vmem:[#allocation7 + $0x98] sm:$0xff]
    %v4278 = vld [vmem:[#allocation7 + $0xa0] sm:$0xff]
    %v4279 = vld [vmem:[#allocation7 + $0xa8] sm:$0xff]
    %v4280 = vld [vmem:[#allocation7 + $0xb0] sm:$0xff]
    %v4281 = vld [vmem:[#allocation7 + $0xb8] sm:$0xff]
    %v4282 = vld [vmem:[#allocation7 + $0xc0] sm:$0xff]
    %v4283 = vld [vmem:[#allocation7 + $0xc8] sm:$0xff]
    %v4284 = vld [vmem:[#allocation7 + $0xd0] sm:$0xff]
    %v4285 = vld [vmem:[#allocation7 + $0xd8] sm:$0xff]
    %v4286 = vld [vmem:[#allocation7 + $0xe0] sm:$0xff]
    %v4287 = vld [vmem:[#allocation7 + $0xe8] sm:$0xff]
    %v4288 = vld [vmem:[#allocation7 + $0xf0] sm:$0xff]
    %v4289 = vld [vmem:[#allocation7 + $0xf8] sm:$0xff]
    %v4322 = vunpack.c.l.b16 %v4258
    %v4323 = vunpack.c.h.b16 %v4258
    %v4324 = vunpack.c.l.b16 %v4259
    %v4325 = vunpack.c.h.b16 %v4259
    %v4326 = vunpack.c.l.b16 %v4260
    %v4327 = vunpack.c.h.b16 %v4260
    %v4328 = vunpack.c.l.b16 %v4261
    %v4329 = vunpack.c.h.b16 %v4261
    %v4330 = vunpack.c.l.b16 %v4262
    %v4331 = vunpack.c.h.b16 %v4262
    %v4332 = vunpack.c.l.b16 %v4263
    %v4333 = vunpack.c.h.b16 %v4263
    %v4334 = vunpack.c.l.b16 %v4264
    %v4335 = vunpack.c.h.b16 %v4264
    %v4336 = vunpack.c.l.b16 %v4265
    %v4337 = vunpack.c.h.b16 %v4265
    %v4338 = vunpack.c.l.b16 %v4266
    %v4339 = vunpack.c.h.b16 %v4266
    %v4340 = vunpack.c.l.b16 %v4267
    %v4341 = vunpack.c.h.b16 %v4267
    %v4342 = vunpack.c.l.b16 %v4268
    %v4343 = vunpack.c.h.b16 %v4268
    %v4344 = vunpack.c.l.b16 %v4269
    %v4345 = vunpack.c.h.b16 %v4269
    %v4346 = vunpack.c.l.b16 %v4270
    %v4347 = vunpack.c.h.b16 %v4270
    %v4348 = vunpack.c.l.b16 %v4271
    %v4349 = vunpack.c.h.b16 %v4271
    %v4350 = vunpack.c.l.b16 %v4272
    %v4351 = vunpack.c.h.b16 %v4272
    %v4352 = vunpack.c.l.b16 %v4273
    %v4353 = vunpack.c.h.b16 %v4273
    %v4354 = vunpack.c.l.b16 %v4274
    %v4355 = vunpack.c.h.b16 %v4274
    %v4356 = vunpack.c.l.b16 %v4275
    %v4357 = vunpack.c.h.b16 %v4275
    %v4358 = vunpack.c.l.b16 %v4276
    %v4359 = vunpack.c.h.b16 %v4276
    %v4360 = vunpack.c.l.b16 %v4277
    %v4361 = vunpack.c.h.b16 %v4277
    %v4362 = vunpack.c.l.b16 %v4278
    %v4363 = vunpack.c.h.b16 %v4278
    %v4364 = vunpack.c.l.b16 %v4279
    %v4365 = vunpack.c.h.b16 %v4279
    %v4366 = vunpack.c.l.b16 %v4280
    %v4367 = vunpack.c.h.b16 %v4280
    %v4368 = vunpack.c.l.b16 %v4281
    %v4369 = vunpack.c.h.b16 %v4281
    %v4370 = vunpack.c.l.b16 %v4282
    %v4371 = vunpack.c.h.b16 %v4282
    %v4372 = vunpack.c.l.b16 %v4283
    %v4373 = vunpack.c.h.b16 %v4283
    %v4374 = vunpack.c.l.b16 %v4284
    %v4375 = vunpack.c.h.b16 %v4284
    %v4376 = vunpack.c.l.b16 %v4285
    %v4377 = vunpack.c.h.b16 %v4285
    %v4378 = vunpack.c.l.b16 %v4286
    %v4379 = vunpack.c.h.b16 %v4286
    %v4380 = vunpack.c.l.b16 %v4287
    %v4381 = vunpack.c.h.b16 %v4287
    %v4382 = vunpack.c.l.b16 %v4288
    %v4383 = vunpack.c.h.b16 %v4288
    %v4384 = vunpack.c.l.b16 %v4289
    %v4385 = vunpack.c.h.b16 %v4289
    %v4386 = vpack.c.b16 %v4326, %v4322
    %v4387 = vpack.c.b16 %v4327, %v4323
    %v4388 = vpack.c.b16 %v4328, %v4324
    %v4389 = vpack.c.b16 %v4329, %v4325
    %v4390 = vpack.c.b16 %v4334, %v4330
    %v4391 = vpack.c.b16 %v4335, %v4331
    %v4392 = vpack.c.b16 %v4336, %v4332
    %v4393 = vpack.c.b16 %v4337, %v4333
    %v4394 = vpack.c.b16 %v4342, %v4338
    %v4395 = vpack.c.b16 %v4343, %v4339
    %v4396 = vpack.c.b16 %v4344, %v4340
    %v4397 = vpack.c.b16 %v4345, %v4341
    %v4398 = vpack.c.b16 %v4350, %v4346
    %v4399 = vpack.c.b16 %v4351, %v4347
    %v4400 = vpack.c.b16 %v4352, %v4348
    %v4401 = vpack.c.b16 %v4353, %v4349
    %v4402 = vpack.c.b16 %v4358, %v4354
    %v4403 = vpack.c.b16 %v4359, %v4355
    %v4404 = vpack.c.b16 %v4360, %v4356
    %v4405 = vpack.c.b16 %v4361, %v4357
    %v4406 = vpack.c.b16 %v4366, %v4362
    %v4407 = vpack.c.b16 %v4367, %v4363
    %v4408 = vpack.c.b16 %v4368, %v4364
    %v4409 = vpack.c.b16 %v4369, %v4365
    %v4410 = vpack.c.b16 %v4374, %v4370
    %v4411 = vpack.c.b16 %v4375, %v4371
    %v4412 = vpack.c.b16 %v4376, %v4372
    %v4413 = vpack.c.b16 %v4377, %v4373
    %v4414 = vpack.c.b16 %v4382, %v4378
    %v4415 = vpack.c.b16 %v4383, %v4379
    %v4416 = vpack.c.b16 %v4384, %v4380
    %v4417 = vpack.c.b16 %v4385, %v4381
    %4450 = vmatpush.bf16.msra.mxu0 %v4414
    %4451 = vmatpush.bf16.msra.mxu0 %v4410
    %4452 = vmatpush.bf16.msra.mxu0 %v4406
    %4453 = vmatpush.bf16.msra.mxu0 %v4402
    %4454 = vmatpush.bf16.msra.mxu0 %v4398
    %4455 = vmatpush.bf16.msra.mxu0 %v4394
    %4456 = vmatpush.bf16.msra.mxu0 %v4390
    %4457 = vmatpush.bf16.msra.mxu0 %v4386
    %4458 = vmatmul.bf16.gmra.mxu0 %v4252
    %v4459 = vpop.f32.mrf.mxu0
    %v4460 = vadd.f32 0.0, %v4459
    %v4461 = vpop.f32.mrf.mxu0
    %4462 = vdwg.mxu0
    %4463 = vmatpush.bf16.msra.mxu0 %v4415
    %4464 = vmatpush.bf16.msra.mxu0 %v4411
    %4465 = vmatpush.bf16.msra.mxu0 %v4407
    %4466 = vmatpush.bf16.msra.mxu0 %v4403
    %4467 = vmatpush.bf16.msra.mxu0 %v4399
    %4468 = vmatpush.bf16.msra.mxu0 %v4395
    %4469 = vmatpush.bf16.msra.mxu0 %v4391
    %4470 = vmatpush.bf16.msra.mxu0 %v4387
    %4471 = vmatmul.bf16.gmra.mxu0 %v4252
    %v4472 = vpop.f32.mrf.mxu0
    %v4473 = vadd.f32 0.0, %v4472
    %v4474 = vpop.f32.mrf.mxu0
    %4475 = vdwg.mxu0
    %4476 = vmatpush.bf16.msra.mxu0 %v4416
    %4477 = vmatpush.bf16.msra.mxu0 %v4412
    %4478 = vmatpush.bf16.msra.mxu0 %v4408
    %4479 = vmatpush.bf16.msra.mxu0 %v4404
    %4480 = vmatpush.bf16.msra.mxu0 %v4400
    %4481 = vmatpush.bf16.msra.mxu0 %v4396
    %4482 = vmatpush.bf16.msra.mxu0 %v4392
    %4483 = vmatpush.bf16.msra.mxu0 %v4388
    %4484 = vmatmul.bf16.gmra.mxu0 %v4252
    %v4485 = vpop.f32.mrf.mxu0
    %v4486 = vadd.f32 0.0, %v4485
    %v4487 = vpop.f32.mrf.mxu0
    %4488 = vdwg.mxu0
    %4489 = vmatpush.bf16.msra.mxu0 %v4417
    %4490 = vmatpush.bf16.msra.mxu0 %v4413
    %4491 = vmatpush.bf16.msra.mxu0 %v4409
    %4492 = vmatpush.bf16.msra.mxu0 %v4405
    %4493 = vmatpush.bf16.msra.mxu0 %v4401
    %4494 = vmatpush.bf16.msra.mxu0 %v4397
    %4495 = vmatpush.bf16.msra.mxu0 %v4393
    %4496 = vmatpush.bf16.msra.mxu0 %v4389
    %4497 = vmatmul.bf16.gmra.mxu0 %v4252
    %v4498 = vpop.f32.mrf.mxu0
    %v4499 = vadd.f32 0.0, %v4498
    %v4500 = vpop.f32.mrf.mxu0
    %4501 = vdwg.mxu0
    %v4502 = vadd.f32 %v4254, %v4460
    %v4503 = vadd.f32 %v4255, %v4473
    %v4504 = vadd.f32 %v4256, %v4486
    %v4505 = vadd.f32 %v4257, %v4499
    %v4506 = vxor.u32 %v4502, 2147483648
    %v4507 = vmul.f32 %v4506, 1.442695
    %v4508 = vpow.pop %v4507
    %v4509 = vadd.f32 %v4508, 1.0
    %v4510 = vrcp.pop %v4509
    %v4511 = vmul.f32 %v4509, %v4510
    %v4512 = vsub.f32 1.0, %v4511
    %v4513 = vmul.f32 %v4510, %v4512
    %v4514 = vadd.f32 %v4510, %v4513
    %vm4515 = vweird.f32 %v4509
    %vm4516 = vweird.f32 %v4510
    %vm4517 = vmor %vm4515, %vm4516
    %v4518 = vsel %vm4517, %v4510, %v4514
    %v4519 = vand.u32 2147483647, %v4509
    %vm4520 = vcmp.eq.f32.partialorder %v4519, 8.507059e+37
    %v4521 = vand.u32 %v4509, 2147483648
    %v4522 = vor.u32 1.1754944e-38, %v4521
    %v4523 = vsel %vm4520, %v4522, %v4518
    %v4524 = vmul.f32 1.0, %v4523
    %v4525 = vxor.u32 %v4503, 2147483648
    %v4526 = vmul.f32 %v4525, 1.442695
    %v4527 = vpow.pop %v4526
    %v4528 = vadd.f32 %v4527, 1.0
    %v4529 = vrcp.pop %v4528
    %v4530 = vmul.f32 %v4528, %v4529
    %v4531 = vsub.f32 1.0, %v4530
    %v4532 = vmul.f32 %v4529, %v4531
    %v4533 = vadd.f32 %v4529, %v4532
    %vm4534 = vweird.f32 %v4528
    %vm4535 = vweird.f32 %v4529
    %vm4536 = vmor %vm4534, %vm4535
    %v4537 = vsel %vm4536, %v4529, %v4533
    %v4538 = vand.u32 2147483647, %v4528
    %vm4539 = vcmp.eq.f32.partialorder %v4538, 8.507059e+37
    %v4540 = vand.u32 %v4528, 2147483648
    %v4541 = vor.u32 1.1754944e-38, %v4540
    %v4542 = vsel %vm4539, %v4541, %v4537
    %v4543 = vmul.f32 1.0, %v4542
    %v4544 = vtanh.pop %v4504
    %v4545 = vxor.u32 %v4505, 2147483648
    %v4546 = vmul.f32 %v4545, 1.442695
    %v4547 = vpow.pop %v4546
    %v4548 = vadd.f32 %v4547, 1.0
    %v4549 = vrcp.pop %v4548
    %v4550 = vmul.f32 %v4548, %v4549
    %v4551 = vsub.f32 1.0, %v4550
    %v4552 = vmul.f32 %v4549, %v4551
    %v4553 = vadd.f32 %v4549, %v4552
    %vm4554 = vweird.f32 %v4548
    %vm4555 = vweird.f32 %v4549
    %vm4556 = vmor %vm4554, %vm4555
    %v4557 = vsel %vm4556, %v4549, %v4553
    %v4558 = vand.u32 2147483647, %v4548
    %vm4559 = vcmp.eq.f32.partialorder %v4558, 8.507059e+37
    %v4560 = vand.u32 %v4548, 2147483648
    %v4561 = vor.u32 1.1754944e-38, %v4560
    %v4562 = vsel %vm4559, %v4561, %v4557
    %v4563 = vmul.f32 1.0, %v4562
    %v4564 = vmul.f32 %v4543, %v4247
    %v4565 = vmul.f32 %v4524, %v4544
    %v4566 = vadd.f32 %v4564, %v4565
    %v4567 = vtanh.pop %v4566
    %v4568 = vmul.f32 %v4563, %v4567
    %s4569 = scalar_lea.vmem %s8, 56
    %4570 = vst [vmem:[%s4569] sm:$0xff] %v4568
    %v4571 = vld [vmem:[%s4569] sm:$0xff]
    %4572 = vst [vmem:[#allocation9] sm:$0xff] %v4571
    %4573 = vst [vmem:[#allocation10] sm:$0xff] %v4566
    // Predicated region
    $region42: #{lstm_model_forward.2} parent=1 // pred_check
      _
    $region43: #{lstm_model_forward.2} parent=1 // pred_check_branch
      %4575 = sbr.rel (0) target = $region45
    $region44: #{lstm_model_forward.2} parent=1 // pred_region
      _
    $region45: #{lstm_model_forward.2} parent=1 // pred_fallthru
      _
    // Predicated region
    $region46: #{lstm_model_forward.2} parent=1 // pred_check
      _
    $region47: #{lstm_model_forward.2} parent=1 // pred_check_branch
      %4577 = sbr.rel (0) target = $region49
    $region48: #{lstm_model_forward.2} parent=1 // pred_region
      %4579 = vsyncadd [#allocation6], 0
      %s4581 = sshll.u32 [#allocation9], 4
      %s4582 = int_to_ptr.vmem [resolvable:$true] %s4581
      %s4583 = sshll.u32 %s9, 4
      %s4584 = int_to_ptr.hbm [resolvable:$true] %s4583
      %4586 = dma.vmem_to_hbm [thread:$0]  %s4582, 128, %s4584, [#allocation6]
    $region49: #{lstm_model_forward.2} parent=1 // pred_fallthru
      _
    // Predicated region
    $region50: #{lstm_model_forward.2} parent=1 // pred_check
      _
    $region51: #{lstm_model_forward.2} parent=1 // pred_check_branch
      %4588 = sbr.rel (0) target = $region53
    $region52: #{lstm_model_forward.2} parent=1 // pred_region
      %4590 = vsyncadd [#allocation11], 0
      %s4592 = sshll.u32 [#allocation10], 4
      %s4593 = int_to_ptr.vmem [resolvable:$true] %s4592
      %s4594 = sshll.u32 %s10, 4
      %s4595 = int_to_ptr.hbm [resolvable:$true] %s4594
      %4597 = dma.vmem_to_hbm [thread:$0]  %s4593, 128, %s4595, [#allocation11]
    $region53: #{lstm_model_forward.2} parent=1 // pred_fallthru
      _
    // Predicated region
    $region54: #{lstm_model_forward.2} parent=1 // pred_check
      _
    $region55: #{lstm_model_forward.2} parent=1 // pred_check_branch
      %4599 = sbr.rel (0) target = $region57
    $region56: #{lstm_model_forward.2} parent=1 // pred_region
      _
    $region57: #{lstm_model_forward.2} parent=1 // pred_fallthru
      _
    // Predicated region
    $region58: #{lstm_model_forward.2} parent=1 // pred_check
      _
    $region59: #{lstm_model_forward.2} parent=1 // pred_check_branch
      %4601 = sbr.rel (0) target = $region61
    $region60: #{lstm_model_forward.2} parent=1 // pred_region
      %4603 = dma.done [#allocation6], 128
    $region61: #{lstm_model_forward.2} parent=1 // pred_fallthru
      _
    // Predicated region
    $region62: #{lstm_model_forward.2} parent=1 // pred_check
      _
    $region63: #{lstm_model_forward.2} parent=1 // pred_check_branch
      %4605 = sbr.rel (0) target = $region65
    $region64: #{lstm_model_forward.2} parent=1 // pred_region
      %4607 = dma.done [#allocation11], 128
    $region65: #{lstm_model_forward.2} parent=1 // pred_fallthru
      _
    %4608 = vsyncpa [#allocation5], 1
    %4609 = vsyncpa [#allocation8], 1
    %4610 = vsyncpa [#allocation6], 1
    %4611 = vsyncpa [#allocation11], 1

</llo_original>
